<compile_context>
chip_gen: v7x
topology: tpu7x:2x2x1
jax: 0.10.0
libtpu: 0.0.40
codegen_flags: <defaults>
</compile_context>

<pallas_src>
import functools

import jax
import jax.numpy as jnp
from jax.experimental import pallas as pl
from jax.experimental.pallas import tpu as pltpu

ACTIVATION = "relu"      # module supports 'sigmoid' | 'tanh' | 'relu'
KERNEL_SIZE = 5
N_CLASSES = 10

_VMEM_LIMIT = 32 * 1024 * 1024   # safe scoped-VMEM budget on v5e/v6e/v7x

# Fixed LeNet/CIFAR geometry for kernel_size == 5
_H = 32                          # input spatial
_C0 = 3                          # input channels
_S1 = _H - KERNEL_SIZE + 1       # 28   conv1 output spatial
_C1 = 6
_P1 = _S1 // 2                   # 14   pool1 output spatial
_S2 = _P1 - KERNEL_SIZE + 1      # 10   conv2 output spatial
_C2 = 16
_P2 = _S2 // 2                   # 5    pool2 output spatial
_C3 = 120
_F1 = 84


def _act(y, name):
    if name == "relu":
        return jnp.maximum(y, 0.0)
    if name == "sigmoid":
        return jax.nn.sigmoid(y)
    if name == "tanh":
        return jnp.tanh(y)
    raise ValueError(name)


# ---------------------------------------------------------------- Pallas kernel
#
# Activation layouts inside the kernel (all 2D, channel interleaved on lanes):
#   image   A0 : (32, 96)    A0[h, 3*w + c]
#   conv1   H1 : (28, 168)   H1[oh, 6*ow + co]
#   conv2   H2 : (10, 160)   H2[oh2, 16*ow2 + co2]
#   pool2   P2 : (5, 80)     P2[ki, 16*kj + c]
# Convs/pools are matmuls against precomputed selection/weight matrices:
#   conv1:  Y1 = b1 + sum_ki  A0[ki:ki+28, :] @ G1[ki]
#   conv2:  Y2 = b2 + sum_ki (L1[ki] @ H1) @ RB2[ki]   (2x2 pool folded in)
#   pool2:  P2 = L2 @ H2 @ R2
#   conv3:  y3 = b3 + sum_ki  P2[ki:ki+1, :] @ W3r[ki]

def _lenet_kernel(x_ref, g1_ref, b1_ref, l1_ref, rb2_ref, b2_ref,
                  l2_ref, r2_ref, w3_ref, b3_ref, wf1_ref, bf1_ref,
                  wf2_ref, bf2_ref, o_ref, *, act):
    K = KERNEL_SIZE
    a0 = x_ref[0]                                            # (32, 96)

    # conv1 + bias + act
    y1 = jnp.dot(a0[0:_S1, :], g1_ref[0], preferred_element_type=jnp.float32)
    for ki in range(1, K):
        y1 = y1 + jnp.dot(a0[ki:ki + _S1, :], g1_ref[ki],
                          preferred_element_type=jnp.float32)
    h1 = _act(y1 + b1_ref[...], act)                         # (28, 168)

    # pool1 + conv2 + bias + act (pool folded into L1 / RB2)
    y2 = None
    for ki in range(K):
        t = jnp.dot(l1_ref[ki], h1, preferred_element_type=jnp.float32)   # (10, 168)
        c = jnp.dot(t, rb2_ref[ki], preferred_element_type=jnp.float32)   # (10, 160)
        y2 = c if y2 is None else y2 + c
    h2 = _act(y2 + b2_ref[...], act)                         # (10, 160)

    # pool2
    p2 = jnp.dot(jnp.dot(l2_ref[...], h2, preferred_element_type=jnp.float32),
                 r2_ref[...], preferred_element_type=jnp.float32)         # (5, 80)

    # conv3 (5x5 covers the whole field) + bias + act
    y3 = jnp.dot(p2[0:1, :], w3_ref[0], preferred_element_type=jnp.float32)
    for ki in range(1, K):
        y3 = y3 + jnp.dot(p2[ki:ki + 1, :], w3_ref[ki],
                          preferred_element_type=jnp.float32)
    h3 = _act(y3 + b3_ref[...], act)                         # (1, 120)

    # fc1 -> act -> fc2 -> softmax
    h4 = _act(jnp.dot(h3, wf1_ref[...], preferred_element_type=jnp.float32)
              + bf1_ref[...], act)                           # (1, 84)
    z = jnp.dot(h4, wf2_ref[...], preferred_element_type=jnp.float32) + bf2_ref[...]
    m = jnp.max(z, axis=-1, keepdims=True)
    e = jnp.exp(z - m)
    inv = pl.reciprocal(jnp.sum(e, axis=-1, keepdims=True), approx=False)
    o_ref[0] = e * inv                                       # (1, 10)


# ---------------------------------------------------------------- constants

def _build_constants(params):
    """Weight-dependent banded / block-Kronecker matrices (built in XLA, tiny)."""
    K = KERNEL_SIZE
    f32 = jnp.float32
    W1 = params["conv1_w"].astype(f32)   # (6, 3, 5, 5)
    W2 = params["conv2_w"].astype(f32)   # (16, 6, 5, 5)
    W3 = params["conv3_w"].astype(f32)   # (120, 16, 5, 5)

    # conv1 banded weights: G1[ki] : (H*C0, S1*C1) = (96, 168)
    eye_s1 = jnp.eye(_S1, dtype=f32)
    G1 = jnp.stack([
        sum(jnp.eye(_H * _C0, _S1 * _C0, k=-_C0 * kj, dtype=f32)
            @ jnp.kron(eye_s1, W1[:, :, ki, kj].T) for kj in range(K))
        for ki in range(K)])                                     # (5, 96, 168)

    # pool1 + conv2 selection matrices
    w_idx = jnp.arange(_S1)[:, None]
    o_idx = jnp.arange(_S2)[None, :]
    A = [((w_idx == 2 * (o_idx + kj)) | (w_idx == 2 * (o_idx + kj) + 1)
          ).astype(f32) for kj in range(K)]                      # each (28, 10)
    L1 = jnp.stack([A[ki].T for ki in range(K)])                 # (5, 10, 28)
    RB2 = jnp.stack([
        0.25 * sum(jnp.kron(A[kj], W2[:, :, ki, kj].T) for kj in range(K))
        for ki in range(K)])                                     # (5, 168, 160)

    # pool2 selection
    w2_idx = jnp.arange(_S2)[:, None]
    q_idx = jnp.arange(_P2)[None, :]
    A2 = ((w2_idx == 2 * q_idx) | (w2_idx == 2 * q_idx + 1)).astype(f32)   # (10, 5)
    L2 = A2.T                                                    # (5, 10)
    R2 = 0.25 * jnp.kron(A2, jnp.eye(_C2, dtype=f32))            # (160, 80)

    # conv3 as 5 row blocks, row index = kj*16 + c
    W3r = W3.transpose(2, 3, 1, 0).reshape(K, K * _C2, _C3)      # (5, 80, 120)

    return [
        G1,
        jnp.tile(params["conv1_b"].astype(f32), _S1)[None, :],   # (1, 168)
        L1,
        RB2,
        jnp.tile(params["conv2_b"].astype(f32), _S2)[None, :],   # (1, 160)
        L2,
        R2,
        W3r,
        params["conv3_b"].astype(f32)[None, :],                  # (1, 120)
        params["fc1_w"].astype(f32),                             # (120, 84)
        params["fc1_b"].astype(f32)[None, :],                    # (1, 84)
        params["fc2_w"].astype(f32),                             # (84, 10)
        params["fc2_b"].astype(f32)[None, :],                    # (1, 10)
    ]


# ---------------------------------------------------------------- forward

def lenet_cifar_forward(x, params, activation=ACTIVATION):
    x = x.reshape(-1, _C0, _H, _H).astype(jnp.float32)
    n = x.shape[0]
    # NCHW -> per-image (H, W*C) interleaved layout (wrapper glue, 12 KB/image)
    ximg = x.transpose(0, 2, 3, 1).reshape(n, _H, _H * _C0)
    consts = _build_constants(params)

    def _resident(arr):
        zeros = (0,) * arr.ndim
        return pl.BlockSpec(arr.shape, lambda i, _z=zeros: _z)

    in_specs = [pl.BlockSpec((1, _H, _H * _C0), lambda i: (i, 0, 0))]
    in_specs += [_resident(a) for a in consts]

    K = KERNEL_SIZE
    mm_dims = ([(_S1, _H * _C0, _S1 * _C1)] * K
               + [(_S2, _S1, _S1 * _C1), (_S2, _S1 * _C1, _S2 * _C2)] * K
               + [(_P2, _S2, _S2 * _C2), (_P2, _S2 * _C2, _P2 * _C2)]
               + [(1, _P2 * _C2, _C3)] * K
               + [(1, _C3, _F1), (1, _F1, N_CLASSES)])
    flops_img = sum(2 * m * kk * nn for m, kk, nn in mm_dims)
    act_elems = _S1 * _S1 * _C1 + _S2 * _S2 * _C2 + _C3 + _F1
    transc = n * (N_CLASSES + 1 + (0 if activation == "relu" else act_elems))
    const_bytes = 4 * sum(int(a.size) for a in consts)
    bytes_accessed = const_bytes + n * 4 * (_H * _H * _C0 + N_CLASSES)

    kern = functools.partial(_lenet_kernel, act=activation)
    out = pl.pallas_call(
        kern,
        out_shape=jax.ShapeDtypeStruct((n, 1, N_CLASSES), jnp.float32),
        grid=(n,),
        in_specs=in_specs,
        out_specs=pl.BlockSpec((1, 1, N_CLASSES), lambda i: (i, 0, 0)),
        compiler_params=pltpu.CompilerParams(
            dimension_semantics=("parallel",),
            vmem_limit_bytes=_VMEM_LIMIT),
        cost_estimate=pl.CostEstimate(
            flops=n * flops_img, transcendentals=transc,
            bytes_accessed=bytes_accessed),
    )(ximg, *consts)
    return out[:, 0, :]


# ---------------------------------------------------------------- params / reference

def init_params(key):
    ks = KERNEL_SIZE
    keys = jax.random.split(key, 10)

    def w(k, shape, fan_in):
        return (jax.random.normal(k, shape, jnp.float32) / jnp.sqrt(fan_in)).astype(jnp.float32)

    return {
        "conv1_w": w(keys[0], (6, 3, ks, ks), 3 * ks * ks),
        "conv1_b": w(keys[1], (6,), 3 * ks * ks),
        "conv2_w": w(keys[2], (16, 6, ks, ks), 6 * ks * ks),
        "conv2_b": w(keys[3], (16,), 6 * ks * ks),
        "conv3_w": w(keys[4], (120, 16, ks, ks), 16 * ks * ks),
        "conv3_b": w(keys[5], (120,), 16 * ks * ks),
        # kernel_size == 5 branch: fc1: 120 -> 84, fc2: 84 -> n_classes
        "fc1_w": w(keys[6], (120, 84), 120),   # stored (in, out) == PyTorch W.T
        "fc1_b": w(keys[7], (84,), 120),
        "fc2_w": w(keys[8], (84, N_CLASSES), 84),
        "fc2_b": w(keys[9], (N_CLASSES,), 84),
    }


def _reference_forward(x, params, activation=ACTIVATION):
    x = x.reshape(-1, 3, 32, 32).astype(jnp.float32)

    def conv(x, w, b):
        y = jax.lax.conv_general_dilated(
            x, w, window_strides=(1, 1), padding="VALID",
            dimension_numbers=("NCHW", "OIHW", "NCHW"))
        return y + b[None, :, None, None]

    def pool(x):
        s = jax.lax.reduce_window(x, 0.0, jax.lax.add, (1, 1, 2, 2), (1, 1, 2, 2), "VALID")
        return s / 4.0

    x = pool(_act(conv(x, params["conv1_w"], params["conv1_b"]), activation))
    x = pool(_act(conv(x, params["conv2_w"], params["conv2_b"]), activation))
    x = _act(conv(x, params["conv3_w"], params["conv3_b"]), activation)
    x = x.reshape(x.shape[0], -1)
    x = x @ params["fc1_w"] + params["fc1_b"]
    x = _act(x, activation) @ params["fc2_w"] + params["fc2_b"]
    return jax.nn.softmax(x, axis=1)


if __name__ == "__main__":
    key = jax.random.PRNGKey(0)
    kx, kp = jax.random.split(key)
    # module forces 3x32x32 inputs via x.view(-1, 3, 32, 32); batch kept small
    x = jax.random.normal(kx, (2, 3, 32, 32), jnp.float32)
    params = init_params(kp)

    fwd = jax.jit(lenet_cifar_forward)
    out = jax.block_until_ready(fwd(x, params))
    assert out.shape == (2, N_CLASSES)
    assert jnp.allclose(jnp.sum(out, axis=1), 1.0, atol=1e-5)

    ref = jax.block_until_ready(_reference_forward(x, params))
    assert jnp.allclose(out, ref, atol=1e-4), "mismatch vs JAX reference"

    print("KERNEL_OK")
</pallas_src>

<mosaic_0001>
module attributes {stable_mosaic.version = 11 : i64} {
  func.func @_lenet_kernel(%arg0: i32, %arg1: memref<1x32x96xf32, #tpu.memory_space<vmem>>, %arg2: memref<5x96x168xf32, #tpu.memory_space<vmem>>, %arg3: memref<1x168xf32, #tpu.memory_space<vmem>>, %arg4: memref<5x10x28xf32, #tpu.memory_space<vmem>>, %arg5: memref<5x168x160xf32, #tpu.memory_space<vmem>>, %arg6: memref<1x160xf32, #tpu.memory_space<vmem>>, %arg7: memref<5x10xf32, #tpu.memory_space<vmem>>, %arg8: memref<160x80xf32, #tpu.memory_space<vmem>>, %arg9: memref<5x80x120xf32, #tpu.memory_space<vmem>>, %arg10: memref<1x120xf32, #tpu.memory_space<vmem>>, %arg11: memref<120x84xf32, #tpu.memory_space<vmem>>, %arg12: memref<1x84xf32, #tpu.memory_space<vmem>>, %arg13: memref<84x10xf32, #tpu.memory_space<vmem>>, %arg14: memref<1x10xf32, #tpu.memory_space<vmem>>, %arg15: memref<1x1x10xf32, #tpu.memory_space<vmem>>) attributes {dimension_semantics = [#tpu.dimension_semantics<parallel>], iteration_bounds = array<i64: 2>, scalar_prefetch = 0 : i64, scratch_operands = 0 : i64, tpu.core_type = #tpu.core_type<tc>, window_params = [{transform_indices = @transform_0, window_bounds = array<i64: 1, 32, 96>}, {pipeline_mode = #tpu.pipeline_mode<synchronous>, transform_indices = @transform_1, window_bounds = array<i64: 5, 96, 168>}, {pipeline_mode = #tpu.pipeline_mode<synchronous>, transform_indices = @transform_2, window_bounds = array<i64: 1, 168>}, {pipeline_mode = #tpu.pipeline_mode<synchronous>, transform_indices = @transform_3, window_bounds = array<i64: 5, 10, 28>}, {pipeline_mode = #tpu.pipeline_mode<synchronous>, transform_indices = @transform_4, window_bounds = array<i64: 5, 168, 160>}, {pipeline_mode = #tpu.pipeline_mode<synchronous>, transform_indices = @transform_5, window_bounds = array<i64: 1, 160>}, {pipeline_mode = #tpu.pipeline_mode<synchronous>, transform_indices = @transform_6, window_bounds = array<i64: 5, 10>}, {pipeline_mode = #tpu.pipeline_mode<synchronous>, transform_indices = @transform_7, window_bounds = array<i64: 160, 80>}, {pipeline_mode = #tpu.pipeline_mode<synchronous>, transform_indices = @transform_8, window_bounds = array<i64: 5, 80, 120>}, {pipeline_mode = #tpu.pipeline_mode<synchronous>, transform_indices = @transform_9, window_bounds = array<i64: 1, 120>}, {pipeline_mode = #tpu.pipeline_mode<synchronous>, transform_indices = @transform_10, window_bounds = array<i64: 120, 84>}, {pipeline_mode = #tpu.pipeline_mode<synchronous>, transform_indices = @transform_11, window_bounds = array<i64: 1, 84>}, {pipeline_mode = #tpu.pipeline_mode<synchronous>, transform_indices = @transform_12, window_bounds = array<i64: 84, 10>}, {pipeline_mode = #tpu.pipeline_mode<synchronous>, transform_indices = @transform_13, window_bounds = array<i64: 1, 10>}, {transform_indices = @transform_14, window_bounds = array<i64: 1, 1, 10>}]} {
    %c0 = arith.constant 0 : index
    %c0_0 = arith.constant 0 : index
    %c0_1 = arith.constant 0 : index
    %0 = vector.load %arg1[%c0, %c0_0, %c0_1] : memref<1x32x96xf32, #tpu.memory_space<vmem>>, vector<1x32x96xf32>
    %1 = vector.shape_cast %0 : vector<1x32x96xf32> to vector<32x96xf32>
    %2 = vector.extract_strided_slice %1 {offsets = [0, 0], sizes = [28, 96], strides = [1, 1]} : vector<32x96xf32> to vector<28x96xf32>
    %c0_2 = arith.constant 0 : index
    %c0_3 = arith.constant 0 : index
    %c0_4 = arith.constant 0 : index
    %3 = vector.load %arg2[%c0_2, %c0_3, %c0_4] : memref<5x96x168xf32, #tpu.memory_space<vmem>>, vector<1x96x168xf32>
    %4 = vector.shape_cast %3 : vector<1x96x168xf32> to vector<96x168xf32>
    %cst = arith.constant dense<0.000000e+00> : vector<28x168xf32>
    %5 = tpu.matmul %2, %4, %cst {dimension_numbers = #tpu.dot_dimension_numbers<[1], [0], [0], [1], [0, 0, 1, 1], [], []>} : vector<28x96xf32>, vector<96x168xf32>, vector<28x168xf32> -> vector<28x168xf32>
    %6 = vector.extract_strided_slice %1 {offsets = [1, 0], sizes = [28, 96], strides = [1, 1]} : vector<32x96xf32> to vector<28x96xf32>
    %c1 = arith.constant 1 : index
    %c0_5 = arith.constant 0 : index
    %c0_6 = arith.constant 0 : index
    %7 = vector.load %arg2[%c1, %c0_5, %c0_6] : memref<5x96x168xf32, #tpu.memory_space<vmem>>, vector<1x96x168xf32>
    %8 = vector.shape_cast %7 : vector<1x96x168xf32> to vector<96x168xf32>
    %cst_7 = arith.constant dense<0.000000e+00> : vector<28x168xf32>
    %9 = tpu.matmul %6, %8, %cst_7 {dimension_numbers = #tpu.dot_dimension_numbers<[1], [0], [0], [1], [0, 0, 1, 1], [], []>} : vector<28x96xf32>, vector<96x168xf32>, vector<28x168xf32> -> vector<28x168xf32>
    %10 = arith.addf %5, %9 : vector<28x168xf32>
    %11 = vector.extract_strided_slice %1 {offsets = [2, 0], sizes = [28, 96], strides = [1, 1]} : vector<32x96xf32> to vector<28x96xf32>
    %c2 = arith.constant 2 : index
    %c0_8 = arith.constant 0 : index
    %c0_9 = arith.constant 0 : index
    %12 = vector.load %arg2[%c2, %c0_8, %c0_9] : memref<5x96x168xf32, #tpu.memory_space<vmem>>, vector<1x96x168xf32>
    %13 = vector.shape_cast %12 : vector<1x96x168xf32> to vector<96x168xf32>
    %cst_10 = arith.constant dense<0.000000e+00> : vector<28x168xf32>
    %14 = tpu.matmul %11, %13, %cst_10 {dimension_numbers = #tpu.dot_dimension_numbers<[1], [0], [0], [1], [0, 0, 1, 1], [], []>} : vector<28x96xf32>, vector<96x168xf32>, vector<28x168xf32> -> vector<28x168xf32>
    %15 = arith.addf %10, %14 : vector<28x168xf32>
    %16 = vector.extract_strided_slice %1 {offsets = [3, 0], sizes = [28, 96], strides = [1, 1]} : vector<32x96xf32> to vector<28x96xf32>
    %c3 = arith.constant 3 : index
    %c0_11 = arith.constant 0 : index
    %c0_12 = arith.constant 0 : index
    %17 = vector.load %arg2[%c3, %c0_11, %c0_12] : memref<5x96x168xf32, #tpu.memory_space<vmem>>, vector<1x96x168xf32>
    %18 = vector.shape_cast %17 : vector<1x96x168xf32> to vector<96x168xf32>
    %cst_13 = arith.constant dense<0.000000e+00> : vector<28x168xf32>
    %19 = tpu.matmul %16, %18, %cst_13 {dimension_numbers = #tpu.dot_dimension_numbers<[1], [0], [0], [1], [0, 0, 1, 1], [], []>} : vector<28x96xf32>, vector<96x168xf32>, vector<28x168xf32> -> vector<28x168xf32>
    %20 = arith.addf %15, %19 : vector<28x168xf32>
    %21 = vector.extract_strided_slice %1 {offsets = [4, 0], sizes = [28, 96], strides = [1, 1]} : vector<32x96xf32> to vector<28x96xf32>
    %c4 = arith.constant 4 : index
    %c0_14 = arith.constant 0 : index
    %c0_15 = arith.constant 0 : index
    %22 = vector.load %arg2[%c4, %c0_14, %c0_15] : memref<5x96x168xf32, #tpu.memory_space<vmem>>, vector<1x96x168xf32>
    %23 = vector.shape_cast %22 : vector<1x96x168xf32> to vector<96x168xf32>
    %cst_16 = arith.constant dense<0.000000e+00> : vector<28x168xf32>
    %24 = tpu.matmul %21, %23, %cst_16 {dimension_numbers = #tpu.dot_dimension_numbers<[1], [0], [0], [1], [0, 0, 1, 1], [], []>} : vector<28x96xf32>, vector<96x168xf32>, vector<28x168xf32> -> vector<28x168xf32>
    %25 = arith.addf %20, %24 : vector<28x168xf32>
    %c0_17 = arith.constant 0 : index
    %c0_18 = arith.constant 0 : index
    %26 = vector.load %arg3[%c0_17, %c0_18] : memref<1x168xf32, #tpu.memory_space<vmem>>, vector<1x168xf32>
    %27 = vector.broadcast %26 : vector<1x168xf32> to vector<28x168xf32>
    %28 = arith.addf %25, %27 : vector<28x168xf32>
    %cst_19 = arith.constant 0.000000e+00 : f32
    %29 = vector.broadcast %cst_19 : f32 to vector<28x168xf32>
    %30 = arith.maximumf %28, %29 : vector<28x168xf32>
    %c0_20 = arith.constant 0 : index
    %c0_21 = arith.constant 0 : index
    %c0_22 = arith.constant 0 : index
    %31 = vector.load %arg4[%c0_20, %c0_21, %c0_22] : memref<5x10x28xf32, #tpu.memory_space<vmem>>, vector<1x10x28xf32>
    %32 = vector.shape_cast %31 : vector<1x10x28xf32> to vector<10x28xf32>
    %cst_23 = arith.constant dense<0.000000e+00> : vector<10x168xf32>
    %33 = tpu.matmul %32, %30, %cst_23 {dimension_numbers = #tpu.dot_dimension_numbers<[1], [0], [0], [1], [0, 0, 1, 1], [], []>} : vector<10x28xf32>, vector<28x168xf32>, vector<10x168xf32> -> vector<10x168xf32>
    %c0_24 = arith.constant 0 : index
    %c0_25 = arith.constant 0 : index
    %c0_26 = arith.constant 0 : index
    %34 = vector.load %arg5[%c0_24, %c0_25, %c0_26] : memref<5x168x160xf32, #tpu.memory_space<vmem>>, vector<1x168x160xf32>
    %35 = vector.shape_cast %34 : vector<1x168x160xf32> to vector<168x160xf32>
    %cst_27 = arith.constant dense<0.000000e+00> : vector<10x160xf32>
    %36 = tpu.matmul %33, %35, %cst_27 {dimension_numbers = #tpu.dot_dimension_numbers<[1], [0], [0], [1], [0, 0, 1, 1], [], []>} : vector<10x168xf32>, vector<168x160xf32>, vector<10x160xf32> -> vector<10x160xf32>
    %c1_28 = arith.constant 1 : index
    %c0_29 = arith.constant 0 : index
    %c0_30 = arith.constant 0 : index
    %37 = vector.load %arg4[%c1_28, %c0_29, %c0_30] : memref<5x10x28xf32, #tpu.memory_space<vmem>>, vector<1x10x28xf32>
    %38 = vector.shape_cast %37 : vector<1x10x28xf32> to vector<10x28xf32>
    %cst_31 = arith.constant dense<0.000000e+00> : vector<10x168xf32>
    %39 = tpu.matmul %38, %30, %cst_31 {dimension_numbers = #tpu.dot_dimension_numbers<[1], [0], [0], [1], [0, 0, 1, 1], [], []>} : vector<10x28xf32>, vector<28x168xf32>, vector<10x168xf32> -> vector<10x168xf32>
    %c1_32 = arith.constant 1 : index
    %c0_33 = arith.constant 0 : index
    %c0_34 = arith.constant 0 : index
    %40 = vector.load %arg5[%c1_32, %c0_33, %c0_34] : memref<5x168x160xf32, #tpu.memory_space<vmem>>, vector<1x168x160xf32>
    %41 = vector.shape_cast %40 : vector<1x168x160xf32> to vector<168x160xf32>
    %cst_35 = arith.constant dense<0.000000e+00> : vector<10x160xf32>
    %42 = tpu.matmul %39, %41, %cst_35 {dimension_numbers = #tpu.dot_dimension_numbers<[1], [0], [0], [1], [0, 0, 1, 1], [], []>} : vector<10x168xf32>, vector<168x160xf32>, vector<10x160xf32> -> vector<10x160xf32>
    %43 = arith.addf %36, %42 : vector<10x160xf32>
    %c2_36 = arith.constant 2 : index
    %c0_37 = arith.constant 0 : index
    %c0_38 = arith.constant 0 : index
    %44 = vector.load %arg4[%c2_36, %c0_37, %c0_38] : memref<5x10x28xf32, #tpu.memory_space<vmem>>, vector<1x10x28xf32>
    %45 = vector.shape_cast %44 : vector<1x10x28xf32> to vector<10x28xf32>
    %cst_39 = arith.constant dense<0.000000e+00> : vector<10x168xf32>
    %46 = tpu.matmul %45, %30, %cst_39 {dimension_numbers = #tpu.dot_dimension_numbers<[1], [0], [0], [1], [0, 0, 1, 1], [], []>} : vector<10x28xf32>, vector<28x168xf32>, vector<10x168xf32> -> vector<10x168xf32>
    %c2_40 = arith.constant 2 : index
    %c0_41 = arith.constant 0 : index
    %c0_42 = arith.constant 0 : index
    %47 = vector.load %arg5[%c2_40, %c0_41, %c0_42] : memref<5x168x160xf32, #tpu.memory_space<vmem>>, vector<1x168x160xf32>
    %48 = vector.shape_cast %47 : vector<1x168x160xf32> to vector<168x160xf32>
    %cst_43 = arith.constant dense<0.000000e+00> : vector<10x160xf32>
    %49 = tpu.matmul %46, %48, %cst_43 {dimension_numbers = #tpu.dot_dimension_numbers<[1], [0], [0], [1], [0, 0, 1, 1], [], []>} : vector<10x168xf32>, vector<168x160xf32>, vector<10x160xf32> -> vector<10x160xf32>
    %50 = arith.addf %43, %49 : vector<10x160xf32>
    %c3_44 = arith.constant 3 : index
    %c0_45 = arith.constant 0 : index
    %c0_46 = arith.constant 0 : index
    %51 = vector.load %arg4[%c3_44, %c0_45, %c0_46] : memref<5x10x28xf32, #tpu.memory_space<vmem>>, vector<1x10x28xf32>
    %52 = vector.shape_cast %51 : vector<1x10x28xf32> to vector<10x28xf32>
    %cst_47 = arith.constant dense<0.000000e+00> : vector<10x168xf32>
    %53 = tpu.matmul %52, %30, %cst_47 {dimension_numbers = #tpu.dot_dimension_numbers<[1], [0], [0], [1], [0, 0, 1, 1], [], []>} : vector<10x28xf32>, vector<28x168xf32>, vector<10x168xf32> -> vector<10x168xf32>
    %c3_48 = arith.constant 3 : index
    %c0_49 = arith.constant 0 : index
    %c0_50 = arith.constant 0 : index
    %54 = vector.load %arg5[%c3_48, %c0_49, %c0_50] : memref<5x168x160xf32, #tpu.memory_space<vmem>>, vector<1x168x160xf32>
    %55 = vector.shape_cast %54 : vector<1x168x160xf32> to vector<168x160xf32>
    %cst_51 = arith.constant dense<0.000000e+00> : vector<10x160xf32>
    %56 = tpu.matmul %53, %55, %cst_51 {dimension_numbers = #tpu.dot_dimension_numbers<[1], [0], [0], [1], [0, 0, 1, 1], [], []>} : vector<10x168xf32>, vector<168x160xf32>, vector<10x160xf32> -> vector<10x160xf32>
    %57 = arith.addf %50, %56 : vector<10x160xf32>
    %c4_52 = arith.constant 4 : index
    %c0_53 = arith.constant 0 : index
    %c0_54 = arith.constant 0 : index
    %58 = vector.load %arg4[%c4_52, %c0_53, %c0_54] : memref<5x10x28xf32, #tpu.memory_space<vmem>>, vector<1x10x28xf32>
    %59 = vector.shape_cast %58 : vector<1x10x28xf32> to vector<10x28xf32>
    %cst_55 = arith.constant dense<0.000000e+00> : vector<10x168xf32>
    %60 = tpu.matmul %59, %30, %cst_55 {dimension_numbers = #tpu.dot_dimension_numbers<[1], [0], [0], [1], [0, 0, 1, 1], [], []>} : vector<10x28xf32>, vector<28x168xf32>, vector<10x168xf32> -> vector<10x168xf32>
    %c4_56 = arith.constant 4 : index
    %c0_57 = arith.constant 0 : index
    %c0_58 = arith.constant 0 : index
    %61 = vector.load %arg5[%c4_56, %c0_57, %c0_58] : memref<5x168x160xf32, #tpu.memory_space<vmem>>, vector<1x168x160xf32>
    %62 = vector.shape_cast %61 : vector<1x168x160xf32> to vector<168x160xf32>
    %cst_59 = arith.constant dense<0.000000e+00> : vector<10x160xf32>
    %63 = tpu.matmul %60, %62, %cst_59 {dimension_numbers = #tpu.dot_dimension_numbers<[1], [0], [0], [1], [0, 0, 1, 1], [], []>} : vector<10x168xf32>, vector<168x160xf32>, vector<10x160xf32> -> vector<10x160xf32>
    %64 = arith.addf %57, %63 : vector<10x160xf32>
    %c0_60 = arith.constant 0 : index
    %c0_61 = arith.constant 0 : index
    %65 = vector.load %arg6[%c0_60, %c0_61] : memref<1x160xf32, #tpu.memory_space<vmem>>, vector<1x160xf32>
    %66 = vector.broadcast %65 : vector<1x160xf32> to vector<10x160xf32>
    %67 = arith.addf %64, %66 : vector<10x160xf32>
    %cst_62 = arith.constant 0.000000e+00 : f32
    %68 = vector.broadcast %cst_62 : f32 to vector<10x160xf32>
    %69 = arith.maximumf %67, %68 : vector<10x160xf32>
    %c0_63 = arith.constant 0 : index
    %c0_64 = arith.constant 0 : index
    %70 = vector.load %arg7[%c0_63, %c0_64] : memref<5x10xf32, #tpu.memory_space<vmem>>, vector<5x10xf32>
    %cst_65 = arith.constant dense<0.000000e+00> : vector<5x160xf32>
    %71 = tpu.matmul %70, %69, %cst_65 {dimension_numbers = #tpu.dot_dimension_numbers<[1], [0], [0], [1], [0, 0, 1, 1], [], []>} : vector<5x10xf32>, vector<10x160xf32>, vector<5x160xf32> -> vector<5x160xf32>
    %c0_66 = arith.constant 0 : index
    %c0_67 = arith.constant 0 : index
    %72 = vector.load %arg8[%c0_66, %c0_67] : memref<160x80xf32, #tpu.memory_space<vmem>>, vector<160x80xf32>
    %cst_68 = arith.constant dense<0.000000e+00> : vector<5x80xf32>
    %73 = tpu.matmul %71, %72, %cst_68 {dimension_numbers = #tpu.dot_dimension_numbers<[1], [0], [0], [1], [0, 0, 1, 1], [], []>} : vector<5x160xf32>, vector<160x80xf32>, vector<5x80xf32> -> vector<5x80xf32>
    %74 = vector.extract_strided_slice %73 {offsets = [0, 0], sizes = [1, 80], strides = [1, 1]} : vector<5x80xf32> to vector<1x80xf32>
    %c0_69 = arith.constant 0 : index
    %c0_70 = arith.constant 0 : index
    %c0_71 = arith.constant 0 : index
    %75 = vector.load %arg9[%c0_69, %c0_70, %c0_71] : memref<5x80x120xf32, #tpu.memory_space<vmem>>, vector<1x80x120xf32>
    %76 = vector.shape_cast %75 : vector<1x80x120xf32> to vector<80x120xf32>
    %cst_72 = arith.constant dense<0.000000e+00> : vector<1x120xf32>
    %77 = tpu.matmul %74, %76, %cst_72 {dimension_numbers = #tpu.dot_dimension_numbers<[1], [0], [0], [1], [0, 0, 1, 1], [], []>} : vector<1x80xf32>, vector<80x120xf32>, vector<1x120xf32> -> vector<1x120xf32>
    %78 = vector.extract_strided_slice %73 {offsets = [1, 0], sizes = [1, 80], strides = [1, 1]} : vector<5x80xf32> to vector<1x80xf32>
    %c1_73 = arith.constant 1 : index
    %c0_74 = arith.constant 0 : index
    %c0_75 = arith.constant 0 : index
    %79 = vector.load %arg9[%c1_73, %c0_74, %c0_75] : memref<5x80x120xf32, #tpu.memory_space<vmem>>, vector<1x80x120xf32>
    %80 = vector.shape_cast %79 : vector<1x80x120xf32> to vector<80x120xf32>
    %cst_76 = arith.constant dense<0.000000e+00> : vector<1x120xf32>
    %81 = tpu.matmul %78, %80, %cst_76 {dimension_numbers = #tpu.dot_dimension_numbers<[1], [0], [0], [1], [0, 0, 1, 1], [], []>} : vector<1x80xf32>, vector<80x120xf32>, vector<1x120xf32> -> vector<1x120xf32>
    %82 = arith.addf %77, %81 : vector<1x120xf32>
    %83 = vector.extract_strided_slice %73 {offsets = [2, 0], sizes = [1, 80], strides = [1, 1]} : vector<5x80xf32> to vector<1x80xf32>
    %c2_77 = arith.constant 2 : index
    %c0_78 = arith.constant 0 : index
    %c0_79 = arith.constant 0 : index
    %84 = vector.load %arg9[%c2_77, %c0_78, %c0_79] : memref<5x80x120xf32, #tpu.memory_space<vmem>>, vector<1x80x120xf32>
    %85 = vector.shape_cast %84 : vector<1x80x120xf32> to vector<80x120xf32>
    %cst_80 = arith.constant dense<0.000000e+00> : vector<1x120xf32>
    %86 = tpu.matmul %83, %85, %cst_80 {dimension_numbers = #tpu.dot_dimension_numbers<[1], [0], [0], [1], [0, 0, 1, 1], [], []>} : vector<1x80xf32>, vector<80x120xf32>, vector<1x120xf32> -> vector<1x120xf32>
    %87 = arith.addf %82, %86 : vector<1x120xf32>
    %88 = vector.extract_strided_slice %73 {offsets = [3, 0], sizes = [1, 80], strides = [1, 1]} : vector<5x80xf32> to vector<1x80xf32>
    %c3_81 = arith.constant 3 : index
    %c0_82 = arith.constant 0 : index
    %c0_83 = arith.constant 0 : index
    %89 = vector.load %arg9[%c3_81, %c0_82, %c0_83] : memref<5x80x120xf32, #tpu.memory_space<vmem>>, vector<1x80x120xf32>
    %90 = vector.shape_cast %89 : vector<1x80x120xf32> to vector<80x120xf32>
    %cst_84 = arith.constant dense<0.000000e+00> : vector<1x120xf32>
    %91 = tpu.matmul %88, %90, %cst_84 {dimension_numbers = #tpu.dot_dimension_numbers<[1], [0], [0], [1], [0, 0, 1, 1], [], []>} : vector<1x80xf32>, vector<80x120xf32>, vector<1x120xf32> -> vector<1x120xf32>
    %92 = arith.addf %87, %91 : vector<1x120xf32>
    %93 = vector.extract_strided_slice %73 {offsets = [4, 0], sizes = [1, 80], strides = [1, 1]} : vector<5x80xf32> to vector<1x80xf32>
    %c4_85 = arith.constant 4 : index
    %c0_86 = arith.constant 0 : index
    %c0_87 = arith.constant 0 : index
    %94 = vector.load %arg9[%c4_85, %c0_86, %c0_87] : memref<5x80x120xf32, #tpu.memory_space<vmem>>, vector<1x80x120xf32>
    %95 = vector.shape_cast %94 : vector<1x80x120xf32> to vector<80x120xf32>
    %cst_88 = arith.constant dense<0.000000e+00> : vector<1x120xf32>
    %96 = tpu.matmul %93, %95, %cst_88 {dimension_numbers = #tpu.dot_dimension_numbers<[1], [0], [0], [1], [0, 0, 1, 1], [], []>} : vector<1x80xf32>, vector<80x120xf32>, vector<1x120xf32> -> vector<1x120xf32>
    %97 = arith.addf %92, %96 : vector<1x120xf32>
    %c0_89 = arith.constant 0 : index
    %c0_90 = arith.constant 0 : index
    %98 = vector.load %arg10[%c0_89, %c0_90] : memref<1x120xf32, #tpu.memory_space<vmem>>, vector<1x120xf32>
    %99 = arith.addf %97, %98 : vector<1x120xf32>
    %cst_91 = arith.constant 0.000000e+00 : f32
    %100 = vector.broadcast %cst_91 : f32 to vector<1x120xf32>
    %101 = arith.maximumf %99, %100 : vector<1x120xf32>
    %c0_92 = arith.constant 0 : index
    %c0_93 = arith.constant 0 : index
    %102 = vector.load %arg11[%c0_92, %c0_93] : memref<120x84xf32, #tpu.memory_space<vmem>>, vector<120x84xf32>
    %cst_94 = arith.constant dense<0.000000e+00> : vector<1x84xf32>
    %103 = tpu.matmul %101, %102, %cst_94 {dimension_numbers = #tpu.dot_dimension_numbers<[1], [0], [0], [1], [0, 0, 1, 1], [], []>} : vector<1x120xf32>, vector<120x84xf32>, vector<1x84xf32> -> vector<1x84xf32>
    %c0_95 = arith.constant 0 : index
    %c0_96 = arith.constant 0 : index
    %104 = vector.load %arg12[%c0_95, %c0_96] : memref<1x84xf32, #tpu.memory_space<vmem>>, vector<1x84xf32>
    %105 = arith.addf %103, %104 : vector<1x84xf32>
    %cst_97 = arith.constant 0.000000e+00 : f32
    %106 = vector.broadcast %cst_97 : f32 to vector<1x84xf32>
    %107 = arith.maximumf %105, %106 : vector<1x84xf32>
    %c0_98 = arith.constant 0 : index
    %c0_99 = arith.constant 0 : index
    %108 = vector.load %arg13[%c0_98, %c0_99] : memref<84x10xf32, #tpu.memory_space<vmem>>, vector<84x10xf32>
    %cst_100 = arith.constant dense<0.000000e+00> : vector<1x10xf32>
    %109 = tpu.matmul %107, %108, %cst_100 {dimension_numbers = #tpu.dot_dimension_numbers<[1], [0], [0], [1], [0, 0, 1, 1], [], []>} : vector<1x84xf32>, vector<84x10xf32>, vector<1x10xf32> -> vector<1x10xf32>
    %c0_101 = arith.constant 0 : index
    %c0_102 = arith.constant 0 : index
    %110 = vector.load %arg14[%c0_101, %c0_102] : memref<1x10xf32, #tpu.memory_space<vmem>>, vector<1x10xf32>
    %111 = arith.addf %109, %110 : vector<1x10xf32>
    %cst_103 = arith.constant dense<0xFF800000> : vector<1xf32>
    %112 = vector.multi_reduction <maximumf>, %111, %cst_103 [1] : vector<1x10xf32> to vector<1xf32>
    %113 = vector.shape_cast %112 : vector<1xf32> to vector<1x1xf32>
    %114 = vector.broadcast %113 : vector<1x1xf32> to vector<1x10xf32>
    %115 = arith.subf %111, %114 : vector<1x10xf32>
    %116 = math.exp %115 : vector<1x10xf32>
    %cst_104 = arith.constant dense<0.000000e+00> : vector<1xf32>
    %117 = vector.multi_reduction <add>, %116, %cst_104 [1] : vector<1x10xf32> to vector<1xf32>
    %118 = vector.shape_cast %117 : vector<1xf32> to vector<1x1xf32>
    %119 = tpu.reciprocal %118 : vector<1x1xf32> -> vector<1x1xf32>
    %120 = vector.broadcast %119 : vector<1x1xf32> to vector<1x10xf32>
    %121 = arith.mulf %116, %120 : vector<1x10xf32>
    %c0_105 = arith.constant 0 : index
    %c0_106 = arith.constant 0 : index
    %c0_107 = arith.constant 0 : index
    %122 = vector.load %arg15[%c0_105, %c0_106, %c0_107] : memref<1x1x10xf32, #tpu.memory_space<vmem>>, vector<1x1x10xf32>
    %123 = vector.shape_cast %122 : vector<1x1x10xf32> to vector<1x10xf32>
    %124 = vector.shape_cast %121 : vector<1x10xf32> to vector<1x1x10xf32>
    tpu.vector_store %arg15[%c0_105, %c0_106, %c0_107], %124 {strides = array<i32>} : memref<1x1x10xf32, #tpu.memory_space<vmem>>, vector<1x1x10xf32>,
    return
  }
  func.func @transform_0(%arg0: i32) -> (i32, i32, i32) {
    %c0_i32 = arith.constant 0 : i32
    %c0_i32_0 = arith.constant 0 : i32
    %c0_i32_1 = arith.constant 0 : i32
    return %arg0, %c0_i32, %c0_i32_0 : i32, i32, i32
  }
  func.func @transform_1(%arg0: i32) -> (i32, i32, i32) {
    %c0_i32 = arith.constant 0 : i32
    %c0_i32_0 = arith.constant 0 : i32
    %c0_i32_1 = arith.constant 0 : i32
    %c0_i32_2 = arith.constant 0 : i32
    return %c0_i32, %c0_i32_0, %c0_i32_1 : i32, i32, i32
  }
  func.func @transform_2(%arg0: i32) -> (i32, i32) {
    %c0_i32 = arith.constant 0 : i32
    %c0_i32_0 = arith.constant 0 : i32
    %c0_i32_1 = arith.constant 0 : i32
    return %c0_i32, %c0_i32_0 : i32, i32
  }
  func.func @transform_3(%arg0: i32) -> (i32, i32, i32) {
    %c0_i32 = arith.constant 0 : i32
    %c0_i32_0 = arith.constant 0 : i32
    %c0_i32_1 = arith.constant 0 : i32
    %c0_i32_2 = arith.constant 0 : i32
    return %c0_i32, %c0_i32_0, %c0_i32_1 : i32, i32, i32
  }
  func.func @transform_4(%arg0: i32) -> (i32, i32, i32) {
    %c0_i32 = arith.constant 0 : i32
    %c0_i32_0 = arith.constant 0 : i32
    %c0_i32_1 = arith.constant 0 : i32
    %c0_i32_2 = arith.constant 0 : i32
    return %c0_i32, %c0_i32_0, %c0_i32_1 : i32, i32, i32
  }
  func.func @transform_5(%arg0: i32) -> (i32, i32) {
    %c0_i32 = arith.constant 0 : i32
    %c0_i32_0 = arith.constant 0 : i32
    %c0_i32_1 = arith.constant 0 : i32
    return %c0_i32, %c0_i32_0 : i32, i32
  }
  func.func @transform_6(%arg0: i32) -> (i32, i32) {
    %c0_i32 = arith.constant 0 : i32
    %c0_i32_0 = arith.constant 0 : i32
    %c0_i32_1 = arith.constant 0 : i32
    return %c0_i32, %c0_i32_0 : i32, i32
  }
  func.func @transform_7(%arg0: i32) -> (i32, i32) {
    %c0_i32 = arith.constant 0 : i32
    %c0_i32_0 = arith.constant 0 : i32
    %c0_i32_1 = arith.constant 0 : i32
    return %c0_i32, %c0_i32_0 : i32, i32
  }
  func.func @transform_8(%arg0: i32) -> (i32, i32, i32) {
    %c0_i32 = arith.constant 0 : i32
    %c0_i32_0 = arith.constant 0 : i32
    %c0_i32_1 = arith.constant 0 : i32
    %c0_i32_2 = arith.constant 0 : i32
    return %c0_i32, %c0_i32_0, %c0_i32_1 : i32, i32, i32
  }
  func.func @transform_9(%arg0: i32) -> (i32, i32) {
    %c0_i32 = arith.constant 0 : i32
    %c0_i32_0 = arith.constant 0 : i32
    %c0_i32_1 = arith.constant 0 : i32
    return %c0_i32, %c0_i32_0 : i32, i32
  }
  func.func @transform_10(%arg0: i32) -> (i32, i32) {
    %c0_i32 = arith.constant 0 : i32
    %c0_i32_0 = arith.constant 0 : i32
    %c0_i32_1 = arith.constant 0 : i32
    return %c0_i32, %c0_i32_0 : i32, i32
  }
  func.func @transform_11(%arg0: i32) -> (i32, i32) {
    %c0_i32 = arith.constant 0 : i32
    %c0_i32_0 = arith.constant 0 : i32
    %c0_i32_1 = arith.constant 0 : i32
    return %c0_i32, %c0_i32_0 : i32, i32
  }
  func.func @transform_12(%arg0: i32) -> (i32, i32) {
    %c0_i32 = arith.constant 0 : i32
    %c0_i32_0 = arith.constant 0 : i32
    %c0_i32_1 = arith.constant 0 : i32
    return %c0_i32, %c0_i32_0 : i32, i32
  }
  func.func @transform_13(%arg0: i32) -> (i32, i32) {
    %c0_i32 = arith.constant 0 : i32
    %c0_i32_0 = arith.constant 0 : i32
    %c0_i32_1 = arith.constant 0 : i32
    return %c0_i32, %c0_i32_0 : i32, i32
  }
  func.func @transform_14(%arg0: i32) -> (i32, i32, i32) {
    %c0_i32 = arith.constant 0 : i32
    %c0_i32_0 = arith.constant 0 : i32
    %c0_i32_1 = arith.constant 0 : i32
    return %arg0, %c0_i32, %c0_i32_0 : i32, i32, i32
  }
}

</mosaic_0001>

<llo_original>
// kernel: tile.13
$region0: #{tile.13}
  #allocation0 [shape = 's32[1]{0}', space=sflag, size = 0x4, scoped, tag = 'scoped memory for tile.13']
  %s0 = inlined_call_operand.vmem [shape: f32[6], index: 0, kind: input, shape index: {}]
  %s1 = inlined_call_operand.vmem [shape: f32[28,6], index: 1, kind: output, shape index: {}]
  // Predicated region
  $region2: #{tile.13} parent=0 // pred_check
    _
  $region3: #{tile.13} parent=0 // pred_check_branch
    %3 = sbr.rel (0) target = $region5
  $region4: #{tile.13} parent=0 // pred_region
    _
  $region5: #{tile.13} parent=0 // pred_fallthru
    _
  %v4 = vld [vmem:[%s0] ss:$0 sm:$0xff]
  %5 = vst [vmem:[%s1] sm:$0xff] %v4
  %s6 = scalar_lea.vmem %s1, 8
  %7 = vst [vmem:[%s6] sm:$0xff] %v4
  %s8 = scalar_lea.vmem %s1, 16
  %9 = vst [vmem:[%s8] sm:$0xff] %v4
  %s10 = scalar_lea.vmem %s1, 24
  %11 = vst [vmem:[%s10] sm:$0xff] %v4

// kernel: tile.14
$region0: #{tile.14}
  %s0 = inlined_call_operand.vmem [shape: f32[28,6], index: 0, kind: input, shape index: {}]
  %s1 = inlined_call_operand.vmem [shape: f32[1,168], index: 1, kind: output, shape index: {}]
  $region1: #{tile.14} parent=0
    #allocation0 [shape = 'u8[8192]{0}', space=vmem, size = 0x2000, scoped, tag = 'scoped mem for output reshape']
    %v2 = vld [vmem:[%s0] sm:$0x1]
    %vm3 = vcmask 48128
    %4 = vst.msk [vmem:[#allocation0] sm:$0x1] %vm3, %v2
    %s5 = scalar_lea.vmem %s0, 21
    %v6 = vld [vmem:[%s5] sm:$0x1]
    %s7 = scalar_lea.vmem %s0, 21
    %v8 = vld [vmem:[%s7] sm:$0x1]
    %vm9 = vcmask 15360
    %v10 = vsel %vm9, %v8, %v6
    %11 = vrot.lane.b32.xlu0 %v10, 126
    %v12 = vpop.permute.xlu0 %11
    %vm13 = vcmask 31744
    %s14 = scalar_lea.vmem [#allocation0], 8
    %15 = vst.msk [vmem:[%s14] sm:$0x1] %vm13, %v12
    %vm16 = vcmask 1048560
    %17 = vst.msk [vmem:[#allocation0] sm:$0x1] %vm16, %v12
    %s18 = scalar_lea.vmem %s0, 20
    %v19 = vld [vmem:[%s18] sm:$0x1]
    %20 = vrot.lane.b32.xlu0 %v19, 120
    %v21 = vpop.permute.xlu0 %20
    %vm22 = vcmask 1032128
    %23 = vst.msk [vmem:[#allocation0] sm:$0x1] %vm22, %v21
    %s24 = scalar_lea.vmem %s0, 19
    %v25 = vld [vmem:[%s24] sm:$0x1]
    %26 = vrot.lane.b32.xlu0 %v25, 114
    %v27 = vpop.permute.xlu0 %26
    %vm28 = vcmask 982928
    %29 = vst.msk [vmem:[#allocation0] sm:$0x1] %vm28, %v27
    %s30 = scalar_lea.vmem %s0, 18
    %v31 = vld [vmem:[%s30] sm:$0x1]
    %32 = vrot.lane.b32.xlu0 %v31, 108
    %v33 = vpop.permute.xlu0 %32
    %vm34 = vcmask 933728
    %35 = vst.msk [vmem:[#allocation0] sm:$0x1] %vm34, %v33
    %s36 = scalar_lea.vmem %s0, 17
    %v37 = vld [vmem:[%s36] sm:$0x1]
    %38 = vrot.lane.b32.xlu0 %v37, 102
    %v39 = vpop.permute.xlu0 %38
    %vm40 = vcmask 884528
    %41 = vst.msk [vmem:[#allocation0] sm:$0x1] %vm40, %v39
    %s42 = scalar_lea.vmem %s0, 16
    %v43 = vld [vmem:[%s42] sm:$0x1]
    %44 = vrot.lane.b32.xlu0 %v43, 96
    %v45 = vpop.permute.xlu0 %44
    %vm46 = vcmask 835328
    %47 = vst.msk [vmem:[#allocation0] sm:$0x1] %vm46, %v45
    %s48 = scalar_lea.vmem %s0, 15
    %v49 = vld [vmem:[%s48] sm:$0x1]
    %50 = vrot.lane.b32.xlu0 %v49, 90
    %v51 = vpop.permute.xlu0 %50
    %vm52 = vcmask 786128
    %53 = vst.msk [vmem:[#allocation0] sm:$0x1] %vm52, %v51
    %s54 = scalar_lea.vmem %s0, 14
    %v55 = vld [vmem:[%s54] sm:$0x1]
    %56 = vrot.lane.b32.xlu0 %v55, 84
    %v57 = vpop.permute.xlu0 %56
    %vm58 = vcmask 736928
    %59 = vst.msk [vmem:[#allocation0] sm:$0x1] %vm58, %v57
    %s60 = scalar_lea.vmem %s0, 13
    %v61 = vld [vmem:[%s60] sm:$0x1]
    %62 = vrot.lane.b32.xlu0 %v61, 78
    %v63 = vpop.permute.xlu0 %62
    %vm64 = vcmask 687728
    %65 = vst.msk [vmem:[#allocation0] sm:$0x1] %vm64, %v63
    %s66 = scalar_lea.vmem %s0, 12
    %v67 = vld [vmem:[%s66] sm:$0x1]
    %68 = vrot.lane.b32.xlu0 %v67, 72
    %v69 = vpop.permute.xlu0 %68
    %vm70 = vcmask 638528
    %71 = vst.msk [vmem:[#allocation0] sm:$0x1] %vm70, %v69
    %s72 = scalar_lea.vmem %s0, 11
    %v73 = vld [vmem:[%s72] sm:$0x1]
    %74 = vrot.lane.b32.xlu0 %v73, 66
    %v75 = vpop.permute.xlu0 %74
    %vm76 = vcmask 589328
    %77 = vst.msk [vmem:[#allocation0] sm:$0x1] %vm76, %v75
    %s78 = scalar_lea.vmem %s0, 10
    %v79 = vld [vmem:[%s78] sm:$0x1]
    %80 = vrot.lane.b32.xlu0 %v79, 60
    %v81 = vpop.permute.xlu0 %80
    %vm82 = vcmask 540128
    %83 = vst.msk [vmem:[#allocation0] sm:$0x1] %vm82, %v81
    %s84 = scalar_lea.vmem %s0, 9
    %v85 = vld [vmem:[%s84] sm:$0x1]
    %86 = vrot.lane.b32.xlu0 %v85, 54
    %v87 = vpop.permute.xlu0 %86
    %vm88 = vcmask 490928
    %89 = vst.msk [vmem:[#allocation0] sm:$0x1] %vm88, %v87
    %s90 = scalar_lea.vmem %s0, 8
    %v91 = vld [vmem:[%s90] sm:$0x1]
    %92 = vrot.lane.b32.xlu0 %v91, 48
    %v93 = vpop.permute.xlu0 %92
    %vm94 = vcmask 441728
    %95 = vst.msk [vmem:[#allocation0] sm:$0x1] %vm94, %v93
    %s96 = scalar_lea.vmem %s0, 7
    %v97 = vld [vmem:[%s96] sm:$0x1]
    %98 = vrot.lane.b32.xlu0 %v97, 42
    %v99 = vpop.permute.xlu0 %98
    %vm100 = vcmask 392528
    %101 = vst.msk [vmem:[#allocation0] sm:$0x1] %vm100, %v99
    %s102 = scalar_lea.vmem %s0, 6
    %v103 = vld [vmem:[%s102] sm:$0x1]
    %104 = vrot.lane.b32.xlu0 %v103, 36
    %v105 = vpop.permute.xlu0 %104
    %vm106 = vcmask 343328
    %107 = vst.msk [vmem:[#allocation0] sm:$0x1] %vm106, %v105
    %s108 = scalar_lea.vmem %s0, 27
    %v109 = vld [vmem:[%s108] sm:$0x1]
    %110 = vrot.lane.b32.xlu0 %v109, 34
    %v111 = vpop.permute.xlu0 %110
    %vm112 = vcmask 326928
    %s113 = scalar_lea.vmem [#allocation0], 8
    %114 = vst.msk [vmem:[%s113] sm:$0x1] %vm112, %v111
    %s115 = scalar_lea.vmem %s0, 5
    %v116 = vld [vmem:[%s115] sm:$0x1]
    %117 = vrot.lane.b32.xlu0 %v116, 30
    %v118 = vpop.permute.xlu0 %117
    %vm119 = vcmask 294128
    %120 = vst.msk [vmem:[#allocation0] sm:$0x1] %vm119, %v118
    %s121 = scalar_lea.vmem %s0, 26
    %v122 = vld [vmem:[%s121] sm:$0x1]
    %123 = vrot.lane.b32.xlu0 %v122, 28
    %v124 = vpop.permute.xlu0 %123
    %vm125 = vcmask 277728
    %s126 = scalar_lea.vmem [#allocation0], 8
    %127 = vst.msk [vmem:[%s126] sm:$0x1] %vm125, %v124
    %s128 = scalar_lea.vmem %s0, 4
    %v129 = vld [vmem:[%s128] sm:$0x1]
    %130 = vrot.lane.b32.xlu0 %v129, 24
    %v131 = vpop.permute.xlu0 %130
    %vm132 = vcmask 244928
    %133 = vst.msk [vmem:[#allocation0] sm:$0x1] %vm132, %v131
    %s134 = scalar_lea.vmem %s0, 25
    %v135 = vld [vmem:[%s134] sm:$0x1]
    %136 = vrot.lane.b32.xlu0 %v135, 22
    %v137 = vpop.permute.xlu0 %136
    %vm138 = vcmask 228528
    %s139 = scalar_lea.vmem [#allocation0], 8
    %140 = vst.msk [vmem:[%s139] sm:$0x1] %vm138, %v137
    %s141 = scalar_lea.vmem %s0, 3
    %v142 = vld [vmem:[%s141] sm:$0x1]
    %143 = vrot.lane.b32.xlu0 %v142, 18
    %v144 = vpop.permute.xlu0 %143
    %vm145 = vcmask 195728
    %146 = vst.msk [vmem:[#allocation0] sm:$0x1] %vm145, %v144
    %s147 = scalar_lea.vmem %s0, 24
    %v148 = vld [vmem:[%s147] sm:$0x1]
    %149 = vrot.lane.b32.xlu0 %v148, 16
    %v150 = vpop.permute.xlu0 %149
    %vm151 = vcmask 179328
    %s152 = scalar_lea.vmem [#allocation0], 8
    %153 = vst.msk [vmem:[%s152] sm:$0x1] %vm151, %v150
    %s154 = scalar_lea.vmem %s0, 2
    %v155 = vld [vmem:[%s154] sm:$0x1]
    %156 = vrot.lane.b32.xlu0 %v155, 12
    %v157 = vpop.permute.xlu0 %156
    %vm158 = vcmask 146528
    %159 = vst.msk [vmem:[#allocation0] sm:$0x1] %vm158, %v157
    %s160 = scalar_lea.vmem %s0, 23
    %v161 = vld [vmem:[%s160] sm:$0x1]
    %162 = vrot.lane.b32.xlu0 %v161, 10
    %v163 = vpop.permute.xlu0 %162
    %vm164 = vcmask 130128
    %s165 = scalar_lea.vmem [#allocation0], 8
    %166 = vst.msk [vmem:[%s165] sm:$0x1] %vm164, %v163
    %s167 = scalar_lea.vmem %s0, 1
    %v168 = vld [vmem:[%s167] sm:$0x1]
    %169 = vrot.lane.b32.xlu0 %v168, 6
    %v170 = vpop.permute.xlu0 %169
    %vm171 = vcmask 97328
    %172 = vst.msk [vmem:[#allocation0] sm:$0x1] %vm171, %v170
    %s173 = scalar_lea.vmem %s0, 22
    %v174 = vld [vmem:[%s173] sm:$0x1]
    %175 = vrot.lane.b32.xlu0 %v174, 4
    %v176 = vpop.permute.xlu0 %175
    %vm177 = vcmask 80928
    %s178 = scalar_lea.vmem [#allocation0], 8
    %179 = vst.msk [vmem:[%s178] sm:$0x1] %vm177, %v176
    %s181 = sshllo.u32 0, 1
    %v183 = vld [vmem:[#allocation0] sm:%s181]
    %s184 = sshllo.u32 0, 1
    %185 = vst [vmem:[%s1] sm:%s184] %v183
    %s186 = scalar_lea.vmem [#allocation0], 8
    %v187 = vld [vmem:[%s186] sm:%s181]
    %s188 = sshllo.u32 0, 1
    %s189 = scalar_lea.vmem %s1, 1
    %190 = vst [vmem:[%s189] sm:%s188] %v187

// kernel: tile.18
$region0: #{tile.18}
  #allocation0 [shape = 's32[1]{0}', space=sflag, size = 0x4, scoped, tag = 'scoped memory for tile.18']
  %s0 = inlined_call_operand.vmem [shape: f32[16], index: 0, kind: input, shape index: {}]
  %s1 = inlined_call_operand.vmem [shape: f32[10,16], index: 1, kind: output, shape index: {}]
  // Predicated region
  $region2: #{tile.18} parent=0 // pred_check
    _
  $region3: #{tile.18} parent=0 // pred_check_branch
    %3 = sbr.rel (0) target = $region5
  $region4: #{tile.18} parent=0 // pred_region
    _
  $region5: #{tile.18} parent=0 // pred_fallthru
    _
  %v4 = vld [vmem:[%s0] ss:$0 sm:$0xff]
  %5 = vst [vmem:[%s1] sm:$0xff] %v4
  %s6 = scalar_lea.vmem %s1, 8
  %7 = vst [vmem:[%s6] sm:$0xff] %v4

// kernel: tile.19
$region0: #{tile.19}
  %s0 = inlined_call_operand.vmem [shape: f32[10,16], index: 0, kind: input, shape index: {}]
  %s1 = inlined_call_operand.vmem [shape: f32[1,160], index: 1, kind: output, shape index: {}]
  $region1: #{tile.19} parent=0
    #allocation0 [shape = 'u8[8192]{0}', space=vmem, size = 0x2000, scoped, tag = 'scoped mem for output reshape']
    %s2 = smov 3
    %v3 = vld [vmem:[%s0] ss:$8 sm:%s2]
    %vm4 = vcmask 130048
    %5 = vst.msk [vmem:[#allocation0] ss:$8 sm:$0x3] %vm4, %v3
    %s6 = scalar_lea.vmem %s0, 7
    %v7 = vld [vmem:[%s6] sm:$0x1]
    %8 = vrot.lane.b32.xlu0 %v7, 112
    %v9 = vpop.permute.xlu0 %8
    %vm10 = vcmask 1048448
    %11 = vst.msk [vmem:[#allocation0] sm:$0x1] %vm10, %v9
    %s12 = scalar_lea.vmem %s0, 6
    %v13 = vld [vmem:[%s12] sm:$0x1]
    %14 = vrot.lane.b32.xlu0 %v13, 96
    %v15 = vpop.permute.xlu0 %14
    %vm16 = vcmask 917248
    %17 = vst.msk [vmem:[#allocation0] sm:$0x1] %vm16, %v15
    %s18 = scalar_lea.vmem %s0, 5
    %v19 = vld [vmem:[%s18] sm:$0x1]
    %20 = vrot.lane.b32.xlu0 %v19, 80
    %v21 = vpop.permute.xlu0 %20
    %vm22 = vcmask 786048
    %23 = vst.msk [vmem:[#allocation0] sm:$0x1] %vm22, %v21
    %s24 = scalar_lea.vmem %s0, 4
    %v25 = vld [vmem:[%s24] sm:$0x1]
    %26 = vrot.lane.b32.xlu0 %v25, 64
    %v27 = vpop.permute.xlu0 %26
    %vm28 = vcmask 654848
    %29 = vst.msk [vmem:[#allocation0] sm:$0x1] %vm28, %v27
    %s30 = scalar_lea.vmem %s0, 3
    %v31 = vld [vmem:[%s30] sm:$0x1]
    %32 = vrot.lane.b32.xlu0 %v31, 48
    %v33 = vpop.permute.xlu0 %32
    %vm34 = vcmask 523648
    %35 = vst.msk [vmem:[#allocation0] sm:$0x1] %vm34, %v33
    %s36 = scalar_lea.vmem %s0, 2
    %v37 = vld [vmem:[%s36] sm:$0x1]
    %38 = vrot.lane.b32.xlu0 %v37, 32
    %v39 = vpop.permute.xlu0 %38
    %vm40 = vcmask 392448
    %41 = vst.msk [vmem:[#allocation0] sm:$0x1] %vm40, %v39
    %s42 = scalar_lea.vmem %s0, 1
    %s43 = smov 3
    %v44 = vld [vmem:[%s42] ss:$8 sm:%s43]
    %45 = vrot.lane.b32.xlu0 %v44, 16
    %v46 = vpop.permute.xlu0 %45
    %vm47 = vcmask 261248
    %48 = vst.msk [vmem:[#allocation0] ss:$8 sm:$0x3] %vm47, %v46
    %s50 = sshllo.u32 0, 1
    %v52 = vld [vmem:[#allocation0] sm:%s50]
    %s53 = sshllo.u32 0, 1
    %54 = vst [vmem:[%s1] sm:%s53] %v52
    %s55 = scalar_lea.vmem [#allocation0], 8
    %v56 = vld [vmem:[%s55] sm:%s50]
    %s57 = sshllo.u32 0, 1
    %s58 = scalar_lea.vmem %s1, 1
    %59 = vst [vmem:[%s58] sm:%s57] %v56

// kernel: lenet_cifar_forward.1
$region0: #{lenet_cifar_forward.1}
  #allocation0 [shape = 'u32[]', space=smem, size = 0x4, offset = 0x4, fixed_abs, tag = 'smem constant byte address 0x4 - core index']
  #allocation1 [shape = 'u32[144,128]{1,0:T(1,128)}', space=vmem, size = 0x12000, scoped, tag = 'internal scratch']
  %s0 = inlined_call_operand.vmem [shape: f32[2,32,96], index: 0, kind: input, shape index: {}]
  %s1 = inlined_call_operand.vmem [shape: f32[5,96,168], index: 1, kind: input, shape index: {}]
  %s2 = inlined_call_operand.vmem [shape: f32[1,168], index: 2, kind: input, shape index: {}]
  %s3 = inlined_call_operand.vmem [shape: f32[5,10,28], index: 3, kind: input, shape index: {}]
  %s4 = inlined_call_operand.vmem [shape: f32[5,168,160], index: 4, kind: input, shape index: {}]
  %s5 = inlined_call_operand.vmem [shape: f32[1,160], index: 5, kind: input, shape index: {}]
  %s6 = inlined_call_operand.vmem [shape: f32[5,10], index: 6, kind: input, shape index: {}]
  %s7 = inlined_call_operand.vmem [shape: f32[160,80], index: 7, kind: input, shape index: {}]
  %s8 = inlined_call_operand.vmem [shape: f32[5,80,120], index: 8, kind: input, shape index: {}]
  %s9 = inlined_call_operand.vmem [shape: f32[1,120], index: 9, kind: input, shape index: {}]
  %s10 = inlined_call_operand.vmem [shape: f32[120,84], index: 10, kind: input, shape index: {}]
  %s11 = inlined_call_operand.vmem [shape: f32[1,84], index: 11, kind: input, shape index: {}]
  %s12 = inlined_call_operand.vmem [shape: f32[84,10], index: 12, kind: input, shape index: {}]
  %s13 = inlined_call_operand.vmem [shape: f32[1,10], index: 13, kind: input, shape index: {}]
  %s14 = inlined_call_operand.hbm [shape: f32[2,1,10], index: 14, kind: output, shape index: {}]
  %s15 = sld [smem:[#allocation0]]
  $region89: #{lenet_cifar_forward.1} parent=0
    _
  %s17 = ssub.s32 1, %s15
  %s18 = scalar_select 0, %s17, %s15
  $region1: #{lenet_cifar_forward.1} parent=0
    #allocation2 [shape = 'u8[1024]{0}', space=vmem, size = 0x400, scoped, tag = 'output window, operand 0']
    #allocation3 [shape = 's32[2]{0}', space=sflag, size = 0x8, scoped, tag = 'scoped memory for lenet_cifar_forward.1']
    %19 = vsyncpa [#allocation3], 0
    %s20 = scalar_lea.sflag [#allocation3], 1
    %21 = vsyncpa %s20, 0
    loop: start=0, step=1, limit=4
    $region2: #{lenet_cifar_forward.1} parent=1 // loop_pre_header
      _
    $region3: #{lenet_cifar_forward.1} parent=1 // loop_header
      %s23 = sphi 0, %s27
      %p24 = scmp.ge.s32.totalorder %s23, 4
      %s33 = sphi 0, %s35
      %s36 = sphi 0, %s33
      %s37 = sphi 0, %s36
      %s53 = sphi 0, %s37
      %s57 = sphi 0, %s57
      %s59 = sphi 0, %s57
      %s60 = sphi 0, %s59
      %s74 = sphi 0, %s60
      %s78 = sphi 0, %s78
      %s80 = sphi 0, %s78
      %s81 = sphi 0, %s80
      %s95 = sphi 0, %s81
      %s99 = sphi 0, %s99
      %s101 = sphi 0, %s99
      %s102 = sphi 0, %s101
      %s116 = sphi 0, %s102
      %s120 = sphi 0, %s120
      %s122 = sphi 0, %s120
      %s123 = sphi 0, %s122
      %s137 = sphi 0, %s123
      %s141 = sphi 0, %s141
      %s143 = sphi 0, %s141
      %s144 = sphi 0, %s143
      %s158 = sphi 0, %s144
      %s162 = sphi 0, %s162
      %s164 = sphi 0, %s162
      %s165 = sphi 0, %s164
      %s179 = sphi 0, %s165
      %s183 = sphi 0, %s183
      %s185 = sphi 0, %s183
      %s186 = sphi 0, %s185
      %s200 = sphi 0, %s186
      %s204 = sphi 0, %s204
      %s206 = sphi 0, %s204
      %s207 = sphi 0, %s206
      %s221 = sphi 0, %s207
      %s225 = sphi 0, %s225
      %s227 = sphi 0, %s225
      %s228 = sphi 0, %s227
      %s242 = sphi 0, %s228
      %s246 = sphi 0, %s246
      %s248 = sphi 0, %s246
      %s249 = sphi 0, %s248
      %s263 = sphi 0, %s249
      %s267 = sphi 0, %s267
      %s269 = sphi 0, %s267
      %s270 = sphi 0, %s269
      %s284 = sphi 0, %s270
      %s288 = sphi 0, %s288
      %s290 = sphi 0, %s288
      %s291 = sphi 0, %s290
      %s305 = sphi 0, %s291
      %s309 = sphi 0, %s309
      %s311 = sphi 0, %s309
      %s312 = sphi 0, %s311
      %s326 = sphi 0, %s312
      %s332 = sphi 0, %s334
      %s335 = sphi 0, %s332
      %s336 = sphi 0, %s335
      %s352 = sphi 0, %s336
    $region4: #{lenet_cifar_forward.1} parent=1 // loop_header_branch
      %26 = sbr.rel (%p24) target = $region8
    $region5: #{lenet_cifar_forward.1} parent=1 // loop_body
      %s28 = ssub.s32 %s23, 1
      %s29 = ssub.s32 %s23, 2
      %s30 = sadd.s32 %s23, 1
      %s31 = ssub.s32 %s23, %s30
      %p32 = scmp.eq.s32.totalorder %s31, 0
      %s34 = sadd.s32 %s33, 1
      %s35 = scalar_select %p32, %s33, %s34
      %p38 = pneg %p32
      %p39 = scmp.eq.s32.totalorder %s23, 1
      %p40 = por %p38, %p39
      %p41 = scmp.ne.s32.totalorder %s33, %s36
      %p42 = scmp.eq.s32.totalorder %s23, 0
      %p43 = por %p41, %p42
      %p44 = scmp.ne.s32.totalorder %s33, %s36
      %p45 = scmp.eq.s32.totalorder %s28, 1
      %p46 = por %p44, %p45
      %p47 = scmp.ne.s32.totalorder %s36, %s37
      %p48 = scmp.eq.s32.totalorder %s28, 0
      %p49 = por %p47, %p48
      %p50 = scmp.ne.s32.totalorder %s36, %s37
      %p51 = scmp.eq.s32.totalorder %s29, 1
      %p52 = por %p50, %p51
      %p54 = scmp.ne.s32.totalorder %s37, %s53
      %p55 = scmp.eq.s32.totalorder %s29, 0
      %p56 = por %p54, %p55
      %s58 = sadd.s32 %s57, 1
      %p61 = scmp.eq.s32.totalorder %s23, 1
      %p62 = scmp.ne.s32.totalorder %s57, %s59
      %p63 = scmp.eq.s32.totalorder %s23, 0
      %p64 = por %p62, %p63
      %p65 = scmp.ne.s32.totalorder %s57, %s59
      %p66 = scmp.eq.s32.totalorder %s28, 1
      %p67 = por %p65, %p66
      %p68 = scmp.ne.s32.totalorder %s59, %s60
      %p69 = scmp.eq.s32.totalorder %s28, 0
      %p70 = por %p68, %p69
      %p71 = scmp.ne.s32.totalorder %s59, %s60
      %p72 = scmp.eq.s32.totalorder %s29, 1
      %p73 = por %p71, %p72
      %p75 = scmp.ne.s32.totalorder %s60, %s74
      %p76 = scmp.eq.s32.totalorder %s29, 0
      %p77 = por %p75, %p76
      %s79 = sadd.s32 %s78, 1
      %p82 = scmp.eq.s32.totalorder %s23, 1
      %p83 = scmp.ne.s32.totalorder %s78, %s80
      %p84 = scmp.eq.s32.totalorder %s23, 0
      %p85 = por %p83, %p84
      %p86 = scmp.ne.s32.totalorder %s78, %s80
      %p87 = scmp.eq.s32.totalorder %s28, 1
      %p88 = por %p86, %p87
      %p89 = scmp.ne.s32.totalorder %s80, %s81
      %p90 = scmp.eq.s32.totalorder %s28, 0
      %p91 = por %p89, %p90
      %p92 = scmp.ne.s32.totalorder %s80, %s81
      %p93 = scmp.eq.s32.totalorder %s29, 1
      %p94 = por %p92, %p93
      %p96 = scmp.ne.s32.totalorder %s81, %s95
      %p97 = scmp.eq.s32.totalorder %s29, 0
      %p98 = por %p96, %p97
      %s100 = sadd.s32 %s99, 1
      %p103 = scmp.eq.s32.totalorder %s23, 1
      %p104 = scmp.ne.s32.totalorder %s99, %s101
      %p105 = scmp.eq.s32.totalorder %s23, 0
      %p106 = por %p104, %p105
      %p107 = scmp.ne.s32.totalorder %s99, %s101
      %p108 = scmp.eq.s32.totalorder %s28, 1
      %p109 = por %p107, %p108
      %p110 = scmp.ne.s32.totalorder %s101, %s102
      %p111 = scmp.eq.s32.totalorder %s28, 0
      %p112 = por %p110, %p111
      %p113 = scmp.ne.s32.totalorder %s101, %s102
      %p114 = scmp.eq.s32.totalorder %s29, 1
      %p115 = por %p113, %p114
      %p117 = scmp.ne.s32.totalorder %s102, %s116
      %p118 = scmp.eq.s32.totalorder %s29, 0
      %p119 = por %p117, %p118
      %s121 = sadd.s32 %s120, 1
      %p124 = scmp.eq.s32.totalorder %s23, 1
      %p125 = scmp.ne.s32.totalorder %s120, %s122
      %p126 = scmp.eq.s32.totalorder %s23, 0
      %p127 = por %p125, %p126
      %p128 = scmp.ne.s32.totalorder %s120, %s122
      %p129 = scmp.eq.s32.totalorder %s28, 1
      %p130 = por %p128, %p129
      %p131 = scmp.ne.s32.totalorder %s122, %s123
      %p132 = scmp.eq.s32.totalorder %s28, 0
      %p133 = por %p131, %p132
      %p134 = scmp.ne.s32.totalorder %s122, %s123
      %p135 = scmp.eq.s32.totalorder %s29, 1
      %p136 = por %p134, %p135
      %p138 = scmp.ne.s32.totalorder %s123, %s137
      %p139 = scmp.eq.s32.totalorder %s29, 0
      %p140 = por %p138, %p139
      %s142 = sadd.s32 %s141, 1
      %p145 = scmp.eq.s32.totalorder %s23, 1
      %p146 = scmp.ne.s32.totalorder %s141, %s143
      %p147 = scmp.eq.s32.totalorder %s23, 0
      %p148 = por %p146, %p147
      %p149 = scmp.ne.s32.totalorder %s141, %s143
      %p150 = scmp.eq.s32.totalorder %s28, 1
      %p151 = por %p149, %p150
      %p152 = scmp.ne.s32.totalorder %s143, %s144
      %p153 = scmp.eq.s32.totalorder %s28, 0
      %p154 = por %p152, %p153
      %p155 = scmp.ne.s32.totalorder %s143, %s144
      %p156 = scmp.eq.s32.totalorder %s29, 1
      %p157 = por %p155, %p156
      %p159 = scmp.ne.s32.totalorder %s144, %s158
      %p160 = scmp.eq.s32.totalorder %s29, 0
      %p161 = por %p159, %p160
      %s163 = sadd.s32 %s162, 1
      %p166 = scmp.eq.s32.totalorder %s23, 1
      %p167 = scmp.ne.s32.totalorder %s162, %s164
      %p168 = scmp.eq.s32.totalorder %s23, 0
      %p169 = por %p167, %p168
      %p170 = scmp.ne.s32.totalorder %s162, %s164
      %p171 = scmp.eq.s32.totalorder %s28, 1
      %p172 = por %p170, %p171
      %p173 = scmp.ne.s32.totalorder %s164, %s165
      %p174 = scmp.eq.s32.totalorder %s28, 0
      %p175 = por %p173, %p174
      %p176 = scmp.ne.s32.totalorder %s164, %s165
      %p177 = scmp.eq.s32.totalorder %s29, 1
      %p178 = por %p176, %p177
      %p180 = scmp.ne.s32.totalorder %s165, %s179
      %p181 = scmp.eq.s32.totalorder %s29, 0
      %p182 = por %p180, %p181
      %s184 = sadd.s32 %s183, 1
      %p187 = scmp.eq.s32.totalorder %s23, 1
      %p188 = scmp.ne.s32.totalorder %s183, %s185
      %p189 = scmp.eq.s32.totalorder %s23, 0
      %p190 = por %p188, %p189
      %p191 = scmp.ne.s32.totalorder %s183, %s185
      %p192 = scmp.eq.s32.totalorder %s28, 1
      %p193 = por %p191, %p192
      %p194 = scmp.ne.s32.totalorder %s185, %s186
      %p195 = scmp.eq.s32.totalorder %s28, 0
      %p196 = por %p194, %p195
      %p197 = scmp.ne.s32.totalorder %s185, %s186
      %p198 = scmp.eq.s32.totalorder %s29, 1
      %p199 = por %p197, %p198
      %p201 = scmp.ne.s32.totalorder %s186, %s200
      %p202 = scmp.eq.s32.totalorder %s29, 0
      %p203 = por %p201, %p202
      %s205 = sadd.s32 %s204, 1
      %p208 = scmp.eq.s32.totalorder %s23, 1
      %p209 = scmp.ne.s32.totalorder %s204, %s206
      %p210 = scmp.eq.s32.totalorder %s23, 0
      %p211 = por %p209, %p210
      %p212 = scmp.ne.s32.totalorder %s204, %s206
      %p213 = scmp.eq.s32.totalorder %s28, 1
      %p214 = por %p212, %p213
      %p215 = scmp.ne.s32.totalorder %s206, %s207
      %p216 = scmp.eq.s32.totalorder %s28, 0
      %p217 = por %p215, %p216
      %p218 = scmp.ne.s32.totalorder %s206, %s207
      %p219 = scmp.eq.s32.totalorder %s29, 1
      %p220 = por %p218, %p219
      %p222 = scmp.ne.s32.totalorder %s207, %s221
      %p223 = scmp.eq.s32.totalorder %s29, 0
      %p224 = por %p222, %p223
      %s226 = sadd.s32 %s225, 1
      %p229 = scmp.eq.s32.totalorder %s23, 1
      %p230 = scmp.ne.s32.totalorder %s225, %s227
      %p231 = scmp.eq.s32.totalorder %s23, 0
      %p232 = por %p230, %p231
      %p233 = scmp.ne.s32.totalorder %s225, %s227
      %p234 = scmp.eq.s32.totalorder %s28, 1
      %p235 = por %p233, %p234
      %p236 = scmp.ne.s32.totalorder %s227, %s228
      %p237 = scmp.eq.s32.totalorder %s28, 0
      %p238 = por %p236, %p237
      %p239 = scmp.ne.s32.totalorder %s227, %s228
      %p240 = scmp.eq.s32.totalorder %s29, 1
      %p241 = por %p239, %p240
      %p243 = scmp.ne.s32.totalorder %s228, %s242
      %p244 = scmp.eq.s32.totalorder %s29, 0
      %p245 = por %p243, %p244
      %s247 = sadd.s32 %s246, 1
      %p250 = scmp.eq.s32.totalorder %s23, 1
      %p251 = scmp.ne.s32.totalorder %s246, %s248
      %p252 = scmp.eq.s32.totalorder %s23, 0
      %p253 = por %p251, %p252
      %p254 = scmp.ne.s32.totalorder %s246, %s248
      %p255 = scmp.eq.s32.totalorder %s28, 1
      %p256 = por %p254, %p255
      %p257 = scmp.ne.s32.totalorder %s248, %s249
      %p258 = scmp.eq.s32.totalorder %s28, 0
      %p259 = por %p257, %p258
      %p260 = scmp.ne.s32.totalorder %s248, %s249
      %p261 = scmp.eq.s32.totalorder %s29, 1
      %p262 = por %p260, %p261
      %p264 = scmp.ne.s32.totalorder %s249, %s263
      %p265 = scmp.eq.s32.totalorder %s29, 0
      %p266 = por %p264, %p265
      %s268 = sadd.s32 %s267, 1
      %p271 = scmp.eq.s32.totalorder %s23, 1
      %p272 = scmp.ne.s32.totalorder %s267, %s269
      %p273 = scmp.eq.s32.totalorder %s23, 0
      %p274 = por %p272, %p273
      %p275 = scmp.ne.s32.totalorder %s267, %s269
      %p276 = scmp.eq.s32.totalorder %s28, 1
      %p277 = por %p275, %p276
      %p278 = scmp.ne.s32.totalorder %s269, %s270
      %p279 = scmp.eq.s32.totalorder %s28, 0
      %p280 = por %p278, %p279
      %p281 = scmp.ne.s32.totalorder %s269, %s270
      %p282 = scmp.eq.s32.totalorder %s29, 1
      %p283 = por %p281, %p282
      %p285 = scmp.ne.s32.totalorder %s270, %s284
      %p286 = scmp.eq.s32.totalorder %s29, 0
      %p287 = por %p285, %p286
      %s289 = sadd.s32 %s288, 1
      %p292 = scmp.eq.s32.totalorder %s23, 1
      %p293 = scmp.ne.s32.totalorder %s288, %s290
      %p294 = scmp.eq.s32.totalorder %s23, 0
      %p295 = por %p293, %p294
      %p296 = scmp.ne.s32.totalorder %s288, %s290
      %p297 = scmp.eq.s32.totalorder %s28, 1
      %p298 = por %p296, %p297
      %p299 = scmp.ne.s32.totalorder %s290, %s291
      %p300 = scmp.eq.s32.totalorder %s28, 0
      %p301 = por %p299, %p300
      %p302 = scmp.ne.s32.totalorder %s290, %s291
      %p303 = scmp.eq.s32.totalorder %s29, 1
      %p304 = por %p302, %p303
      %p306 = scmp.ne.s32.totalorder %s291, %s305
      %p307 = scmp.eq.s32.totalorder %s29, 0
      %p308 = por %p306, %p307
      %s310 = sadd.s32 %s309, 1
      %p313 = scmp.eq.s32.totalorder %s23, 1
      %p314 = scmp.ne.s32.totalorder %s309, %s311
      %p315 = scmp.eq.s32.totalorder %s23, 0
      %p316 = por %p314, %p315
      %p317 = scmp.ne.s32.totalorder %s309, %s311
      %p318 = scmp.eq.s32.totalorder %s28, 1
      %p319 = por %p317, %p318
      %p320 = scmp.ne.s32.totalorder %s311, %s312
      %p321 = scmp.eq.s32.totalorder %s28, 0
      %p322 = por %p320, %p321
      %p323 = scmp.ne.s32.totalorder %s311, %s312
      %p324 = scmp.eq.s32.totalorder %s29, 1
      %p325 = por %p323, %p324
      %p327 = scmp.ne.s32.totalorder %s312, %s326
      %p328 = scmp.eq.s32.totalorder %s29, 0
      %p329 = por %p327, %p328
      %s330 = ssub.s32 %s23, %s30
      %p331 = scmp.eq.s32.totalorder %s330, 0
      %s333 = sadd.s32 %s332, 1
      %s334 = scalar_select %p331, %s332, %s333
      %p337 = pneg %p331
      %p338 = scmp.eq.s32.totalorder %s23, 1
      %p339 = por %p337, %p338
      %p340 = scmp.ne.s32.totalorder %s332, %s335
      %p341 = scmp.eq.s32.totalorder %s23, 0
      %p342 = por %p340, %p341
      %p343 = scmp.ne.s32.totalorder %s332, %s335
      %p344 = scmp.eq.s32.totalorder %s28, 1
      %p345 = por %p343, %p344
      %p346 = scmp.ne.s32.totalorder %s335, %s336
      %p347 = scmp.eq.s32.totalorder %s28, 0
      %p348 = por %p346, %p347
      %p349 = scmp.ne.s32.totalorder %s335, %s336
      %p350 = scmp.eq.s32.totalorder %s29, 1
      %p351 = por %p349, %p350
      %p353 = scmp.ne.s32.totalorder %s336, %s352
      %p354 = scmp.eq.s32.totalorder %s29, 0
      %p355 = por %p353, %p354
      %p356 = scmp.le.s32.totalorder 1, %s23
      %p357 = scmp.lt.s32.totalorder %s23, 3
      %p358 = pnand %p356, %p357
      %p359 = pneg %p358
      // Predicated region
      $region9: #{lenet_cifar_forward.1} parent=5 // pred_check
        _
      $region10: #{lenet_cifar_forward.1} parent=5 // pred_check_branch
        %361 = sbr.rel (%p358) target = $region12
      $region11: #{lenet_cifar_forward.1} parent=5 // pred_region
        %s362 = ssub.s32 %s23, 1
        // Predicated region
        $region13: #{lenet_cifar_forward.1} parent=11 // pred_check
          %p363 = pneg %p70
        $region14: #{lenet_cifar_forward.1} parent=11 // pred_check_branch
          %365 = sbr.rel (%p363) target = $region16
        $region15: #{lenet_cifar_forward.1} parent=11 // pred_region
          _
        $region16: #{lenet_cifar_forward.1} parent=11 // pred_fallthru
          _
        // Predicated region
        $region17: #{lenet_cifar_forward.1} parent=11 // pred_check
          %p366 = pneg %p91
        $region18: #{lenet_cifar_forward.1} parent=11 // pred_check_branch
          %368 = sbr.rel (%p366) target = $region20
        $region19: #{lenet_cifar_forward.1} parent=11 // pred_region
          _
        $region20: #{lenet_cifar_forward.1} parent=11 // pred_fallthru
          _
        // Predicated region
        $region21: #{lenet_cifar_forward.1} parent=11 // pred_check
          %p369 = pneg %p112
        $region22: #{lenet_cifar_forward.1} parent=11 // pred_check_branch
          %371 = sbr.rel (%p369) target = $region24
        $region23: #{lenet_cifar_forward.1} parent=11 // pred_region
          _
        $region24: #{lenet_cifar_forward.1} parent=11 // pred_fallthru
          _
        // Predicated region
        $region25: #{lenet_cifar_forward.1} parent=11 // pred_check
          %p372 = pneg %p133
        $region26: #{lenet_cifar_forward.1} parent=11 // pred_check_branch
          %374 = sbr.rel (%p372) target = $region28
        $region27: #{lenet_cifar_forward.1} parent=11 // pred_region
          _
        $region28: #{lenet_cifar_forward.1} parent=11 // pred_fallthru
          _
        // Predicated region
        $region29: #{lenet_cifar_forward.1} parent=11 // pred_check
          %p375 = pneg %p154
        $region30: #{lenet_cifar_forward.1} parent=11 // pred_check_branch
          %377 = sbr.rel (%p375) target = $region32
        $region31: #{lenet_cifar_forward.1} parent=11 // pred_region
          _
        $region32: #{lenet_cifar_forward.1} parent=11 // pred_fallthru
          _
        // Predicated region
        $region33: #{lenet_cifar_forward.1} parent=11 // pred_check
          %p378 = pneg %p175
        $region34: #{lenet_cifar_forward.1} parent=11 // pred_check_branch
          %380 = sbr.rel (%p378) target = $region36
        $region35: #{lenet_cifar_forward.1} parent=11 // pred_region
          _
        $region36: #{lenet_cifar_forward.1} parent=11 // pred_fallthru
          _
        // Predicated region
        $region37: #{lenet_cifar_forward.1} parent=11 // pred_check
          %p381 = pneg %p196
        $region38: #{lenet_cifar_forward.1} parent=11 // pred_check_branch
          %383 = sbr.rel (%p381) target = $region40
        $region39: #{lenet_cifar_forward.1} parent=11 // pred_region
          _
        $region40: #{lenet_cifar_forward.1} parent=11 // pred_fallthru
          _
        // Predicated region
        $region41: #{lenet_cifar_forward.1} parent=11 // pred_check
          %p384 = pneg %p217
        $region42: #{lenet_cifar_forward.1} parent=11 // pred_check_branch
          %386 = sbr.rel (%p384) target = $region44
        $region43: #{lenet_cifar_forward.1} parent=11 // pred_region
          _
        $region44: #{lenet_cifar_forward.1} parent=11 // pred_fallthru
          _
        // Predicated region
        $region45: #{lenet_cifar_forward.1} parent=11 // pred_check
          %p387 = pneg %p238
        $region46: #{lenet_cifar_forward.1} parent=11 // pred_check_branch
          %389 = sbr.rel (%p387) target = $region48
        $region47: #{lenet_cifar_forward.1} parent=11 // pred_region
          _
        $region48: #{lenet_cifar_forward.1} parent=11 // pred_fallthru
          _
        // Predicated region
        $region49: #{lenet_cifar_forward.1} parent=11 // pred_check
          %p390 = pneg %p259
        $region50: #{lenet_cifar_forward.1} parent=11 // pred_check_branch
          %392 = sbr.rel (%p390) target = $region52
        $region51: #{lenet_cifar_forward.1} parent=11 // pred_region
          _
        $region52: #{lenet_cifar_forward.1} parent=11 // pred_fallthru
          _
        // Predicated region
        $region53: #{lenet_cifar_forward.1} parent=11 // pred_check
          %p393 = pneg %p280
        $region54: #{lenet_cifar_forward.1} parent=11 // pred_check_branch
          %395 = sbr.rel (%p393) target = $region56
        $region55: #{lenet_cifar_forward.1} parent=11 // pred_region
          _
        $region56: #{lenet_cifar_forward.1} parent=11 // pred_fallthru
          _
        // Predicated region
        $region57: #{lenet_cifar_forward.1} parent=11 // pred_check
          %p396 = pneg %p301
        $region58: #{lenet_cifar_forward.1} parent=11 // pred_check_branch
          %398 = sbr.rel (%p396) target = $region60
        $region59: #{lenet_cifar_forward.1} parent=11 // pred_region
          _
        $region60: #{lenet_cifar_forward.1} parent=11 // pred_fallthru
          _
        // Predicated region
        $region61: #{lenet_cifar_forward.1} parent=11 // pred_check
          %p399 = pneg %p322
        $region62: #{lenet_cifar_forward.1} parent=11 // pred_check_branch
          %401 = sbr.rel (%p399) target = $region64
        $region63: #{lenet_cifar_forward.1} parent=11 // pred_region
          _
        $region64: #{lenet_cifar_forward.1} parent=11 // pred_fallthru
          _
      $region12: #{lenet_cifar_forward.1} parent=5 // pred_fallthru
        _
      %p402 = scmp.lt.s32.totalorder %s23, 2
      // Predicated region
      $region65: #{lenet_cifar_forward.1} parent=5 // pred_check
        %p403 = pneg %p402
      $region66: #{lenet_cifar_forward.1} parent=5 // pred_check_branch
        %405 = sbr.rel (%p403) target = $region68
      $region67: #{lenet_cifar_forward.1} parent=5 // pred_region
        // Predicated region
        $region69: #{lenet_cifar_forward.1} parent=67 // pred_check
          %p406 = pneg %p43
        $region70: #{lenet_cifar_forward.1} parent=67 // pred_check_branch
          %408 = sbr.rel (%p406) target = $region72
        $region71: #{lenet_cifar_forward.1} parent=67 // pred_region
          %p409 = scmp.lt.s32.totalorder %s23, 1
          %s410 = scalar_select %p409, %s23, 1
          %s411 = smul.addr %s410, 4
          %s412 = smul.addr %s411, 8
          %s413 = scalar_lea.vmem %s0, %s412
        $region72: #{lenet_cifar_forward.1} parent=67 // pred_fallthru
          _
      $region68: #{lenet_cifar_forward.1} parent=5 // pred_fallthru
        _
      %p414 = scmp.le.s32.totalorder 1, %s23
      %p415 = scmp.lt.s32.totalorder %s23, 3
      %p416 = pnand %p414, %p415
      %p417 = pneg %p416
      // Predicated region
      $region73: #{lenet_cifar_forward.1} parent=5 // pred_check
        _
      $region74: #{lenet_cifar_forward.1} parent=5 // pred_check_branch
        %419 = sbr.rel (%p416) target = $region76
      $region75: #{lenet_cifar_forward.1} parent=5 // pred_region
        %s420 = ssub.s32 %s23, 1
        %p421 = scmp.lt.s32.totalorder %s28, 1
        %s422 = scalar_select %p421, %s28, 1
        %s423 = smul.addr %s422, 4
        %s424 = smul.addr %s423, 8
        %s425 = scalar_lea.vmem %s0, %s424
        %p426 = pneg %p49
        %p427 = pneg %p46
        %p428 = pneg %p70
        %p429 = pneg %p67
        %p430 = pneg %p91
        %p431 = pneg %p88
        %p432 = pneg %p112
        %p433 = pneg %p109
        %p434 = pneg %p133
        %p435 = pneg %p130
        %p436 = pneg %p154
        %p437 = pneg %p151
        %p438 = pneg %p175
        %p439 = pneg %p172
        %p440 = pneg %p196
        %p441 = pneg %p193
        %p442 = pneg %p217
        %p443 = pneg %p214
        %p444 = pneg %p238
        %p445 = pneg %p235
        %p446 = pneg %p259
        %p447 = pneg %p256
        %p448 = pneg %p280
        %p449 = pneg %p277
        %p450 = pneg %p301
        %p451 = pneg %p298
        %p452 = pneg %p322
        %p453 = pneg %p319
        %p454 = pneg %p348
        %p455 = pneg %p345
        %s456 = sand.u32 %s335, 1
        %s457 = scalar_lea.sflag [#allocation3], %s456
        %s458 = sand.u32 %s335, 1
        %s459 = scalar_lea.vmem [#allocation2], %s458
        %p460 = scmp.lt.s32.totalorder %s28, 1
        %s461 = scalar_select %p460, %s28, 1
        %s462 = smul.addr %s461, 4
        %s463 = smul.addr %s462, 8
        %s464 = scalar_lea.vmem %s0, %s463
        %v465 = vld [vmem:[%s464] sm:$0xff]
        %v466 = vld [vmem:[%s464 + $0x8] sm:$0xff]
        %v467 = vld [vmem:[%s464 + $0x10] sm:$0xff]
        %v468 = vld [vmem:[%s464 + $0x18] sm:$0xff]
        %v469 = vld [vmem:[%s1] sm:$0xff]
        %v470 = vld [vmem:[%s1 + $0x8] sm:$0xff]
        %v471 = vld [vmem:[%s1 + $0x10] sm:$0xff]
        %v472 = vld [vmem:[%s1 + $0x18] sm:$0xff]
        %v473 = vld [vmem:[%s1 + $0x20] sm:$0xff]
        %v474 = vld [vmem:[%s1 + $0x28] sm:$0xff]
        %v475 = vld [vmem:[%s1 + $0x30] sm:$0xff]
        %v476 = vld [vmem:[%s1 + $0x38] sm:$0xff]
        %v477 = vld [vmem:[%s1 + $0x40] sm:$0xff]
        %v478 = vld [vmem:[%s1 + $0x48] sm:$0xff]
        %v479 = vld [vmem:[%s1 + $0x50] sm:$0xff]
        %v480 = vld [vmem:[%s1 + $0x58] sm:$0xff]
        %v481 = vld [vmem:[%s1 + $0x60] sm:$0xff]
        %v482 = vld [vmem:[%s1 + $0x68] sm:$0xff]
        %v483 = vld [vmem:[%s1 + $0x70] sm:$0xff]
        %v484 = vld [vmem:[%s1 + $0x78] sm:$0xff]
        %v485 = vld [vmem:[%s1 + $0x80] sm:$0xff]
        %v486 = vld [vmem:[%s1 + $0x88] sm:$0xff]
        %v487 = vld [vmem:[%s1 + $0x90] sm:$0xff]
        %v488 = vld [vmem:[%s1 + $0x98] sm:$0xff]
        %v489 = vld [vmem:[%s1 + $0xa0] sm:$0xff]
        %v490 = vld [vmem:[%s1 + $0xa8] sm:$0xff]
        %v491 = vld [vmem:[%s1 + $0xb0] sm:$0xff]
        %v492 = vld [vmem:[%s1 + $0xb8] sm:$0xff]
        %s493 = scalar_lea.vmem %s1, 192
        %v494 = vld [vmem:[%s493] sm:$0xff]
        %v495 = vld [vmem:[%s493 + $0x8] sm:$0xff]
        %v496 = vld [vmem:[%s493 + $0x10] sm:$0xff]
        %v497 = vld [vmem:[%s493 + $0x18] sm:$0xff]
        %v498 = vld [vmem:[%s493 + $0x20] sm:$0xff]
        %v499 = vld [vmem:[%s493 + $0x28] sm:$0xff]
        %v500 = vld [vmem:[%s493 + $0x30] sm:$0xff]
        %v501 = vld [vmem:[%s493 + $0x38] sm:$0xff]
        %v502 = vld [vmem:[%s493 + $0x40] sm:$0xff]
        %v503 = vld [vmem:[%s493 + $0x48] sm:$0xff]
        %v504 = vld [vmem:[%s493 + $0x50] sm:$0xff]
        %v505 = vld [vmem:[%s493 + $0x58] sm:$0xff]
        %v506 = vld [vmem:[%s493 + $0x60] sm:$0xff]
        %v507 = vld [vmem:[%s493 + $0x68] sm:$0xff]
        %v508 = vld [vmem:[%s493 + $0x70] sm:$0xff]
        %v509 = vld [vmem:[%s493 + $0x78] sm:$0xff]
        %v510 = vld [vmem:[%s493 + $0x80] sm:$0xff]
        %v511 = vld [vmem:[%s493 + $0x88] sm:$0xff]
        %v512 = vld [vmem:[%s493 + $0x90] sm:$0xff]
        %v513 = vld [vmem:[%s493 + $0x98] sm:$0xff]
        %v514 = vld [vmem:[%s493 + $0xa0] sm:$0xff]
        %v515 = vld [vmem:[%s493 + $0xa8] sm:$0xff]
        %v516 = vld [vmem:[%s493 + $0xb0] sm:$0xff]
        %v517 = vld [vmem:[%s493 + $0xb8] sm:$0xff]
        %vm522 = vcmask 1046528
        %v523 = vrot.slane %v465, 1
        %v524 = vrot.slane %v466, 1
        %v525 = vsel %vm522, %v523, %v524
        %v526 = vrot.slane %v467, 1
        %v527 = vsel %vm522, %v524, %v526
        %v528 = vrot.slane %v468, 1
        %v529 = vsel %vm522, %v526, %v528
        %vm530 = vcmask 785408
        %v531 = vsel %vm530, %v525, 0
        %v533 = vsel %vm530, %v527, 0
        %v535 = vsel %vm530, %v529, 0
        %v537 = vsel %vm530, %v528, 0
        %539 = vmatprep.subr.mxu0 %v495
        %540 = vmatpush1.msra.mxu0 %v494
        %541 = vmatprep.subr.mxu0 %v497
        %542 = vmatpush1.msra.mxu0 %v496
        %543 = vmatprep.subr.mxu0 %v499
        %544 = vmatpush1.msra.mxu0 %v498
        %545 = vmatprep.subr.mxu0 %v501
        %546 = vmatpush1.msra.mxu0 %v500
        %547 = vmatprep.subr.mxu0 %v503
        %548 = vmatpush1.msra.mxu0 %v502
        %549 = vmatprep.subr.mxu0 %v505
        %550 = vmatpush1.msra.mxu0 %v504
        %551 = vmatprep.subr.mxu0 %v507
        %552 = vmatpush1.msra.mxu0 %v506
        %553 = vmatprep.subr.mxu0 %v509
        %554 = vmatpush1.msra.mxu0 %v508
        %555 = vmatprep.subr.mxu0 %v511
        %556 = vmatpush1.msra.mxu0 %v510
        %557 = vmatprep.subr.mxu0 %v513
        %558 = vmatpush1.msra.mxu0 %v512
        %559 = vmatprep.subr.mxu0 %v515
        %560 = vmatpush1.msra.mxu0 %v514
        %561 = vmatprep.subr.mxu0 %v517
        %562 = vmatpush1.msra.mxu0 %v516
        %563 = vmatprep.subr.mxu0 0.0
        %564 = vmatpush1.msra.mxu0 0.0
        %565 = vmatprep.subr.mxu0 0.0
        %566 = vmatpush1.msra.mxu0 0.0
        %567 = vmatprep.subr.mxu0 0.0
        %568 = vmatpush1.msra.mxu0 0.0
        %569 = vmatprep.subr.mxu0 0.0
        %570 = vmatpush1.msra.mxu0 0.0
        %571 = vmatprep.subr.mxu0 0.0
        %572 = vmatpush1.msra.mxu0 0.0
        %573 = vmatprep.subr.mxu0 0.0
        %574 = vmatpush1.msra.mxu0 0.0
        %575 = vmatprep.subr.mxu0 0.0
        %576 = vmatpush1.msra.mxu0 0.0
        %577 = vmatprep.subr.mxu0 0.0
        %578 = vmatpush1.msra.mxu0 0.0
        %579 = vmatprep.subr.mxu0 0.0
        %580 = vmatpush1.msra.mxu0 0.0
        %581 = vmatprep.subr.mxu0 0.0
        %582 = vmatpush1.msra.mxu0 0.0
        %583 = vmatprep.subr.mxu0 0.0
        %584 = vmatpush1.msra.mxu0 0.0
        %585 = vmatprep.subr.mxu0 0.0
        %586 = vmatpush1.msra.mxu0 0.0
        %587 = vmatprep.subr.mxu0 0.0
        %588 = vmatpush1.msra.mxu0 0.0
        %589 = vmatprep.subr.mxu0 0.0
        %590 = vmatpush1.msra.mxu0 0.0
        %591 = vmatprep.subr.mxu0 0.0
        %592 = vmatpush1.msra.mxu0 0.0
        %593 = vmatprep.subr.mxu0 0.0
        %594 = vmatpush1.msra.mxu0 0.0
        %595 = vmatprep.subr.mxu0 0.0
        %596 = vmatpush1.msra.mxu0 0.0
        %597 = vmatprep.subr.mxu0 0.0
        %598 = vmatpush1.msra.mxu0 0.0
        %599 = vmatprep.subr.mxu0 0.0
        %600 = vmatpush1.msra.mxu0 0.0
        %601 = vmatprep.subr.mxu0 0.0
        %602 = vmatpush1.msra.mxu0 0.0
        %603 = vmatprep.mubr.f32.mxu0 0.0
        %604 = vmatmul.mubr.f32.gmra.mrb[0].mxu0 %v531
        %v605 = vpop.f32.mrb[0].mxu0
        %v606 = vadd.f32 0.0, %v605
        %v607 = vpop.f32.mrb[0].mxu0
        %v608 = vadd.f32 0.0, %v607
        %609 = vmatprep.mubr.f32.mxu0 0.0
        %610 = vmatmul.mubr.f32.gmra.mrb[0].mxu0 %v533
        %v611 = vpop.f32.mrb[0].mxu0
        %v612 = vadd.f32 0.0, %v611
        %v613 = vpop.f32.mrb[0].mxu0
        %v614 = vadd.f32 0.0, %v613
        %615 = vmatprep.mubr.f32.mxu0 0.0
        %616 = vmatmul.mubr.f32.gmra.mrb[0].mxu0 %v535
        %v617 = vpop.f32.mrb[0].mxu0
        %v618 = vadd.f32 0.0, %v617
        %v619 = vpop.f32.mrb[0].mxu0
        %v620 = vadd.f32 0.0, %v619
        %621 = vmatprep.mubr.f32.mxu0 0.0
        %622 = vmatmul.mubr.f32.gmra.mrb[0].mxu0 %v537
        %v623 = vpop.f32.mrb[0].mxu0
        %v624 = vadd.f32 0.0, %v623
        %v625 = vpop.f32.mrb[0].mxu0
        %v626 = vadd.f32 0.0, %v625
        %627 = vdwg.mxu0
        %v628 = vsel %vm530, %v465, 0
        %v630 = vsel %vm530, %v466, 0
        %v632 = vsel %vm530, %v467, 0
        %v634 = vsel %vm530, %v468, 0
        %636 = vmatprep.subr.mxu0 %v470
        %637 = vmatpush1.msra.mxu0 %v469
        %638 = vmatprep.subr.mxu0 %v472
        %639 = vmatpush1.msra.mxu0 %v471
        %640 = vmatprep.subr.mxu0 %v474
        %641 = vmatpush1.msra.mxu0 %v473
        %642 = vmatprep.subr.mxu0 %v476
        %643 = vmatpush1.msra.mxu0 %v475
        %644 = vmatprep.subr.mxu0 %v478
        %645 = vmatpush1.msra.mxu0 %v477
        %646 = vmatprep.subr.mxu0 %v480
        %647 = vmatpush1.msra.mxu0 %v479
        %648 = vmatprep.subr.mxu0 %v482
        %649 = vmatpush1.msra.mxu0 %v481
        %650 = vmatprep.subr.mxu0 %v484
        %651 = vmatpush1.msra.mxu0 %v483
        %652 = vmatprep.subr.mxu0 %v486
        %653 = vmatpush1.msra.mxu0 %v485
        %654 = vmatprep.subr.mxu0 %v488
        %655 = vmatpush1.msra.mxu0 %v487
        %656 = vmatprep.subr.mxu0 %v490
        %657 = vmatpush1.msra.mxu0 %v489
        %658 = vmatprep.subr.mxu0 %v492
        %659 = vmatpush1.msra.mxu0 %v491
        %660 = vmatprep.subr.mxu0 0.0
        %661 = vmatpush1.msra.mxu0 0.0
        %662 = vmatprep.subr.mxu0 0.0
        %663 = vmatpush1.msra.mxu0 0.0
        %664 = vmatprep.subr.mxu0 0.0
        %665 = vmatpush1.msra.mxu0 0.0
        %666 = vmatprep.subr.mxu0 0.0
        %667 = vmatpush1.msra.mxu0 0.0
        %668 = vmatprep.subr.mxu0 0.0
        %669 = vmatpush1.msra.mxu0 0.0
        %670 = vmatprep.subr.mxu0 0.0
        %671 = vmatpush1.msra.mxu0 0.0
        %672 = vmatprep.subr.mxu0 0.0
        %673 = vmatpush1.msra.mxu0 0.0
        %674 = vmatprep.subr.mxu0 0.0
        %675 = vmatpush1.msra.mxu0 0.0
        %676 = vmatprep.subr.mxu0 0.0
        %677 = vmatpush1.msra.mxu0 0.0
        %678 = vmatprep.subr.mxu0 0.0
        %679 = vmatpush1.msra.mxu0 0.0
        %680 = vmatprep.subr.mxu0 0.0
        %681 = vmatpush1.msra.mxu0 0.0
        %682 = vmatprep.subr.mxu0 0.0
        %683 = vmatpush1.msra.mxu0 0.0
        %684 = vmatprep.subr.mxu0 0.0
        %685 = vmatpush1.msra.mxu0 0.0
        %686 = vmatprep.subr.mxu0 0.0
        %687 = vmatpush1.msra.mxu0 0.0
        %688 = vmatprep.subr.mxu0 0.0
        %689 = vmatpush1.msra.mxu0 0.0
        %690 = vmatprep.subr.mxu0 0.0
        %691 = vmatpush1.msra.mxu0 0.0
        %692 = vmatprep.subr.mxu0 0.0
        %693 = vmatpush1.msra.mxu0 0.0
        %694 = vmatprep.subr.mxu0 0.0
        %695 = vmatpush1.msra.mxu0 0.0
        %696 = vmatprep.subr.mxu0 0.0
        %697 = vmatpush1.msra.mxu0 0.0
        %698 = vmatprep.subr.mxu0 0.0
        %699 = vmatpush1.msra.mxu0 0.0
        %700 = vmatprep.mubr.f32.mxu0 0.0
        %701 = vmatmul.mubr.f32.gmra.mrb[0].mxu0 %v628
        %v702 = vpop.f32.mrb[0].mxu0
        %v703 = vadd.f32 %v606, %v702
        %v704 = vpop.f32.mrb[0].mxu0
        %v705 = vadd.f32 %v608, %v704
        %706 = vmatprep.mubr.f32.mxu0 0.0
        %707 = vmatmul.mubr.f32.gmra.mrb[0].mxu0 %v630
        %v708 = vpop.f32.mrb[0].mxu0
        %v709 = vadd.f32 %v612, %v708
        %v710 = vpop.f32.mrb[0].mxu0
        %v711 = vadd.f32 %v614, %v710
        %712 = vmatprep.mubr.f32.mxu0 0.0
        %713 = vmatmul.mubr.f32.gmra.mrb[0].mxu0 %v632
        %v714 = vpop.f32.mrb[0].mxu0
        %v715 = vadd.f32 %v618, %v714
        %v716 = vpop.f32.mrb[0].mxu0
        %v717 = vadd.f32 %v620, %v716
        %718 = vmatprep.mubr.f32.mxu0 0.0
        %719 = vmatmul.mubr.f32.gmra.mrb[0].mxu0 %v634
        %v720 = vpop.f32.mrb[0].mxu0
        %v721 = vadd.f32 %v624, %v720
        %v722 = vpop.f32.mrb[0].mxu0
        %v723 = vadd.f32 %v626, %v722
        %724 = vdwg.mxu0
        %s725 = scalar_lea.vmem %s1, 384
        %v726 = vld [vmem:[%s725] sm:$0xff]
        %v727 = vld [vmem:[%s725 + $0x8] sm:$0xff]
        %v728 = vld [vmem:[%s725 + $0x10] sm:$0xff]
        %v729 = vld [vmem:[%s725 + $0x18] sm:$0xff]
        %v730 = vld [vmem:[%s725 + $0x20] sm:$0xff]
        %v731 = vld [vmem:[%s725 + $0x28] sm:$0xff]
        %v732 = vld [vmem:[%s725 + $0x30] sm:$0xff]
        %v733 = vld [vmem:[%s725 + $0x38] sm:$0xff]
        %v734 = vld [vmem:[%s725 + $0x40] sm:$0xff]
        %v735 = vld [vmem:[%s725 + $0x48] sm:$0xff]
        %v736 = vld [vmem:[%s725 + $0x50] sm:$0xff]
        %v737 = vld [vmem:[%s725 + $0x58] sm:$0xff]
        %v738 = vld [vmem:[%s725 + $0x60] sm:$0xff]
        %v739 = vld [vmem:[%s725 + $0x68] sm:$0xff]
        %v740 = vld [vmem:[%s725 + $0x70] sm:$0xff]
        %v741 = vld [vmem:[%s725 + $0x78] sm:$0xff]
        %v742 = vld [vmem:[%s725 + $0x80] sm:$0xff]
        %v743 = vld [vmem:[%s725 + $0x88] sm:$0xff]
        %v744 = vld [vmem:[%s725 + $0x90] sm:$0xff]
        %v745 = vld [vmem:[%s725 + $0x98] sm:$0xff]
        %v746 = vld [vmem:[%s725 + $0xa0] sm:$0xff]
        %v747 = vld [vmem:[%s725 + $0xa8] sm:$0xff]
        %v748 = vld [vmem:[%s725 + $0xb0] sm:$0xff]
        %v749 = vld [vmem:[%s725 + $0xb8] sm:$0xff]
        %vm750 = vcmask 1045504
        %v751 = vrot.slane %v465, 2
        %v752 = vrot.slane %v466, 2
        %v753 = vsel %vm750, %v751, %v752
        %v754 = vrot.slane %v467, 2
        %v755 = vsel %vm750, %v752, %v754
        %v756 = vrot.slane %v468, 2
        %v757 = vsel %vm750, %v754, %v756
        %v758 = vsel %vm530, %v753, 0
        %v760 = vsel %vm530, %v755, 0
        %v762 = vsel %vm530, %v757, 0
        %v764 = vsel %vm530, %v756, 0
        %766 = vmatprep.subr.mxu0 %v727
        %767 = vmatpush1.msra.mxu0 %v726
        %768 = vmatprep.subr.mxu0 %v729
        %769 = vmatpush1.msra.mxu0 %v728
        %770 = vmatprep.subr.mxu0 %v731
        %771 = vmatpush1.msra.mxu0 %v730
        %772 = vmatprep.subr.mxu0 %v733
        %773 = vmatpush1.msra.mxu0 %v732
        %774 = vmatprep.subr.mxu0 %v735
        %775 = vmatpush1.msra.mxu0 %v734
        %776 = vmatprep.subr.mxu0 %v737
        %777 = vmatpush1.msra.mxu0 %v736
        %778 = vmatprep.subr.mxu0 %v739
        %779 = vmatpush1.msra.mxu0 %v738
        %780 = vmatprep.subr.mxu0 %v741
        %781 = vmatpush1.msra.mxu0 %v740
        %782 = vmatprep.subr.mxu0 %v743
        %783 = vmatpush1.msra.mxu0 %v742
        %784 = vmatprep.subr.mxu0 %v745
        %785 = vmatpush1.msra.mxu0 %v744
        %786 = vmatprep.subr.mxu0 %v747
        %787 = vmatpush1.msra.mxu0 %v746
        %788 = vmatprep.subr.mxu0 %v749
        %789 = vmatpush1.msra.mxu0 %v748
        %790 = vmatprep.subr.mxu0 0.0
        %791 = vmatpush1.msra.mxu0 0.0
        %792 = vmatprep.subr.mxu0 0.0
        %793 = vmatpush1.msra.mxu0 0.0
        %794 = vmatprep.subr.mxu0 0.0
        %795 = vmatpush1.msra.mxu0 0.0
        %796 = vmatprep.subr.mxu0 0.0
        %797 = vmatpush1.msra.mxu0 0.0
        %798 = vmatprep.subr.mxu0 0.0
        %799 = vmatpush1.msra.mxu0 0.0
        %800 = vmatprep.subr.mxu0 0.0
        %801 = vmatpush1.msra.mxu0 0.0
        %802 = vmatprep.subr.mxu0 0.0
        %803 = vmatpush1.msra.mxu0 0.0
        %804 = vmatprep.subr.mxu0 0.0
        %805 = vmatpush1.msra.mxu0 0.0
        %806 = vmatprep.subr.mxu0 0.0
        %807 = vmatpush1.msra.mxu0 0.0
        %808 = vmatprep.subr.mxu0 0.0
        %809 = vmatpush1.msra.mxu0 0.0
        %810 = vmatprep.subr.mxu0 0.0
        %811 = vmatpush1.msra.mxu0 0.0
        %812 = vmatprep.subr.mxu0 0.0
        %813 = vmatpush1.msra.mxu0 0.0
        %814 = vmatprep.subr.mxu0 0.0
        %815 = vmatpush1.msra.mxu0 0.0
        %816 = vmatprep.subr.mxu0 0.0
        %817 = vmatpush1.msra.mxu0 0.0
        %818 = vmatprep.subr.mxu0 0.0
        %819 = vmatpush1.msra.mxu0 0.0
        %820 = vmatprep.subr.mxu0 0.0
        %821 = vmatpush1.msra.mxu0 0.0
        %822 = vmatprep.subr.mxu0 0.0
        %823 = vmatpush1.msra.mxu0 0.0
        %824 = vmatprep.subr.mxu0 0.0
        %825 = vmatpush1.msra.mxu0 0.0
        %826 = vmatprep.subr.mxu0 0.0
        %827 = vmatpush1.msra.mxu0 0.0
        %828 = vmatprep.subr.mxu0 0.0
        %829 = vmatpush1.msra.mxu0 0.0
        %830 = vmatprep.mubr.f32.mxu0 0.0
        %831 = vmatmul.mubr.f32.gmra.mrb[0].mxu0 %v758
        %v832 = vpop.f32.mrb[0].mxu0
        %v833 = vadd.f32 0.0, %v832
        %v834 = vpop.f32.mrb[0].mxu0
        %v835 = vadd.f32 0.0, %v834
        %836 = vmatprep.mubr.f32.mxu0 0.0
        %837 = vmatmul.mubr.f32.gmra.mrb[0].mxu0 %v760
        %v838 = vpop.f32.mrb[0].mxu0
        %v839 = vadd.f32 0.0, %v838
        %v840 = vpop.f32.mrb[0].mxu0
        %v841 = vadd.f32 0.0, %v840
        %842 = vmatprep.mubr.f32.mxu0 0.0
        %843 = vmatmul.mubr.f32.gmra.mrb[0].mxu0 %v762
        %v844 = vpop.f32.mrb[0].mxu0
        %v845 = vadd.f32 0.0, %v844
        %v846 = vpop.f32.mrb[0].mxu0
        %v847 = vadd.f32 0.0, %v846
        %848 = vmatprep.mubr.f32.mxu0 0.0
        %849 = vmatmul.mubr.f32.gmra.mrb[0].mxu0 %v764
        %v850 = vpop.f32.mrb[0].mxu0
        %v851 = vadd.f32 0.0, %v850
        %v852 = vpop.f32.mrb[0].mxu0
        %v853 = vadd.f32 0.0, %v852
        %854 = vdwg.mxu0
        %v855 = vadd.f32 %v703, %v833
        %v856 = vadd.f32 %v705, %v835
        %v857 = vadd.f32 %v709, %v839
        %v858 = vadd.f32 %v711, %v841
        %v859 = vadd.f32 %v715, %v845
        %v860 = vadd.f32 %v717, %v847
        %v861 = vadd.f32 %v721, %v851
        %v862 = vadd.f32 %v723, %v853
        %s863 = scalar_lea.vmem %s1, 576
        %v864 = vld [vmem:[%s863] sm:$0xff]
        %v865 = vld [vmem:[%s863 + $0x8] sm:$0xff]
        %v866 = vld [vmem:[%s863 + $0x10] sm:$0xff]
        %v867 = vld [vmem:[%s863 + $0x18] sm:$0xff]
        %v868 = vld [vmem:[%s863 + $0x20] sm:$0xff]
        %v869 = vld [vmem:[%s863 + $0x28] sm:$0xff]
        %v870 = vld [vmem:[%s863 + $0x30] sm:$0xff]
        %v871 = vld [vmem:[%s863 + $0x38] sm:$0xff]
        %v872 = vld [vmem:[%s863 + $0x40] sm:$0xff]
        %v873 = vld [vmem:[%s863 + $0x48] sm:$0xff]
        %v874 = vld [vmem:[%s863 + $0x50] sm:$0xff]
        %v875 = vld [vmem:[%s863 + $0x58] sm:$0xff]
        %v876 = vld [vmem:[%s863 + $0x60] sm:$0xff]
        %v877 = vld [vmem:[%s863 + $0x68] sm:$0xff]
        %v878 = vld [vmem:[%s863 + $0x70] sm:$0xff]
        %v879 = vld [vmem:[%s863 + $0x78] sm:$0xff]
        %v880 = vld [vmem:[%s863 + $0x80] sm:$0xff]
        %v881 = vld [vmem:[%s863 + $0x88] sm:$0xff]
        %v882 = vld [vmem:[%s863 + $0x90] sm:$0xff]
        %v883 = vld [vmem:[%s863 + $0x98] sm:$0xff]
        %v884 = vld [vmem:[%s863 + $0xa0] sm:$0xff]
        %v885 = vld [vmem:[%s863 + $0xa8] sm:$0xff]
        %v886 = vld [vmem:[%s863 + $0xb0] sm:$0xff]
        %v887 = vld [vmem:[%s863 + $0xb8] sm:$0xff]
        %vm888 = vcmask 1044480
        %v889 = vrot.slane %v465, 3
        %v890 = vrot.slane %v466, 3
        %v891 = vsel %vm888, %v889, %v890
        %v892 = vrot.slane %v467, 3
        %v893 = vsel %vm888, %v890, %v892
        %v894 = vrot.slane %v468, 3
        %v895 = vsel %vm888, %v892, %v894
        %v896 = vsel %vm530, %v891, 0
        %v898 = vsel %vm530, %v893, 0
        %v900 = vsel %vm530, %v895, 0
        %v902 = vsel %vm530, %v894, 0
        %904 = vmatprep.subr.mxu0 %v865
        %905 = vmatpush1.msra.mxu0 %v864
        %906 = vmatprep.subr.mxu0 %v867
        %907 = vmatpush1.msra.mxu0 %v866
        %908 = vmatprep.subr.mxu0 %v869
        %909 = vmatpush1.msra.mxu0 %v868
        %910 = vmatprep.subr.mxu0 %v871
        %911 = vmatpush1.msra.mxu0 %v870
        %912 = vmatprep.subr.mxu0 %v873
        %913 = vmatpush1.msra.mxu0 %v872
        %914 = vmatprep.subr.mxu0 %v875
        %915 = vmatpush1.msra.mxu0 %v874
        %916 = vmatprep.subr.mxu0 %v877
        %917 = vmatpush1.msra.mxu0 %v876
        %918 = vmatprep.subr.mxu0 %v879
        %919 = vmatpush1.msra.mxu0 %v878
        %920 = vmatprep.subr.mxu0 %v881
        %921 = vmatpush1.msra.mxu0 %v880
        %922 = vmatprep.subr.mxu0 %v883
        %923 = vmatpush1.msra.mxu0 %v882
        %924 = vmatprep.subr.mxu0 %v885
        %925 = vmatpush1.msra.mxu0 %v884
        %926 = vmatprep.subr.mxu0 %v887
        %927 = vmatpush1.msra.mxu0 %v886
        %928 = vmatprep.subr.mxu0 0.0
        %929 = vmatpush1.msra.mxu0 0.0
        %930 = vmatprep.subr.mxu0 0.0
        %931 = vmatpush1.msra.mxu0 0.0
        %932 = vmatprep.subr.mxu0 0.0
        %933 = vmatpush1.msra.mxu0 0.0
        %934 = vmatprep.subr.mxu0 0.0
        %935 = vmatpush1.msra.mxu0 0.0
        %936 = vmatprep.subr.mxu0 0.0
        %937 = vmatpush1.msra.mxu0 0.0
        %938 = vmatprep.subr.mxu0 0.0
        %939 = vmatpush1.msra.mxu0 0.0
        %940 = vmatprep.subr.mxu0 0.0
        %941 = vmatpush1.msra.mxu0 0.0
        %942 = vmatprep.subr.mxu0 0.0
        %943 = vmatpush1.msra.mxu0 0.0
        %944 = vmatprep.subr.mxu0 0.0
        %945 = vmatpush1.msra.mxu0 0.0
        %946 = vmatprep.subr.mxu0 0.0
        %947 = vmatpush1.msra.mxu0 0.0
        %948 = vmatprep.subr.mxu0 0.0
        %949 = vmatpush1.msra.mxu0 0.0
        %950 = vmatprep.subr.mxu0 0.0
        %951 = vmatpush1.msra.mxu0 0.0
        %952 = vmatprep.subr.mxu0 0.0
        %953 = vmatpush1.msra.mxu0 0.0
        %954 = vmatprep.subr.mxu0 0.0
        %955 = vmatpush1.msra.mxu0 0.0
        %956 = vmatprep.subr.mxu0 0.0
        %957 = vmatpush1.msra.mxu0 0.0
        %958 = vmatprep.subr.mxu0 0.0
        %959 = vmatpush1.msra.mxu0 0.0
        %960 = vmatprep.subr.mxu0 0.0
        %961 = vmatpush1.msra.mxu0 0.0
        %962 = vmatprep.subr.mxu0 0.0
        %963 = vmatpush1.msra.mxu0 0.0
        %964 = vmatprep.subr.mxu0 0.0
        %965 = vmatpush1.msra.mxu0 0.0
        %966 = vmatprep.subr.mxu0 0.0
        %967 = vmatpush1.msra.mxu0 0.0
        %968 = vmatprep.mubr.f32.mxu0 0.0
        %969 = vmatmul.mubr.f32.gmra.mrb[0].mxu0 %v896
        %v970 = vpop.f32.mrb[0].mxu0
        %v971 = vadd.f32 0.0, %v970
        %v972 = vpop.f32.mrb[0].mxu0
        %v973 = vadd.f32 0.0, %v972
        %974 = vmatprep.mubr.f32.mxu0 0.0
        %975 = vmatmul.mubr.f32.gmra.mrb[0].mxu0 %v898
        %v976 = vpop.f32.mrb[0].mxu0
        %v977 = vadd.f32 0.0, %v976
        %v978 = vpop.f32.mrb[0].mxu0
        %v979 = vadd.f32 0.0, %v978
        %980 = vmatprep.mubr.f32.mxu0 0.0
        %981 = vmatmul.mubr.f32.gmra.mrb[0].mxu0 %v900
        %v982 = vpop.f32.mrb[0].mxu0
        %v983 = vadd.f32 0.0, %v982
        %v984 = vpop.f32.mrb[0].mxu0
        %v985 = vadd.f32 0.0, %v984
        %986 = vmatprep.mubr.f32.mxu0 0.0
        %987 = vmatmul.mubr.f32.gmra.mrb[0].mxu0 %v902
        %v988 = vpop.f32.mrb[0].mxu0
        %v989 = vadd.f32 0.0, %v988
        %v990 = vpop.f32.mrb[0].mxu0
        %v991 = vadd.f32 0.0, %v990
        %992 = vdwg.mxu0
        %v993 = vadd.f32 %v855, %v971
        %v994 = vadd.f32 %v856, %v973
        %v995 = vadd.f32 %v857, %v977
        %v996 = vadd.f32 %v858, %v979
        %v997 = vadd.f32 %v859, %v983
        %v998 = vadd.f32 %v860, %v985
        %v999 = vadd.f32 %v861, %v989
        %v1000 = vadd.f32 %v862, %v991
        %s1001 = scalar_lea.vmem %s1, 768
        %v1002 = vld [vmem:[%s1001] sm:$0xff]
        %v1003 = vld [vmem:[%s1001 + $0x8] sm:$0xff]
        %v1004 = vld [vmem:[%s1001 + $0x10] sm:$0xff]
        %v1005 = vld [vmem:[%s1001 + $0x18] sm:$0xff]
        %v1006 = vld [vmem:[%s1001 + $0x20] sm:$0xff]
        %v1007 = vld [vmem:[%s1001 + $0x28] sm:$0xff]
        %v1008 = vld [vmem:[%s1001 + $0x30] sm:$0xff]
        %v1009 = vld [vmem:[%s1001 + $0x38] sm:$0xff]
        %v1010 = vld [vmem:[%s1001 + $0x40] sm:$0xff]
        %v1011 = vld [vmem:[%s1001 + $0x48] sm:$0xff]
        %v1012 = vld [vmem:[%s1001 + $0x50] sm:$0xff]
        %v1013 = vld [vmem:[%s1001 + $0x58] sm:$0xff]
        %v1014 = vld [vmem:[%s1001 + $0x60] sm:$0xff]
        %v1015 = vld [vmem:[%s1001 + $0x68] sm:$0xff]
        %v1016 = vld [vmem:[%s1001 + $0x70] sm:$0xff]
        %v1017 = vld [vmem:[%s1001 + $0x78] sm:$0xff]
        %v1018 = vld [vmem:[%s1001 + $0x80] sm:$0xff]
        %v1019 = vld [vmem:[%s1001 + $0x88] sm:$0xff]
        %v1020 = vld [vmem:[%s1001 + $0x90] sm:$0xff]
        %v1021 = vld [vmem:[%s1001 + $0x98] sm:$0xff]
        %v1022 = vld [vmem:[%s1001 + $0xa0] sm:$0xff]
        %v1023 = vld [vmem:[%s1001 + $0xa8] sm:$0xff]
        %v1024 = vld [vmem:[%s1001 + $0xb0] sm:$0xff]
        %v1025 = vld [vmem:[%s1001 + $0xb8] sm:$0xff]
        %vm1026 = vcmask 1043456
        %v1027 = vrot.slane %v465, 4
        %v1028 = vrot.slane %v466, 4
        %v1029 = vsel %vm1026, %v1027, %v1028
        %v1030 = vrot.slane %v467, 4
        %v1031 = vsel %vm1026, %v1028, %v1030
        %v1032 = vrot.slane %v468, 4
        %v1033 = vsel %vm1026, %v1030, %v1032
        %v1034 = vsel %vm530, %v1029, 0
        %v1036 = vsel %vm530, %v1031, 0
        %v1038 = vsel %vm530, %v1033, 0
        %v1040 = vsel %vm530, %v1032, 0
        %1042 = vmatprep.subr.mxu0 %v1003
        %1043 = vmatpush1.msra.mxu0 %v1002
        %1044 = vmatprep.subr.mxu0 %v1005
        %1045 = vmatpush1.msra.mxu0 %v1004
        %1046 = vmatprep.subr.mxu0 %v1007
        %1047 = vmatpush1.msra.mxu0 %v1006
        %1048 = vmatprep.subr.mxu0 %v1009
        %1049 = vmatpush1.msra.mxu0 %v1008
        %1050 = vmatprep.subr.mxu0 %v1011
        %1051 = vmatpush1.msra.mxu0 %v1010
        %1052 = vmatprep.subr.mxu0 %v1013
        %1053 = vmatpush1.msra.mxu0 %v1012
        %1054 = vmatprep.subr.mxu0 %v1015
        %1055 = vmatpush1.msra.mxu0 %v1014
        %1056 = vmatprep.subr.mxu0 %v1017
        %1057 = vmatpush1.msra.mxu0 %v1016
        %1058 = vmatprep.subr.mxu0 %v1019
        %1059 = vmatpush1.msra.mxu0 %v1018
        %1060 = vmatprep.subr.mxu0 %v1021
        %1061 = vmatpush1.msra.mxu0 %v1020
        %1062 = vmatprep.subr.mxu0 %v1023
        %1063 = vmatpush1.msra.mxu0 %v1022
        %1064 = vmatprep.subr.mxu0 %v1025
        %1065 = vmatpush1.msra.mxu0 %v1024
        %1066 = vmatprep.subr.mxu0 0.0
        %1067 = vmatpush1.msra.mxu0 0.0
        %1068 = vmatprep.subr.mxu0 0.0
        %1069 = vmatpush1.msra.mxu0 0.0
        %1070 = vmatprep.subr.mxu0 0.0
        %1071 = vmatpush1.msra.mxu0 0.0
        %1072 = vmatprep.subr.mxu0 0.0
        %1073 = vmatpush1.msra.mxu0 0.0
        %1074 = vmatprep.subr.mxu0 0.0
        %1075 = vmatpush1.msra.mxu0 0.0
        %1076 = vmatprep.subr.mxu0 0.0
        %1077 = vmatpush1.msra.mxu0 0.0
        %1078 = vmatprep.subr.mxu0 0.0
        %1079 = vmatpush1.msra.mxu0 0.0
        %1080 = vmatprep.subr.mxu0 0.0
        %1081 = vmatpush1.msra.mxu0 0.0
        %1082 = vmatprep.subr.mxu0 0.0
        %1083 = vmatpush1.msra.mxu0 0.0
        %1084 = vmatprep.subr.mxu0 0.0
        %1085 = vmatpush1.msra.mxu0 0.0
        %1086 = vmatprep.subr.mxu0 0.0
        %1087 = vmatpush1.msra.mxu0 0.0
        %1088 = vmatprep.subr.mxu0 0.0
        %1089 = vmatpush1.msra.mxu0 0.0
        %1090 = vmatprep.subr.mxu0 0.0
        %1091 = vmatpush1.msra.mxu0 0.0
        %1092 = vmatprep.subr.mxu0 0.0
        %1093 = vmatpush1.msra.mxu0 0.0
        %1094 = vmatprep.subr.mxu0 0.0
        %1095 = vmatpush1.msra.mxu0 0.0
        %1096 = vmatprep.subr.mxu0 0.0
        %1097 = vmatpush1.msra.mxu0 0.0
        %1098 = vmatprep.subr.mxu0 0.0
        %1099 = vmatpush1.msra.mxu0 0.0
        %1100 = vmatprep.subr.mxu0 0.0
        %1101 = vmatpush1.msra.mxu0 0.0
        %1102 = vmatprep.subr.mxu0 0.0
        %1103 = vmatpush1.msra.mxu0 0.0
        %1104 = vmatprep.subr.mxu0 0.0
        %1105 = vmatpush1.msra.mxu0 0.0
        %1106 = vmatprep.mubr.f32.mxu0 0.0
        %1107 = vmatmul.mubr.f32.gmra.mrb[0].mxu0 %v1034
        %v1108 = vpop.f32.mrb[0].mxu0
        %v1109 = vadd.f32 0.0, %v1108
        %v1110 = vpop.f32.mrb[0].mxu0
        %v1111 = vadd.f32 0.0, %v1110
        %1112 = vmatprep.mubr.f32.mxu0 0.0
        %1113 = vmatmul.mubr.f32.gmra.mrb[0].mxu0 %v1036
        %v1114 = vpop.f32.mrb[0].mxu0
        %v1115 = vadd.f32 0.0, %v1114
        %v1116 = vpop.f32.mrb[0].mxu0
        %v1117 = vadd.f32 0.0, %v1116
        %1118 = vmatprep.mubr.f32.mxu0 0.0
        %1119 = vmatmul.mubr.f32.gmra.mrb[0].mxu0 %v1038
        %v1120 = vpop.f32.mrb[0].mxu0
        %v1121 = vadd.f32 0.0, %v1120
        %v1122 = vpop.f32.mrb[0].mxu0
        %v1123 = vadd.f32 0.0, %v1122
        %1124 = vmatprep.mubr.f32.mxu0 0.0
        %1125 = vmatmul.mubr.f32.gmra.mrb[0].mxu0 %v1040
        %v1126 = vpop.f32.mrb[0].mxu0
        %v1127 = vadd.f32 0.0, %v1126
        %v1128 = vpop.f32.mrb[0].mxu0
        %v1129 = vadd.f32 0.0, %v1128
        %1130 = vdwg.mxu0
        %v1131 = vadd.f32 %v993, %v1109
        %v1132 = vadd.f32 %v994, %v1111
        %v1133 = vadd.f32 %v995, %v1115
        %v1134 = vadd.f32 %v996, %v1117
        %v1135 = vadd.f32 %v997, %v1121
        %v1136 = vadd.f32 %v998, %v1123
        %v1137 = vadd.f32 %v999, %v1127
        %v1138 = vadd.f32 %v1000, %v1129
        %v1139 = vld [vmem:[%s2] sm:$0x3]
        %v1141 = vlaneseq
        %v1142 = vshrl.u32 %v1141, 7
        %v1143 = vsub.s32 0, %v1142
        %v1144 = vrot.slane %v1139, %v1143
        %v1145 = vlaneseq
        %v1146 = vshrl.u32 %v1145, 7
        %v1147 = vsub.s32 1, %v1146
        %v1148 = vrot.slane %v1139, %v1147
        %v1151 = vadd.f32 %v1131, %v1144
        %v1152 = vadd.f32 %v1132, %v1148
        %v1153 = vadd.f32 %v1133, %v1144
        %v1154 = vadd.f32 %v1134, %v1148
        %v1155 = vadd.f32 %v1135, %v1144
        %v1156 = vadd.f32 %v1136, %v1148
        %v1157 = vadd.f32 %v1137, %v1144
        %v1158 = vadd.f32 %v1138, %v1148
        %v1159 = vmax.f32 %v1151, 0.0
        %v1160 = vmax.f32 %v1152, 0.0
        %v1161 = vmax.f32 %v1153, 0.0
        %v1162 = vmax.f32 %v1154, 0.0
        %v1163 = vmax.f32 %v1155, 0.0
        %v1164 = vmax.f32 %v1156, 0.0
        %v1165 = vmax.f32 %v1157, 0.0
        %v1166 = vmax.f32 %v1158, 0.0
        %v1167 = vld [vmem:[%s3] sm:$0xff]
        %v1168 = vld [vmem:[%s3 + $0x8] sm:$0x3]
        %vm1169 = vcmask 228352
        %v1171 = vsel %vm1169, %v1167, 0
        %v1174 = vsel %vm1169, %v1168, 0
        %v1177 = vsel %vm1026, %v1165, 0
        %v1180 = vsel %vm1026, %v1166, 0
        %1182 = vmatprep.subr.mxu0 %v1160
        %1183 = vmatpush1.msra.mxu0 %v1159
        %1184 = vmatprep.subr.mxu0 %v1162
        %1185 = vmatpush1.msra.mxu0 %v1161
        %1186 = vmatprep.subr.mxu0 %v1164
        %1187 = vmatpush1.msra.mxu0 %v1163
        %1188 = vmatprep.subr.mxu0 %v1180
        %1189 = vmatpush1.msra.mxu0 %v1177
        %1190 = vmatprep.subr.mxu0 0.0
        %1191 = vmatpush1.msra.mxu0 0.0
        %1192 = vmatprep.subr.mxu0 0.0
        %1193 = vmatpush1.msra.mxu0 0.0
        %1194 = vmatprep.subr.mxu0 0.0
        %1195 = vmatpush1.msra.mxu0 0.0
        %1196 = vmatprep.subr.mxu0 0.0
        %1197 = vmatpush1.msra.mxu0 0.0
        %1198 = vmatprep.subr.mxu0 0.0
        %1199 = vmatpush1.msra.mxu0 0.0
        %1200 = vmatprep.subr.mxu0 0.0
        %1201 = vmatpush1.msra.mxu0 0.0
        %1202 = vmatprep.subr.mxu0 0.0
        %1203 = vmatpush1.msra.mxu0 0.0
        %1204 = vmatprep.subr.mxu0 0.0
        %1205 = vmatpush1.msra.mxu0 0.0
        %1206 = vmatprep.subr.mxu0 0.0
        %1207 = vmatpush1.msra.mxu0 0.0
        %1208 = vmatprep.subr.mxu0 0.0
        %1209 = vmatpush1.msra.mxu0 0.0
        %1210 = vmatprep.subr.mxu0 0.0
        %1211 = vmatpush1.msra.mxu0 0.0
        %1212 = vmatprep.subr.mxu0 0.0
        %1213 = vmatpush1.msra.mxu0 0.0
        %1214 = vmatprep.subr.mxu0 0.0
        %1215 = vmatpush1.msra.mxu0 0.0
        %1216 = vmatprep.subr.mxu0 0.0
        %1217 = vmatpush1.msra.mxu0 0.0
        %1218 = vmatprep.subr.mxu0 0.0
        %1219 = vmatpush1.msra.mxu0 0.0
        %1220 = vmatprep.subr.mxu0 0.0
        %1221 = vmatpush1.msra.mxu0 0.0
        %1222 = vmatprep.subr.mxu0 0.0
        %1223 = vmatpush1.msra.mxu0 0.0
        %1224 = vmatprep.subr.mxu0 0.0
        %1225 = vmatpush1.msra.mxu0 0.0
        %1226 = vmatprep.subr.mxu0 0.0
        %1227 = vmatpush1.msra.mxu0 0.0
        %1228 = vmatprep.subr.mxu0 0.0
        %1229 = vmatpush1.msra.mxu0 0.0
        %1230 = vmatprep.subr.mxu0 0.0
        %1231 = vmatpush1.msra.mxu0 0.0
        %1232 = vmatprep.subr.mxu0 0.0
        %1233 = vmatpush1.msra.mxu0 0.0
        %1234 = vmatprep.subr.mxu0 0.0
        %1235 = vmatpush1.msra.mxu0 0.0
        %1236 = vmatprep.subr.mxu0 0.0
        %1237 = vmatpush1.msra.mxu0 0.0
        %1238 = vmatprep.subr.mxu0 0.0
        %1239 = vmatpush1.msra.mxu0 0.0
        %1240 = vmatprep.subr.mxu0 0.0
        %1241 = vmatpush1.msra.mxu0 0.0
        %1242 = vmatprep.subr.mxu0 0.0
        %1243 = vmatpush1.msra.mxu0 0.0
        %1244 = vmatprep.subr.mxu0 0.0
        %1245 = vmatpush1.msra.mxu0 0.0
        %1246 = vmatprep.mubr.f32.mxu0 0.0
        %1247 = vmatmul.mubr.f32.gmra.mrb[0].mxu0 %v1171
        %v1248 = vpop.f32.mrb[0].mxu0
        %v1249 = vadd.f32 0.0, %v1248
        %v1250 = vpop.f32.mrb[0].mxu0
        %v1251 = vadd.f32 0.0, %v1250
        %1252 = vmatprep.mubr.f32.mxu0 0.0
        %1253 = vmatmul.mubr.f32.gmra.mrb[0].mxu0 %v1174
        %v1254 = vpop.f32.mrb[0].mxu0
        %v1255 = vadd.f32 0.0, %v1254
        %v1256 = vpop.f32.mrb[0].mxu0
        %v1257 = vadd.f32 0.0, %v1256
        %1258 = vdwg.mxu0
        %v1259 = vld [vmem:[%s4] sm:$0xff]
        %v1260 = vld [vmem:[%s4 + $0x8] sm:$0xff]
        %v1261 = vld [vmem:[%s4 + $0x10] sm:$0xff]
        %v1262 = vld [vmem:[%s4 + $0x18] sm:$0xff]
        %v1263 = vld [vmem:[%s4 + $0x20] sm:$0xff]
        %v1264 = vld [vmem:[%s4 + $0x28] sm:$0xff]
        %v1265 = vld [vmem:[%s4 + $0x30] sm:$0xff]
        %v1266 = vld [vmem:[%s4 + $0x38] sm:$0xff]
        %v1267 = vld [vmem:[%s4 + $0x40] sm:$0xff]
        %v1268 = vld [vmem:[%s4 + $0x48] sm:$0xff]
        %v1269 = vld [vmem:[%s4 + $0x50] sm:$0xff]
        %v1270 = vld [vmem:[%s4 + $0x58] sm:$0xff]
        %v1271 = vld [vmem:[%s4 + $0x60] sm:$0xff]
        %v1272 = vld [vmem:[%s4 + $0x68] sm:$0xff]
        %v1273 = vld [vmem:[%s4 + $0x70] sm:$0xff]
        %v1274 = vld [vmem:[%s4 + $0x78] sm:$0xff]
        %v1275 = vld [vmem:[%s4 + $0x80] sm:$0xff]
        %v1276 = vld [vmem:[%s4 + $0x88] sm:$0xff]
        %v1277 = vld [vmem:[%s4 + $0x90] sm:$0xff]
        %v1278 = vld [vmem:[%s4 + $0x98] sm:$0xff]
        %v1279 = vld [vmem:[%s4 + $0xa0] sm:$0xff]
        %v1280 = vld [vmem:[%s4 + $0xa8] sm:$0xff]
        %v1281 = vld [vmem:[%s4 + $0xb0] sm:$0xff]
        %v1282 = vld [vmem:[%s4 + $0xb8] sm:$0xff]
        %v1283 = vld [vmem:[%s4 + $0xc0] sm:$0xff]
        %v1284 = vld [vmem:[%s4 + $0xc8] sm:$0xff]
        %v1285 = vld [vmem:[%s4 + $0xd0] sm:$0xff]
        %v1286 = vld [vmem:[%s4 + $0xd8] sm:$0xff]
        %v1287 = vld [vmem:[%s4 + $0xe0] sm:$0xff]
        %v1288 = vld [vmem:[%s4 + $0xe8] sm:$0xff]
        %v1289 = vld [vmem:[%s4 + $0xf0] sm:$0xff]
        %v1290 = vld [vmem:[%s4 + $0xf8] sm:$0xff]
        %v1291 = vld [vmem:[%s4 + $0x100] sm:$0xff]
        %v1292 = vld [vmem:[%s4 + $0x108] sm:$0xff]
        %v1293 = vld [vmem:[%s4 + $0x110] sm:$0xff]
        %v1294 = vld [vmem:[%s4 + $0x118] sm:$0xff]
        %v1295 = vld [vmem:[%s4 + $0x120] sm:$0xff]
        %v1296 = vld [vmem:[%s4 + $0x128] sm:$0xff]
        %v1297 = vld [vmem:[%s4 + $0x130] sm:$0xff]
        %v1298 = vld [vmem:[%s4 + $0x138] sm:$0xff]
        %v1299 = vld [vmem:[%s4 + $0x140] sm:$0xff]
        %v1300 = vld [vmem:[%s4 + $0x148] sm:$0xff]
        %s1301 = scalar_lea.vmem %s3, 16
        %v1302 = vld [vmem:[%s1301] sm:$0xff]
        %v1303 = vld [vmem:[%s1301 + $0x8] sm:$0x3]
        %v1305 = vsel %vm1169, %v1302, 0
        %v1308 = vsel %vm1169, %v1303, 0
        %1310 = vmatprep.subr.mxu0 %v1160
        %1311 = vmatpush1.msra.mxu0 %v1159
        %1312 = vmatprep.subr.mxu0 %v1162
        %1313 = vmatpush1.msra.mxu0 %v1161
        %1314 = vmatprep.subr.mxu0 %v1164
        %1315 = vmatpush1.msra.mxu0 %v1163
        %1316 = vmatprep.subr.mxu0 %v1180
        %1317 = vmatpush1.msra.mxu0 %v1177
        %1318 = vmatprep.subr.mxu0 0.0
        %1319 = vmatpush1.msra.mxu0 0.0
        %1320 = vmatprep.subr.mxu0 0.0
        %1321 = vmatpush1.msra.mxu0 0.0
        %1322 = vmatprep.subr.mxu0 0.0
        %1323 = vmatpush1.msra.mxu0 0.0
        %1324 = vmatprep.subr.mxu0 0.0
        %1325 = vmatpush1.msra.mxu0 0.0
        %1326 = vmatprep.subr.mxu0 0.0
        %1327 = vmatpush1.msra.mxu0 0.0
        %1328 = vmatprep.subr.mxu0 0.0
        %1329 = vmatpush1.msra.mxu0 0.0
        %1330 = vmatprep.subr.mxu0 0.0
        %1331 = vmatpush1.msra.mxu0 0.0
        %1332 = vmatprep.subr.mxu0 0.0
        %1333 = vmatpush1.msra.mxu0 0.0
        %1334 = vmatprep.subr.mxu0 0.0
        %1335 = vmatpush1.msra.mxu0 0.0
        %1336 = vmatprep.subr.mxu0 0.0
        %1337 = vmatpush1.msra.mxu0 0.0
        %1338 = vmatprep.subr.mxu0 0.0
        %1339 = vmatpush1.msra.mxu0 0.0
        %1340 = vmatprep.subr.mxu0 0.0
        %1341 = vmatpush1.msra.mxu0 0.0
        %1342 = vmatprep.subr.mxu0 0.0
        %1343 = vmatpush1.msra.mxu0 0.0
        %1344 = vmatprep.subr.mxu0 0.0
        %1345 = vmatpush1.msra.mxu0 0.0
        %1346 = vmatprep.subr.mxu0 0.0
        %1347 = vmatpush1.msra.mxu0 0.0
        %1348 = vmatprep.subr.mxu0 0.0
        %1349 = vmatpush1.msra.mxu0 0.0
        %1350 = vmatprep.subr.mxu0 0.0
        %1351 = vmatpush1.msra.mxu0 0.0
        %1352 = vmatprep.subr.mxu0 0.0
        %1353 = vmatpush1.msra.mxu0 0.0
        %1354 = vmatprep.subr.mxu0 0.0
        %1355 = vmatpush1.msra.mxu0 0.0
        %1356 = vmatprep.subr.mxu0 0.0
        %1357 = vmatpush1.msra.mxu0 0.0
        %1358 = vmatprep.subr.mxu0 0.0
        %1359 = vmatpush1.msra.mxu0 0.0
        %1360 = vmatprep.subr.mxu0 0.0
        %1361 = vmatpush1.msra.mxu0 0.0
        %1362 = vmatprep.subr.mxu0 0.0
        %1363 = vmatpush1.msra.mxu0 0.0
        %1364 = vmatprep.subr.mxu0 0.0
        %1365 = vmatpush1.msra.mxu0 0.0
        %1366 = vmatprep.subr.mxu0 0.0
        %1367 = vmatpush1.msra.mxu0 0.0
        %1368 = vmatprep.subr.mxu0 0.0
        %1369 = vmatpush1.msra.mxu0 0.0
        %1370 = vmatprep.subr.mxu0 0.0
        %1371 = vmatpush1.msra.mxu0 0.0
        %1372 = vmatprep.subr.mxu0 0.0
        %1373 = vmatpush1.msra.mxu0 0.0
        %1374 = vmatprep.mubr.f32.mxu0 0.0
        %1375 = vmatmul.mubr.f32.gmra.mrb[0].mxu0 %v1305
        %v1376 = vpop.f32.mrb[0].mxu0
        %v1377 = vadd.f32 0.0, %v1376
        %v1378 = vpop.f32.mrb[0].mxu0
        %v1379 = vadd.f32 0.0, %v1378
        %1380 = vmatprep.mubr.f32.mxu0 0.0
        %1381 = vmatmul.mubr.f32.gmra.mrb[0].mxu0 %v1308
        %v1382 = vpop.f32.mrb[0].mxu0
        %v1383 = vadd.f32 0.0, %v1382
        %v1384 = vpop.f32.mrb[0].mxu0
        %v1385 = vadd.f32 0.0, %v1384
        %1386 = vdwg.mxu0
        %s1387 = scalar_lea.vmem %s4, 336
        %v1388 = vld [vmem:[%s1387] sm:$0xff]
        %v1389 = vld [vmem:[%s1387 + $0x8] sm:$0xff]
        %v1390 = vld [vmem:[%s1387 + $0x10] sm:$0xff]
        %v1391 = vld [vmem:[%s1387 + $0x18] sm:$0xff]
        %v1392 = vld [vmem:[%s1387 + $0x20] sm:$0xff]
        %v1393 = vld [vmem:[%s1387 + $0x28] sm:$0xff]
        %v1394 = vld [vmem:[%s1387 + $0x30] sm:$0xff]
        %v1395 = vld [vmem:[%s1387 + $0x38] sm:$0xff]
        %v1396 = vld [vmem:[%s1387 + $0x40] sm:$0xff]
        %v1397 = vld [vmem:[%s1387 + $0x48] sm:$0xff]
        %v1398 = vld [vmem:[%s1387 + $0x50] sm:$0xff]
        %v1399 = vld [vmem:[%s1387 + $0x58] sm:$0xff]
        %v1400 = vld [vmem:[%s1387 + $0x60] sm:$0xff]
        %v1401 = vld [vmem:[%s1387 + $0x68] sm:$0xff]
        %v1402 = vld [vmem:[%s1387 + $0x70] sm:$0xff]
        %v1403 = vld [vmem:[%s1387 + $0x78] sm:$0xff]
        %v1404 = vld [vmem:[%s1387 + $0x80] sm:$0xff]
        %v1405 = vld [vmem:[%s1387 + $0x88] sm:$0xff]
        %v1406 = vld [vmem:[%s1387 + $0x90] sm:$0xff]
        %v1407 = vld [vmem:[%s1387 + $0x98] sm:$0xff]
        %v1408 = vld [vmem:[%s1387 + $0xa0] sm:$0xff]
        %v1409 = vld [vmem:[%s1387 + $0xa8] sm:$0xff]
        %v1410 = vld [vmem:[%s1387 + $0xb0] sm:$0xff]
        %v1411 = vld [vmem:[%s1387 + $0xb8] sm:$0xff]
        %v1412 = vld [vmem:[%s1387 + $0xc0] sm:$0xff]
        %v1413 = vld [vmem:[%s1387 + $0xc8] sm:$0xff]
        %v1414 = vld [vmem:[%s1387 + $0xd0] sm:$0xff]
        %v1415 = vld [vmem:[%s1387 + $0xd8] sm:$0xff]
        %v1416 = vld [vmem:[%s1387 + $0xe0] sm:$0xff]
        %v1417 = vld [vmem:[%s1387 + $0xe8] sm:$0xff]
        %v1418 = vld [vmem:[%s1387 + $0xf0] sm:$0xff]
        %v1419 = vld [vmem:[%s1387 + $0xf8] sm:$0xff]
        %v1420 = vld [vmem:[%s1387 + $0x100] sm:$0xff]
        %v1421 = vld [vmem:[%s1387 + $0x108] sm:$0xff]
        %v1422 = vld [vmem:[%s1387 + $0x110] sm:$0xff]
        %v1423 = vld [vmem:[%s1387 + $0x118] sm:$0xff]
        %v1424 = vld [vmem:[%s1387 + $0x120] sm:$0xff]
        %v1425 = vld [vmem:[%s1387 + $0x128] sm:$0xff]
        %v1426 = vld [vmem:[%s1387 + $0x130] sm:$0xff]
        %v1427 = vld [vmem:[%s1387 + $0x138] sm:$0xff]
        %v1428 = vld [vmem:[%s1387 + $0x140] sm:$0xff]
        %v1429 = vld [vmem:[%s1387 + $0x148] sm:$0xff]
        %vm1430 = vcmask 326656
        %v1432 = vsel %vm1430, %v1379, 0
        %v1435 = vsel %vm1430, %v1385, 0
        %1437 = vmatprep.subr.mxu0 %v1389
        %1438 = vmatpush1.msra.mxu0 %v1388
        %1439 = vmatprep.subr.mxu0 %v1391
        %1440 = vmatpush1.msra.mxu0 %v1390
        %1441 = vmatprep.subr.mxu0 %v1393
        %1442 = vmatpush1.msra.mxu0 %v1392
        %1443 = vmatprep.subr.mxu0 %v1395
        %1444 = vmatpush1.msra.mxu0 %v1394
        %1445 = vmatprep.subr.mxu0 %v1397
        %1446 = vmatpush1.msra.mxu0 %v1396
        %1447 = vmatprep.subr.mxu0 %v1399
        %1448 = vmatpush1.msra.mxu0 %v1398
        %1449 = vmatprep.subr.mxu0 %v1401
        %1450 = vmatpush1.msra.mxu0 %v1400
        %1451 = vmatprep.subr.mxu0 %v1403
        %1452 = vmatpush1.msra.mxu0 %v1402
        %1453 = vmatprep.subr.mxu0 %v1405
        %1454 = vmatpush1.msra.mxu0 %v1404
        %1455 = vmatprep.subr.mxu0 %v1407
        %1456 = vmatpush1.msra.mxu0 %v1406
        %1457 = vmatprep.subr.mxu0 %v1409
        %1458 = vmatpush1.msra.mxu0 %v1408
        %1459 = vmatprep.subr.mxu0 %v1411
        %1460 = vmatpush1.msra.mxu0 %v1410
        %1461 = vmatprep.subr.mxu0 %v1413
        %1462 = vmatpush1.msra.mxu0 %v1412
        %1463 = vmatprep.subr.mxu0 %v1415
        %1464 = vmatpush1.msra.mxu0 %v1414
        %1465 = vmatprep.subr.mxu0 %v1417
        %1466 = vmatpush1.msra.mxu0 %v1416
        %1467 = vmatprep.subr.mxu0 %v1419
        %1468 = vmatpush1.msra.mxu0 %v1418
        %1469 = vmatprep.subr.mxu0 %v1421
        %1470 = vmatpush1.msra.mxu0 %v1420
        %1471 = vmatprep.subr.mxu0 %v1423
        %1472 = vmatpush1.msra.mxu0 %v1422
        %1473 = vmatprep.subr.mxu0 %v1425
        %1474 = vmatpush1.msra.mxu0 %v1424
        %1475 = vmatprep.subr.mxu0 %v1427
        %1476 = vmatpush1.msra.mxu0 %v1426
        %1477 = vmatprep.subr.mxu0 %v1429
        %1478 = vmatpush1.msra.mxu0 %v1428
        %1479 = vmatprep.subr.mxu0 0.0
        %1480 = vmatpush1.msra.mxu0 0.0
        %1481 = vmatprep.subr.mxu0 0.0
        %1482 = vmatpush1.msra.mxu0 0.0
        %1483 = vmatprep.subr.mxu0 0.0
        %1484 = vmatpush1.msra.mxu0 0.0
        %1485 = vmatprep.subr.mxu0 0.0
        %1486 = vmatpush1.msra.mxu0 0.0
        %1487 = vmatprep.subr.mxu0 0.0
        %1488 = vmatpush1.msra.mxu0 0.0
        %1489 = vmatprep.subr.mxu0 0.0
        %1490 = vmatpush1.msra.mxu0 0.0
        %1491 = vmatprep.subr.mxu0 0.0
        %1492 = vmatpush1.msra.mxu0 0.0
        %1493 = vmatprep.subr.mxu0 0.0
        %1494 = vmatpush1.msra.mxu0 0.0
        %1495 = vmatprep.subr.mxu0 0.0
        %1496 = vmatpush1.msra.mxu0 0.0
        %1497 = vmatprep.subr.mxu0 0.0
        %1498 = vmatpush1.msra.mxu0 0.0
        %1499 = vmatprep.subr.mxu0 0.0
        %1500 = vmatpush1.msra.mxu0 0.0
        %1501 = vmatprep.mubr.f32.mxu0 %v1432
        %1502 = vmatmul.mubr.f32.gmra.mrb[0].mxu0 %v1377
        %v1503 = vpop.f32.mrb[0].mxu0
        %v1504 = vadd.f32 0.0, %v1503
        %v1505 = vpop.f32.mrb[0].mxu0
        %v1506 = vadd.f32 0.0, %v1505
        %1507 = vmatprep.mubr.f32.mxu0 %v1435
        %1508 = vmatmul.mubr.f32.gmra.mrb[0].mxu0 %v1383
        %v1509 = vpop.f32.mrb[0].mxu0
        %v1510 = vadd.f32 0.0, %v1509
        %v1511 = vpop.f32.mrb[0].mxu0
        %v1512 = vadd.f32 0.0, %v1511
        %1513 = vdwg.mxu0
        %v1515 = vsel %vm1430, %v1251, 0
        %v1518 = vsel %vm1430, %v1257, 0
        %1520 = vmatprep.subr.mxu0 %v1260
        %1521 = vmatpush1.msra.mxu0 %v1259
        %1522 = vmatprep.subr.mxu0 %v1262
        %1523 = vmatpush1.msra.mxu0 %v1261
        %1524 = vmatprep.subr.mxu0 %v1264
        %1525 = vmatpush1.msra.mxu0 %v1263
        %1526 = vmatprep.subr.mxu0 %v1266
        %1527 = vmatpush1.msra.mxu0 %v1265
        %1528 = vmatprep.subr.mxu0 %v1268
        %1529 = vmatpush1.msra.mxu0 %v1267
        %1530 = vmatprep.subr.mxu0 %v1270
        %1531 = vmatpush1.msra.mxu0 %v1269
        %1532 = vmatprep.subr.mxu0 %v1272
        %1533 = vmatpush1.msra.mxu0 %v1271
        %1534 = vmatprep.subr.mxu0 %v1274
        %1535 = vmatpush1.msra.mxu0 %v1273
        %1536 = vmatprep.subr.mxu0 %v1276
        %1537 = vmatpush1.msra.mxu0 %v1275
        %1538 = vmatprep.subr.mxu0 %v1278
        %1539 = vmatpush1.msra.mxu0 %v1277
        %1540 = vmatprep.subr.mxu0 %v1280
        %1541 = vmatpush1.msra.mxu0 %v1279
        %1542 = vmatprep.subr.mxu0 %v1282
        %1543 = vmatpush1.msra.mxu0 %v1281
        %1544 = vmatprep.subr.mxu0 %v1284
        %1545 = vmatpush1.msra.mxu0 %v1283
        %1546 = vmatprep.subr.mxu0 %v1286
        %1547 = vmatpush1.msra.mxu0 %v1285
        %1548 = vmatprep.subr.mxu0 %v1288
        %1549 = vmatpush1.msra.mxu0 %v1287
        %1550 = vmatprep.subr.mxu0 %v1290
        %1551 = vmatpush1.msra.mxu0 %v1289
        %1552 = vmatprep.subr.mxu0 %v1292
        %1553 = vmatpush1.msra.mxu0 %v1291
        %1554 = vmatprep.subr.mxu0 %v1294
        %1555 = vmatpush1.msra.mxu0 %v1293
        %1556 = vmatprep.subr.mxu0 %v1296
        %1557 = vmatpush1.msra.mxu0 %v1295
        %1558 = vmatprep.subr.mxu0 %v1298
        %1559 = vmatpush1.msra.mxu0 %v1297
        %1560 = vmatprep.subr.mxu0 %v1300
        %1561 = vmatpush1.msra.mxu0 %v1299
        %1562 = vmatprep.subr.mxu0 0.0
        %1563 = vmatpush1.msra.mxu0 0.0
        %1564 = vmatprep.subr.mxu0 0.0
        %1565 = vmatpush1.msra.mxu0 0.0
        %1566 = vmatprep.subr.mxu0 0.0
        %1567 = vmatpush1.msra.mxu0 0.0
        %1568 = vmatprep.subr.mxu0 0.0
        %1569 = vmatpush1.msra.mxu0 0.0
        %1570 = vmatprep.subr.mxu0 0.0
        %1571 = vmatpush1.msra.mxu0 0.0
        %1572 = vmatprep.subr.mxu0 0.0
        %1573 = vmatpush1.msra.mxu0 0.0
        %1574 = vmatprep.subr.mxu0 0.0
        %1575 = vmatpush1.msra.mxu0 0.0
        %1576 = vmatprep.subr.mxu0 0.0
        %1577 = vmatpush1.msra.mxu0 0.0
        %1578 = vmatprep.subr.mxu0 0.0
        %1579 = vmatpush1.msra.mxu0 0.0
        %1580 = vmatprep.subr.mxu0 0.0
        %1581 = vmatpush1.msra.mxu0 0.0
        %1582 = vmatprep.subr.mxu0 0.0
        %1583 = vmatpush1.msra.mxu0 0.0
        %1584 = vmatprep.mubr.f32.mxu0 %v1515
        %1585 = vmatmul.mubr.f32.gmra.mrb[0].mxu0 %v1249
        %v1586 = vpop.f32.mrb[0].mxu0
        %v1587 = vadd.f32 %v1504, %v1586
        %v1588 = vpop.f32.mrb[0].mxu0
        %v1589 = vadd.f32 %v1506, %v1588
        %1590 = vmatprep.mubr.f32.mxu0 %v1518
        %1591 = vmatmul.mubr.f32.gmra.mrb[0].mxu0 %v1255
        %v1592 = vpop.f32.mrb[0].mxu0
        %v1593 = vadd.f32 %v1510, %v1592
        %v1594 = vpop.f32.mrb[0].mxu0
        %v1595 = vadd.f32 %v1512, %v1594
        %1596 = vdwg.mxu0
        %s1597 = scalar_lea.vmem %s3, 32
        %v1598 = vld [vmem:[%s1597] sm:$0xff]
        %v1599 = vld [vmem:[%s1597 + $0x8] sm:$0x3]
        %v1601 = vsel %vm1169, %v1598, 0
        %v1604 = vsel %vm1169, %v1599, 0
        %1606 = vmatprep.subr.mxu0 %v1160
        %1607 = vmatpush1.msra.mxu0 %v1159
        %1608 = vmatprep.subr.mxu0 %v1162
        %1609 = vmatpush1.msra.mxu0 %v1161
        %1610 = vmatprep.subr.mxu0 %v1164
        %1611 = vmatpush1.msra.mxu0 %v1163
        %1612 = vmatprep.subr.mxu0 %v1180
        %1613 = vmatpush1.msra.mxu0 %v1177
        %1614 = vmatprep.subr.mxu0 0.0
        %1615 = vmatpush1.msra.mxu0 0.0
        %1616 = vmatprep.subr.mxu0 0.0
        %1617 = vmatpush1.msra.mxu0 0.0
        %1618 = vmatprep.subr.mxu0 0.0
        %1619 = vmatpush1.msra.mxu0 0.0
        %1620 = vmatprep.subr.mxu0 0.0
        %1621 = vmatpush1.msra.mxu0 0.0
        %1622 = vmatprep.subr.mxu0 0.0
        %1623 = vmatpush1.msra.mxu0 0.0
        %1624 = vmatprep.subr.mxu0 0.0
        %1625 = vmatpush1.msra.mxu0 0.0
        %1626 = vmatprep.subr.mxu0 0.0
        %1627 = vmatpush1.msra.mxu0 0.0
        %1628 = vmatprep.subr.mxu0 0.0
        %1629 = vmatpush1.msra.mxu0 0.0
        %1630 = vmatprep.subr.mxu0 0.0
        %1631 = vmatpush1.msra.mxu0 0.0
        %1632 = vmatprep.subr.mxu0 0.0
        %1633 = vmatpush1.msra.mxu0 0.0
        %1634 = vmatprep.subr.mxu0 0.0
        %1635 = vmatpush1.msra.mxu0 0.0
        %1636 = vmatprep.subr.mxu0 0.0
        %1637 = vmatpush1.msra.mxu0 0.0
        %1638 = vmatprep.subr.mxu0 0.0
        %1639 = vmatpush1.msra.mxu0 0.0
        %1640 = vmatprep.subr.mxu0 0.0
        %1641 = vmatpush1.msra.mxu0 0.0
        %1642 = vmatprep.subr.mxu0 0.0
        %1643 = vmatpush1.msra.mxu0 0.0
        %1644 = vmatprep.subr.mxu0 0.0
        %1645 = vmatpush1.msra.mxu0 0.0
        %1646 = vmatprep.subr.mxu0 0.0
        %1647 = vmatpush1.msra.mxu0 0.0
        %1648 = vmatprep.subr.mxu0 0.0
        %1649 = vmatpush1.msra.mxu0 0.0
        %1650 = vmatprep.subr.mxu0 0.0
        %1651 = vmatpush1.msra.mxu0 0.0
        %1652 = vmatprep.subr.mxu0 0.0
        %1653 = vmatpush1.msra.mxu0 0.0
        %1654 = vmatprep.subr.mxu0 0.0
        %1655 = vmatpush1.msra.mxu0 0.0
        %1656 = vmatprep.subr.mxu0 0.0
        %1657 = vmatpush1.msra.mxu0 0.0
        %1658 = vmatprep.subr.mxu0 0.0
        %1659 = vmatpush1.msra.mxu0 0.0
        %1660 = vmatprep.subr.mxu0 0.0
        %1661 = vmatpush1.msra.mxu0 0.0
        %1662 = vmatprep.subr.mxu0 0.0
        %1663 = vmatpush1.msra.mxu0 0.0
        %1664 = vmatprep.subr.mxu0 0.0
        %1665 = vmatpush1.msra.mxu0 0.0
        %1666 = vmatprep.subr.mxu0 0.0
        %1667 = vmatpush1.msra.mxu0 0.0
        %1668 = vmatprep.subr.mxu0 0.0
        %1669 = vmatpush1.msra.mxu0 0.0
        %1670 = vmatprep.mubr.f32.mxu0 0.0
        %1671 = vmatmul.mubr.f32.gmra.mrb[0].mxu0 %v1601
        %v1672 = vpop.f32.mrb[0].mxu0
        %v1673 = vadd.f32 0.0, %v1672
        %v1674 = vpop.f32.mrb[0].mxu0
        %v1675 = vadd.f32 0.0, %v1674
        %1676 = vmatprep.mubr.f32.mxu0 0.0
        %1677 = vmatmul.mubr.f32.gmra.mrb[0].mxu0 %v1604
        %v1678 = vpop.f32.mrb[0].mxu0
        %v1679 = vadd.f32 0.0, %v1678
        %v1680 = vpop.f32.mrb[0].mxu0
        %v1681 = vadd.f32 0.0, %v1680
        %1682 = vdwg.mxu0
        %s1683 = scalar_lea.vmem %s4, 672
        %v1684 = vld [vmem:[%s1683] sm:$0xff]
        %v1685 = vld [vmem:[%s1683 + $0x8] sm:$0xff]
        %v1686 = vld [vmem:[%s1683 + $0x10] sm:$0xff]
        %v1687 = vld [vmem:[%s1683 + $0x18] sm:$0xff]
        %v1688 = vld [vmem:[%s1683 + $0x20] sm:$0xff]
        %v1689 = vld [vmem:[%s1683 + $0x28] sm:$0xff]
        %v1690 = vld [vmem:[%s1683 + $0x30] sm:$0xff]
        %v1691 = vld [vmem:[%s1683 + $0x38] sm:$0xff]
        %v1692 = vld [vmem:[%s1683 + $0x40] sm:$0xff]
        %v1693 = vld [vmem:[%s1683 + $0x48] sm:$0xff]
        %v1694 = vld [vmem:[%s1683 + $0x50] sm:$0xff]
        %v1695 = vld [vmem:[%s1683 + $0x58] sm:$0xff]
        %v1696 = vld [vmem:[%s1683 + $0x60] sm:$0xff]
        %v1697 = vld [vmem:[%s1683 + $0x68] sm:$0xff]
        %v1698 = vld [vmem:[%s1683 + $0x70] sm:$0xff]
        %v1699 = vld [vmem:[%s1683 + $0x78] sm:$0xff]
        %v1700 = vld [vmem:[%s1683 + $0x80] sm:$0xff]
        %v1701 = vld [vmem:[%s1683 + $0x88] sm:$0xff]
        %v1702 = vld [vmem:[%s1683 + $0x90] sm:$0xff]
        %v1703 = vld [vmem:[%s1683 + $0x98] sm:$0xff]
        %v1704 = vld [vmem:[%s1683 + $0xa0] sm:$0xff]
        %v1705 = vld [vmem:[%s1683 + $0xa8] sm:$0xff]
        %v1706 = vld [vmem:[%s1683 + $0xb0] sm:$0xff]
        %v1707 = vld [vmem:[%s1683 + $0xb8] sm:$0xff]
        %v1708 = vld [vmem:[%s1683 + $0xc0] sm:$0xff]
        %v1709 = vld [vmem:[%s1683 + $0xc8] sm:$0xff]
        %v1710 = vld [vmem:[%s1683 + $0xd0] sm:$0xff]
        %v1711 = vld [vmem:[%s1683 + $0xd8] sm:$0xff]
        %v1712 = vld [vmem:[%s1683 + $0xe0] sm:$0xff]
        %v1713 = vld [vmem:[%s1683 + $0xe8] sm:$0xff]
        %v1714 = vld [vmem:[%s1683 + $0xf0] sm:$0xff]
        %v1715 = vld [vmem:[%s1683 + $0xf8] sm:$0xff]
        %v1716 = vld [vmem:[%s1683 + $0x100] sm:$0xff]
        %v1717 = vld [vmem:[%s1683 + $0x108] sm:$0xff]
        %v1718 = vld [vmem:[%s1683 + $0x110] sm:$0xff]
        %v1719 = vld [vmem:[%s1683 + $0x118] sm:$0xff]
        %v1720 = vld [vmem:[%s1683 + $0x120] sm:$0xff]
        %v1721 = vld [vmem:[%s1683 + $0x128] sm:$0xff]
        %v1722 = vld [vmem:[%s1683 + $0x130] sm:$0xff]
        %v1723 = vld [vmem:[%s1683 + $0x138] sm:$0xff]
        %v1724 = vld [vmem:[%s1683 + $0x140] sm:$0xff]
        %v1725 = vld [vmem:[%s1683 + $0x148] sm:$0xff]
        %v1727 = vsel %vm1430, %v1675, 0
        %v1730 = vsel %vm1430, %v1681, 0
        %1732 = vmatprep.subr.mxu0 %v1685
        %1733 = vmatpush1.msra.mxu0 %v1684
        %1734 = vmatprep.subr.mxu0 %v1687
        %1735 = vmatpush1.msra.mxu0 %v1686
        %1736 = vmatprep.subr.mxu0 %v1689
        %1737 = vmatpush1.msra.mxu0 %v1688
        %1738 = vmatprep.subr.mxu0 %v1691
        %1739 = vmatpush1.msra.mxu0 %v1690
        %1740 = vmatprep.subr.mxu0 %v1693
        %1741 = vmatpush1.msra.mxu0 %v1692
        %1742 = vmatprep.subr.mxu0 %v1695
        %1743 = vmatpush1.msra.mxu0 %v1694
        %1744 = vmatprep.subr.mxu0 %v1697
        %1745 = vmatpush1.msra.mxu0 %v1696
        %1746 = vmatprep.subr.mxu0 %v1699
        %1747 = vmatpush1.msra.mxu0 %v1698
        %1748 = vmatprep.subr.mxu0 %v1701
        %1749 = vmatpush1.msra.mxu0 %v1700
        %1750 = vmatprep.subr.mxu0 %v1703
        %1751 = vmatpush1.msra.mxu0 %v1702
        %1752 = vmatprep.subr.mxu0 %v1705
        %1753 = vmatpush1.msra.mxu0 %v1704
        %1754 = vmatprep.subr.mxu0 %v1707
        %1755 = vmatpush1.msra.mxu0 %v1706
        %1756 = vmatprep.subr.mxu0 %v1709
        %1757 = vmatpush1.msra.mxu0 %v1708
        %1758 = vmatprep.subr.mxu0 %v1711
        %1759 = vmatpush1.msra.mxu0 %v1710
        %1760 = vmatprep.subr.mxu0 %v1713
        %1761 = vmatpush1.msra.mxu0 %v1712
        %1762 = vmatprep.subr.mxu0 %v1715
        %1763 = vmatpush1.msra.mxu0 %v1714
        %1764 = vmatprep.subr.mxu0 %v1717
        %1765 = vmatpush1.msra.mxu0 %v1716
        %1766 = vmatprep.subr.mxu0 %v1719
        %1767 = vmatpush1.msra.mxu0 %v1718
        %1768 = vmatprep.subr.mxu0 %v1721
        %1769 = vmatpush1.msra.mxu0 %v1720
        %1770 = vmatprep.subr.mxu0 %v1723
        %1771 = vmatpush1.msra.mxu0 %v1722
        %1772 = vmatprep.subr.mxu0 %v1725
        %1773 = vmatpush1.msra.mxu0 %v1724
        %1774 = vmatprep.subr.mxu0 0.0
        %1775 = vmatpush1.msra.mxu0 0.0
        %1776 = vmatprep.subr.mxu0 0.0
        %1777 = vmatpush1.msra.mxu0 0.0
        %1778 = vmatprep.subr.mxu0 0.0
        %1779 = vmatpush1.msra.mxu0 0.0
        %1780 = vmatprep.subr.mxu0 0.0
        %1781 = vmatpush1.msra.mxu0 0.0
        %1782 = vmatprep.subr.mxu0 0.0
        %1783 = vmatpush1.msra.mxu0 0.0
        %1784 = vmatprep.subr.mxu0 0.0
        %1785 = vmatpush1.msra.mxu0 0.0
        %1786 = vmatprep.subr.mxu0 0.0
        %1787 = vmatpush1.msra.mxu0 0.0
        %1788 = vmatprep.subr.mxu0 0.0
        %1789 = vmatpush1.msra.mxu0 0.0
        %1790 = vmatprep.subr.mxu0 0.0
        %1791 = vmatpush1.msra.mxu0 0.0
        %1792 = vmatprep.subr.mxu0 0.0
        %1793 = vmatpush1.msra.mxu0 0.0
        %1794 = vmatprep.subr.mxu0 0.0
        %1795 = vmatpush1.msra.mxu0 0.0
        %1796 = vmatprep.mubr.f32.mxu0 %v1727
        %1797 = vmatmul.mubr.f32.gmra.mrb[0].mxu0 %v1673
        %v1798 = vpop.f32.mrb[0].mxu0
        %v1799 = vadd.f32 0.0, %v1798
        %v1800 = vpop.f32.mrb[0].mxu0
        %v1801 = vadd.f32 0.0, %v1800
        %1802 = vmatprep.mubr.f32.mxu0 %v1730
        %1803 = vmatmul.mubr.f32.gmra.mrb[0].mxu0 %v1679
        %v1804 = vpop.f32.mrb[0].mxu0
        %v1805 = vadd.f32 0.0, %v1804
        %v1806 = vpop.f32.mrb[0].mxu0
        %v1807 = vadd.f32 0.0, %v1806
        %1808 = vdwg.mxu0
        %v1809 = vadd.f32 %v1587, %v1799
        %v1810 = vadd.f32 %v1589, %v1801
        %v1811 = vadd.f32 %v1593, %v1805
        %v1812 = vadd.f32 %v1595, %v1807
        %s1813 = scalar_lea.vmem %s3, 48
        %v1814 = vld [vmem:[%s1813] sm:$0xff]
        %v1815 = vld [vmem:[%s1813 + $0x8] sm:$0x3]
        %v1817 = vsel %vm1169, %v1814, 0
        %v1820 = vsel %vm1169, %v1815, 0
        %1822 = vmatprep.subr.mxu0 %v1160
        %1823 = vmatpush1.msra.mxu0 %v1159
        %1824 = vmatprep.subr.mxu0 %v1162
        %1825 = vmatpush1.msra.mxu0 %v1161
        %1826 = vmatprep.subr.mxu0 %v1164
        %1827 = vmatpush1.msra.mxu0 %v1163
        %1828 = vmatprep.subr.mxu0 %v1180
        %1829 = vmatpush1.msra.mxu0 %v1177
        %1830 = vmatprep.subr.mxu0 0.0
        %1831 = vmatpush1.msra.mxu0 0.0
        %1832 = vmatprep.subr.mxu0 0.0
        %1833 = vmatpush1.msra.mxu0 0.0
        %1834 = vmatprep.subr.mxu0 0.0
        %1835 = vmatpush1.msra.mxu0 0.0
        %1836 = vmatprep.subr.mxu0 0.0
        %1837 = vmatpush1.msra.mxu0 0.0
        %1838 = vmatprep.subr.mxu0 0.0
        %1839 = vmatpush1.msra.mxu0 0.0
        %1840 = vmatprep.subr.mxu0 0.0
        %1841 = vmatpush1.msra.mxu0 0.0
        %1842 = vmatprep.subr.mxu0 0.0
        %1843 = vmatpush1.msra.mxu0 0.0
        %1844 = vmatprep.subr.mxu0 0.0
        %1845 = vmatpush1.msra.mxu0 0.0
        %1846 = vmatprep.subr.mxu0 0.0
        %1847 = vmatpush1.msra.mxu0 0.0
        %1848 = vmatprep.subr.mxu0 0.0
        %1849 = vmatpush1.msra.mxu0 0.0
        %1850 = vmatprep.subr.mxu0 0.0
        %1851 = vmatpush1.msra.mxu0 0.0
        %1852 = vmatprep.subr.mxu0 0.0
        %1853 = vmatpush1.msra.mxu0 0.0
        %1854 = vmatprep.subr.mxu0 0.0
        %1855 = vmatpush1.msra.mxu0 0.0
        %1856 = vmatprep.subr.mxu0 0.0
        %1857 = vmatpush1.msra.mxu0 0.0
        %1858 = vmatprep.subr.mxu0 0.0
        %1859 = vmatpush1.msra.mxu0 0.0
        %1860 = vmatprep.subr.mxu0 0.0
        %1861 = vmatpush1.msra.mxu0 0.0
        %1862 = vmatprep.subr.mxu0 0.0
        %1863 = vmatpush1.msra.mxu0 0.0
        %1864 = vmatprep.subr.mxu0 0.0
        %1865 = vmatpush1.msra.mxu0 0.0
        %1866 = vmatprep.subr.mxu0 0.0
        %1867 = vmatpush1.msra.mxu0 0.0
        %1868 = vmatprep.subr.mxu0 0.0
        %1869 = vmatpush1.msra.mxu0 0.0
        %1870 = vmatprep.subr.mxu0 0.0
        %1871 = vmatpush1.msra.mxu0 0.0
        %1872 = vmatprep.subr.mxu0 0.0
        %1873 = vmatpush1.msra.mxu0 0.0
        %1874 = vmatprep.subr.mxu0 0.0
        %1875 = vmatpush1.msra.mxu0 0.0
        %1876 = vmatprep.subr.mxu0 0.0
        %1877 = vmatpush1.msra.mxu0 0.0
        %1878 = vmatprep.subr.mxu0 0.0
        %1879 = vmatpush1.msra.mxu0 0.0
        %1880 = vmatprep.subr.mxu0 0.0
        %1881 = vmatpush1.msra.mxu0 0.0
        %1882 = vmatprep.subr.mxu0 0.0
        %1883 = vmatpush1.msra.mxu0 0.0
        %1884 = vmatprep.subr.mxu0 0.0
        %1885 = vmatpush1.msra.mxu0 0.0
        %1886 = vmatprep.mubr.f32.mxu0 0.0
        %1887 = vmatmul.mubr.f32.gmra.mrb[0].mxu0 %v1817
        %v1888 = vpop.f32.mrb[0].mxu0
        %v1889 = vadd.f32 0.0, %v1888
        %v1890 = vpop.f32.mrb[0].mxu0
        %v1891 = vadd.f32 0.0, %v1890
        %1892 = vmatprep.mubr.f32.mxu0 0.0
        %1893 = vmatmul.mubr.f32.gmra.mrb[0].mxu0 %v1820
        %v1894 = vpop.f32.mrb[0].mxu0
        %v1895 = vadd.f32 0.0, %v1894
        %v1896 = vpop.f32.mrb[0].mxu0
        %v1897 = vadd.f32 0.0, %v1896
        %1898 = vdwg.mxu0
        %s1899 = scalar_lea.vmem %s4, 1008
        %v1900 = vld [vmem:[%s1899] sm:$0xff]
        %v1901 = vld [vmem:[%s1899 + $0x8] sm:$0xff]
        %v1902 = vld [vmem:[%s1899 + $0x10] sm:$0xff]
        %v1903 = vld [vmem:[%s1899 + $0x18] sm:$0xff]
        %v1904 = vld [vmem:[%s1899 + $0x20] sm:$0xff]
        %v1905 = vld [vmem:[%s1899 + $0x28] sm:$0xff]
        %v1906 = vld [vmem:[%s1899 + $0x30] sm:$0xff]
        %v1907 = vld [vmem:[%s1899 + $0x38] sm:$0xff]
        %v1908 = vld [vmem:[%s1899 + $0x40] sm:$0xff]
        %v1909 = vld [vmem:[%s1899 + $0x48] sm:$0xff]
        %v1910 = vld [vmem:[%s1899 + $0x50] sm:$0xff]
        %v1911 = vld [vmem:[%s1899 + $0x58] sm:$0xff]
        %v1912 = vld [vmem:[%s1899 + $0x60] sm:$0xff]
        %v1913 = vld [vmem:[%s1899 + $0x68] sm:$0xff]
        %v1914 = vld [vmem:[%s1899 + $0x70] sm:$0xff]
        %v1915 = vld [vmem:[%s1899 + $0x78] sm:$0xff]
        %v1916 = vld [vmem:[%s1899 + $0x80] sm:$0xff]
        %v1917 = vld [vmem:[%s1899 + $0x88] sm:$0xff]
        %v1918 = vld [vmem:[%s1899 + $0x90] sm:$0xff]
        %v1919 = vld [vmem:[%s1899 + $0x98] sm:$0xff]
        %v1920 = vld [vmem:[%s1899 + $0xa0] sm:$0xff]
        %v1921 = vld [vmem:[%s1899 + $0xa8] sm:$0xff]
        %v1922 = vld [vmem:[%s1899 + $0xb0] sm:$0xff]
        %v1923 = vld [vmem:[%s1899 + $0xb8] sm:$0xff]
        %v1924 = vld [vmem:[%s1899 + $0xc0] sm:$0xff]
        %v1925 = vld [vmem:[%s1899 + $0xc8] sm:$0xff]
        %v1926 = vld [vmem:[%s1899 + $0xd0] sm:$0xff]
        %v1927 = vld [vmem:[%s1899 + $0xd8] sm:$0xff]
        %v1928 = vld [vmem:[%s1899 + $0xe0] sm:$0xff]
        %v1929 = vld [vmem:[%s1899 + $0xe8] sm:$0xff]
        %v1930 = vld [vmem:[%s1899 + $0xf0] sm:$0xff]
        %v1931 = vld [vmem:[%s1899 + $0xf8] sm:$0xff]
        %v1932 = vld [vmem:[%s1899 + $0x100] sm:$0xff]
        %v1933 = vld [vmem:[%s1899 + $0x108] sm:$0xff]
        %v1934 = vld [vmem:[%s1899 + $0x110] sm:$0xff]
        %v1935 = vld [vmem:[%s1899 + $0x118] sm:$0xff]
        %v1936 = vld [vmem:[%s1899 + $0x120] sm:$0xff]
        %v1937 = vld [vmem:[%s1899 + $0x128] sm:$0xff]
        %v1938 = vld [vmem:[%s1899 + $0x130] sm:$0xff]
        %v1939 = vld [vmem:[%s1899 + $0x138] sm:$0xff]
        %v1940 = vld [vmem:[%s1899 + $0x140] sm:$0xff]
        %v1941 = vld [vmem:[%s1899 + $0x148] sm:$0xff]
        %v1943 = vsel %vm1430, %v1891, 0
        %v1946 = vsel %vm1430, %v1897, 0
        %1948 = vmatprep.subr.mxu0 %v1901
        %1949 = vmatpush1.msra.mxu0 %v1900
        %1950 = vmatprep.subr.mxu0 %v1903
        %1951 = vmatpush1.msra.mxu0 %v1902
        %1952 = vmatprep.subr.mxu0 %v1905
        %1953 = vmatpush1.msra.mxu0 %v1904
        %1954 = vmatprep.subr.mxu0 %v1907
        %1955 = vmatpush1.msra.mxu0 %v1906
        %1956 = vmatprep.subr.mxu0 %v1909
        %1957 = vmatpush1.msra.mxu0 %v1908
        %1958 = vmatprep.subr.mxu0 %v1911
        %1959 = vmatpush1.msra.mxu0 %v1910
        %1960 = vmatprep.subr.mxu0 %v1913
        %1961 = vmatpush1.msra.mxu0 %v1912
        %1962 = vmatprep.subr.mxu0 %v1915
        %1963 = vmatpush1.msra.mxu0 %v1914
        %1964 = vmatprep.subr.mxu0 %v1917
        %1965 = vmatpush1.msra.mxu0 %v1916
        %1966 = vmatprep.subr.mxu0 %v1919
        %1967 = vmatpush1.msra.mxu0 %v1918
        %1968 = vmatprep.subr.mxu0 %v1921
        %1969 = vmatpush1.msra.mxu0 %v1920
        %1970 = vmatprep.subr.mxu0 %v1923
        %1971 = vmatpush1.msra.mxu0 %v1922
        %1972 = vmatprep.subr.mxu0 %v1925
        %1973 = vmatpush1.msra.mxu0 %v1924
        %1974 = vmatprep.subr.mxu0 %v1927
        %1975 = vmatpush1.msra.mxu0 %v1926
        %1976 = vmatprep.subr.mxu0 %v1929
        %1977 = vmatpush1.msra.mxu0 %v1928
        %1978 = vmatprep.subr.mxu0 %v1931
        %1979 = vmatpush1.msra.mxu0 %v1930
        %1980 = vmatprep.subr.mxu0 %v1933
        %1981 = vmatpush1.msra.mxu0 %v1932
        %1982 = vmatprep.subr.mxu0 %v1935
        %1983 = vmatpush1.msra.mxu0 %v1934
        %1984 = vmatprep.subr.mxu0 %v1937
        %1985 = vmatpush1.msra.mxu0 %v1936
        %1986 = vmatprep.subr.mxu0 %v1939
        %1987 = vmatpush1.msra.mxu0 %v1938
        %1988 = vmatprep.subr.mxu0 %v1941
        %1989 = vmatpush1.msra.mxu0 %v1940
        %1990 = vmatprep.subr.mxu0 0.0
        %1991 = vmatpush1.msra.mxu0 0.0
        %1992 = vmatprep.subr.mxu0 0.0
        %1993 = vmatpush1.msra.mxu0 0.0
        %1994 = vmatprep.subr.mxu0 0.0
        %1995 = vmatpush1.msra.mxu0 0.0
        %1996 = vmatprep.subr.mxu0 0.0
        %1997 = vmatpush1.msra.mxu0 0.0
        %1998 = vmatprep.subr.mxu0 0.0
        %1999 = vmatpush1.msra.mxu0 0.0
        %2000 = vmatprep.subr.mxu0 0.0
        %2001 = vmatpush1.msra.mxu0 0.0
        %2002 = vmatprep.subr.mxu0 0.0
        %2003 = vmatpush1.msra.mxu0 0.0
        %2004 = vmatprep.subr.mxu0 0.0
        %2005 = vmatpush1.msra.mxu0 0.0
        %2006 = vmatprep.subr.mxu0 0.0
        %2007 = vmatpush1.msra.mxu0 0.0
        %2008 = vmatprep.subr.mxu0 0.0
        %2009 = vmatpush1.msra.mxu0 0.0
        %2010 = vmatprep.subr.mxu0 0.0
        %2011 = vmatpush1.msra.mxu0 0.0
        %2012 = vmatprep.mubr.f32.mxu0 %v1943
        %2013 = vmatmul.mubr.f32.gmra.mrb[0].mxu0 %v1889
        %v2014 = vpop.f32.mrb[0].mxu0
        %v2015 = vadd.f32 0.0, %v2014
        %v2016 = vpop.f32.mrb[0].mxu0
        %v2017 = vadd.f32 0.0, %v2016
        %2018 = vmatprep.mubr.f32.mxu0 %v1946
        %2019 = vmatmul.mubr.f32.gmra.mrb[0].mxu0 %v1895
        %v2020 = vpop.f32.mrb[0].mxu0
        %v2021 = vadd.f32 0.0, %v2020
        %v2022 = vpop.f32.mrb[0].mxu0
        %v2023 = vadd.f32 0.0, %v2022
        %2024 = vdwg.mxu0
        %v2025 = vadd.f32 %v1809, %v2015
        %v2026 = vadd.f32 %v1810, %v2017
        %v2027 = vadd.f32 %v1811, %v2021
        %v2028 = vadd.f32 %v1812, %v2023
        %s2029 = scalar_lea.vmem %s3, 64
        %v2030 = vld [vmem:[%s2029] sm:$0xff]
        %v2031 = vld [vmem:[%s2029 + $0x8] sm:$0x3]
        %v2033 = vsel %vm1169, %v2030, 0
        %v2036 = vsel %vm1169, %v2031, 0
        %2038 = vmatprep.subr.mxu0 %v1160
        %2039 = vmatpush1.msra.mxu0 %v1159
        %2040 = vmatprep.subr.mxu0 %v1162
        %2041 = vmatpush1.msra.mxu0 %v1161
        %2042 = vmatprep.subr.mxu0 %v1164
        %2043 = vmatpush1.msra.mxu0 %v1163
        %2044 = vmatprep.subr.mxu0 %v1180
        %2045 = vmatpush1.msra.mxu0 %v1177
        %2046 = vmatprep.subr.mxu0 0.0
        %2047 = vmatpush1.msra.mxu0 0.0
        %2048 = vmatprep.subr.mxu0 0.0
        %2049 = vmatpush1.msra.mxu0 0.0
        %2050 = vmatprep.subr.mxu0 0.0
        %2051 = vmatpush1.msra.mxu0 0.0
        %2052 = vmatprep.subr.mxu0 0.0
        %2053 = vmatpush1.msra.mxu0 0.0
        %2054 = vmatprep.subr.mxu0 0.0
        %2055 = vmatpush1.msra.mxu0 0.0
        %2056 = vmatprep.subr.mxu0 0.0
        %2057 = vmatpush1.msra.mxu0 0.0
        %2058 = vmatprep.subr.mxu0 0.0
        %2059 = vmatpush1.msra.mxu0 0.0
        %2060 = vmatprep.subr.mxu0 0.0
        %2061 = vmatpush1.msra.mxu0 0.0
        %2062 = vmatprep.subr.mxu0 0.0
        %2063 = vmatpush1.msra.mxu0 0.0
        %2064 = vmatprep.subr.mxu0 0.0
        %2065 = vmatpush1.msra.mxu0 0.0
        %2066 = vmatprep.subr.mxu0 0.0
        %2067 = vmatpush1.msra.mxu0 0.0
        %2068 = vmatprep.subr.mxu0 0.0
        %2069 = vmatpush1.msra.mxu0 0.0
        %2070 = vmatprep.subr.mxu0 0.0
        %2071 = vmatpush1.msra.mxu0 0.0
        %2072 = vmatprep.subr.mxu0 0.0
        %2073 = vmatpush1.msra.mxu0 0.0
        %2074 = vmatprep.subr.mxu0 0.0
        %2075 = vmatpush1.msra.mxu0 0.0
        %2076 = vmatprep.subr.mxu0 0.0
        %2077 = vmatpush1.msra.mxu0 0.0
        %2078 = vmatprep.subr.mxu0 0.0
        %2079 = vmatpush1.msra.mxu0 0.0
        %2080 = vmatprep.subr.mxu0 0.0
        %2081 = vmatpush1.msra.mxu0 0.0
        %2082 = vmatprep.subr.mxu0 0.0
        %2083 = vmatpush1.msra.mxu0 0.0
        %2084 = vmatprep.subr.mxu0 0.0
        %2085 = vmatpush1.msra.mxu0 0.0
        %2086 = vmatprep.subr.mxu0 0.0
        %2087 = vmatpush1.msra.mxu0 0.0
        %2088 = vmatprep.subr.mxu0 0.0
        %2089 = vmatpush1.msra.mxu0 0.0
        %2090 = vmatprep.subr.mxu0 0.0
        %2091 = vmatpush1.msra.mxu0 0.0
        %2092 = vmatprep.subr.mxu0 0.0
        %2093 = vmatpush1.msra.mxu0 0.0
        %2094 = vmatprep.subr.mxu0 0.0
        %2095 = vmatpush1.msra.mxu0 0.0
        %2096 = vmatprep.subr.mxu0 0.0
        %2097 = vmatpush1.msra.mxu0 0.0
        %2098 = vmatprep.subr.mxu0 0.0
        %2099 = vmatpush1.msra.mxu0 0.0
        %2100 = vmatprep.subr.mxu0 0.0
        %2101 = vmatpush1.msra.mxu0 0.0
        %2102 = vmatprep.mubr.f32.mxu0 0.0
        %2103 = vmatmul.mubr.f32.gmra.mrb[0].mxu0 %v2033
        %v2104 = vpop.f32.mrb[0].mxu0
        %v2105 = vadd.f32 0.0, %v2104
        %v2106 = vpop.f32.mrb[0].mxu0
        %v2107 = vadd.f32 0.0, %v2106
        %2108 = vmatprep.mubr.f32.mxu0 0.0
        %2109 = vmatmul.mubr.f32.gmra.mrb[0].mxu0 %v2036
        %v2110 = vpop.f32.mrb[0].mxu0
        %v2111 = vadd.f32 0.0, %v2110
        %v2112 = vpop.f32.mrb[0].mxu0
        %v2113 = vadd.f32 0.0, %v2112
        %2114 = vdwg.mxu0
        %s2115 = scalar_lea.vmem %s4, 1344
        %v2116 = vld [vmem:[%s2115] sm:$0xff]
        %v2117 = vld [vmem:[%s2115 + $0x8] sm:$0xff]
        %v2118 = vld [vmem:[%s2115 + $0x10] sm:$0xff]
        %v2119 = vld [vmem:[%s2115 + $0x18] sm:$0xff]
        %v2120 = vld [vmem:[%s2115 + $0x20] sm:$0xff]
        %v2121 = vld [vmem:[%s2115 + $0x28] sm:$0xff]
        %v2122 = vld [vmem:[%s2115 + $0x30] sm:$0xff]
        %v2123 = vld [vmem:[%s2115 + $0x38] sm:$0xff]
        %v2124 = vld [vmem:[%s2115 + $0x40] sm:$0xff]
        %v2125 = vld [vmem:[%s2115 + $0x48] sm:$0xff]
        %v2126 = vld [vmem:[%s2115 + $0x50] sm:$0xff]
        %v2127 = vld [vmem:[%s2115 + $0x58] sm:$0xff]
        %v2128 = vld [vmem:[%s2115 + $0x60] sm:$0xff]
        %v2129 = vld [vmem:[%s2115 + $0x68] sm:$0xff]
        %v2130 = vld [vmem:[%s2115 + $0x70] sm:$0xff]
        %v2131 = vld [vmem:[%s2115 + $0x78] sm:$0xff]
        %v2132 = vld [vmem:[%s2115 + $0x80] sm:$0xff]
        %v2133 = vld [vmem:[%s2115 + $0x88] sm:$0xff]
        %v2134 = vld [vmem:[%s2115 + $0x90] sm:$0xff]
        %v2135 = vld [vmem:[%s2115 + $0x98] sm:$0xff]
        %v2136 = vld [vmem:[%s2115 + $0xa0] sm:$0xff]
        %v2137 = vld [vmem:[%s2115 + $0xa8] sm:$0xff]
        %v2138 = vld [vmem:[%s2115 + $0xb0] sm:$0xff]
        %v2139 = vld [vmem:[%s2115 + $0xb8] sm:$0xff]
        %v2140 = vld [vmem:[%s2115 + $0xc0] sm:$0xff]
        %v2141 = vld [vmem:[%s2115 + $0xc8] sm:$0xff]
        %v2142 = vld [vmem:[%s2115 + $0xd0] sm:$0xff]
        %v2143 = vld [vmem:[%s2115 + $0xd8] sm:$0xff]
        %v2144 = vld [vmem:[%s2115 + $0xe0] sm:$0xff]
        %v2145 = vld [vmem:[%s2115 + $0xe8] sm:$0xff]
        %v2146 = vld [vmem:[%s2115 + $0xf0] sm:$0xff]
        %v2147 = vld [vmem:[%s2115 + $0xf8] sm:$0xff]
        %v2148 = vld [vmem:[%s2115 + $0x100] sm:$0xff]
        %v2149 = vld [vmem:[%s2115 + $0x108] sm:$0xff]
        %v2150 = vld [vmem:[%s2115 + $0x110] sm:$0xff]
        %v2151 = vld [vmem:[%s2115 + $0x118] sm:$0xff]
        %v2152 = vld [vmem:[%s2115 + $0x120] sm:$0xff]
        %v2153 = vld [vmem:[%s2115 + $0x128] sm:$0xff]
        %v2154 = vld [vmem:[%s2115 + $0x130] sm:$0xff]
        %v2155 = vld [vmem:[%s2115 + $0x138] sm:$0xff]
        %v2156 = vld [vmem:[%s2115 + $0x140] sm:$0xff]
        %v2157 = vld [vmem:[%s2115 + $0x148] sm:$0xff]
        %v2159 = vsel %vm1430, %v2107, 0
        %v2162 = vsel %vm1430, %v2113, 0
        %2164 = vmatprep.subr.mxu0 %v2117
        %2165 = vmatpush1.msra.mxu0 %v2116
        %2166 = vmatprep.subr.mxu0 %v2119
        %2167 = vmatpush1.msra.mxu0 %v2118
        %2168 = vmatprep.subr.mxu0 %v2121
        %2169 = vmatpush1.msra.mxu0 %v2120
        %2170 = vmatprep.subr.mxu0 %v2123
        %2171 = vmatpush1.msra.mxu0 %v2122
        %2172 = vmatprep.subr.mxu0 %v2125
        %2173 = vmatpush1.msra.mxu0 %v2124
        %2174 = vmatprep.subr.mxu0 %v2127
        %2175 = vmatpush1.msra.mxu0 %v2126
        %2176 = vmatprep.subr.mxu0 %v2129
        %2177 = vmatpush1.msra.mxu0 %v2128
        %2178 = vmatprep.subr.mxu0 %v2131
        %2179 = vmatpush1.msra.mxu0 %v2130
        %2180 = vmatprep.subr.mxu0 %v2133
        %2181 = vmatpush1.msra.mxu0 %v2132
        %2182 = vmatprep.subr.mxu0 %v2135
        %2183 = vmatpush1.msra.mxu0 %v2134
        %2184 = vmatprep.subr.mxu0 %v2137
        %2185 = vmatpush1.msra.mxu0 %v2136
        %2186 = vmatprep.subr.mxu0 %v2139
        %2187 = vmatpush1.msra.mxu0 %v2138
        %2188 = vmatprep.subr.mxu0 %v2141
        %2189 = vmatpush1.msra.mxu0 %v2140
        %2190 = vmatprep.subr.mxu0 %v2143
        %2191 = vmatpush1.msra.mxu0 %v2142
        %2192 = vmatprep.subr.mxu0 %v2145
        %2193 = vmatpush1.msra.mxu0 %v2144
        %2194 = vmatprep.subr.mxu0 %v2147
        %2195 = vmatpush1.msra.mxu0 %v2146
        %2196 = vmatprep.subr.mxu0 %v2149
        %2197 = vmatpush1.msra.mxu0 %v2148
        %2198 = vmatprep.subr.mxu0 %v2151
        %2199 = vmatpush1.msra.mxu0 %v2150
        %2200 = vmatprep.subr.mxu0 %v2153
        %2201 = vmatpush1.msra.mxu0 %v2152
        %2202 = vmatprep.subr.mxu0 %v2155
        %2203 = vmatpush1.msra.mxu0 %v2154
        %2204 = vmatprep.subr.mxu0 %v2157
        %2205 = vmatpush1.msra.mxu0 %v2156
        %2206 = vmatprep.subr.mxu0 0.0
        %2207 = vmatpush1.msra.mxu0 0.0
        %2208 = vmatprep.subr.mxu0 0.0
        %2209 = vmatpush1.msra.mxu0 0.0
        %2210 = vmatprep.subr.mxu0 0.0
        %2211 = vmatpush1.msra.mxu0 0.0
        %2212 = vmatprep.subr.mxu0 0.0
        %2213 = vmatpush1.msra.mxu0 0.0
        %2214 = vmatprep.subr.mxu0 0.0
        %2215 = vmatpush1.msra.mxu0 0.0
        %2216 = vmatprep.subr.mxu0 0.0
        %2217 = vmatpush1.msra.mxu0 0.0
        %2218 = vmatprep.subr.mxu0 0.0
        %2219 = vmatpush1.msra.mxu0 0.0
        %2220 = vmatprep.subr.mxu0 0.0
        %2221 = vmatpush1.msra.mxu0 0.0
        %2222 = vmatprep.subr.mxu0 0.0
        %2223 = vmatpush1.msra.mxu0 0.0
        %2224 = vmatprep.subr.mxu0 0.0
        %2225 = vmatpush1.msra.mxu0 0.0
        %2226 = vmatprep.subr.mxu0 0.0
        %2227 = vmatpush1.msra.mxu0 0.0
        %2228 = vmatprep.mubr.f32.mxu0 %v2159
        %2229 = vmatmul.mubr.f32.gmra.mrb[0].mxu0 %v2105
        %v2230 = vpop.f32.mrb[0].mxu0
        %v2231 = vadd.f32 0.0, %v2230
        %v2232 = vpop.f32.mrb[0].mxu0
        %v2233 = vadd.f32 0.0, %v2232
        %2234 = vmatprep.mubr.f32.mxu0 %v2162
        %2235 = vmatmul.mubr.f32.gmra.mrb[0].mxu0 %v2111
        %v2236 = vpop.f32.mrb[0].mxu0
        %v2237 = vadd.f32 0.0, %v2236
        %v2238 = vpop.f32.mrb[0].mxu0
        %v2239 = vadd.f32 0.0, %v2238
        %2240 = vdwg.mxu0
        %v2241 = vadd.f32 %v2025, %v2231
        %v2242 = vadd.f32 %v2026, %v2233
        %v2243 = vadd.f32 %v2027, %v2237
        %v2244 = vadd.f32 %v2028, %v2239
        %v2245 = vld [vmem:[%s5] sm:$0x3]
        %v2247 = vlaneseq
        %v2248 = vshrl.u32 %v2247, 7
        %v2249 = vsub.s32 0, %v2248
        %v2250 = vrot.slane %v2245, %v2249
        %v2251 = vlaneseq
        %v2252 = vshrl.u32 %v2251, 7
        %v2253 = vsub.s32 1, %v2252
        %v2254 = vrot.slane %v2245, %v2253
        %v2257 = vadd.f32 %v2241, %v2250
        %v2258 = vadd.f32 %v2242, %v2254
        %v2259 = vadd.f32 %v2243, %v2250
        %v2260 = vadd.f32 %v2244, %v2254
        %v2261 = vmax.f32 %v2257, 0.0
        %v2262 = vmax.f32 %v2258, 0.0
        %v2263 = vmax.f32 %v2259, 0.0
        %v2264 = vmax.f32 %v2260, 0.0
        %v2265 = vld [vmem:[%s6] sm:$0x1f]
        %vm2266 = vcmask 80896
        %v2268 = vsel %vm2266, %v2265, 0
        %vm2270 = vcmask 1041408
        %v2272 = vsel %vm2270, %v2263, 0
        %v2275 = vsel %vm2270, %v2264, 0
        %2277 = vmatprep.subr.mxu0 %v2262
        %2278 = vmatpush1.msra.mxu0 %v2261
        %2279 = vmatprep.subr.mxu0 %v2275
        %2280 = vmatpush1.msra.mxu0 %v2272
        %2281 = vmatprep.subr.mxu0 0.0
        %2282 = vmatpush1.msra.mxu0 0.0
        %2283 = vmatprep.subr.mxu0 0.0
        %2284 = vmatpush1.msra.mxu0 0.0
        %2285 = vmatprep.subr.mxu0 0.0
        %2286 = vmatpush1.msra.mxu0 0.0
        %2287 = vmatprep.subr.mxu0 0.0
        %2288 = vmatpush1.msra.mxu0 0.0
        %2289 = vmatprep.subr.mxu0 0.0
        %2290 = vmatpush1.msra.mxu0 0.0
        %2291 = vmatprep.subr.mxu0 0.0
        %2292 = vmatpush1.msra.mxu0 0.0
        %2293 = vmatprep.subr.mxu0 0.0
        %2294 = vmatpush1.msra.mxu0 0.0
        %2295 = vmatprep.subr.mxu0 0.0
        %2296 = vmatpush1.msra.mxu0 0.0
        %2297 = vmatprep.subr.mxu0 0.0
        %2298 = vmatpush1.msra.mxu0 0.0
        %2299 = vmatprep.subr.mxu0 0.0
        %2300 = vmatpush1.msra.mxu0 0.0
        %2301 = vmatprep.subr.mxu0 0.0
        %2302 = vmatpush1.msra.mxu0 0.0
        %2303 = vmatprep.subr.mxu0 0.0
        %2304 = vmatpush1.msra.mxu0 0.0
        %2305 = vmatprep.subr.mxu0 0.0
        %2306 = vmatpush1.msra.mxu0 0.0
        %2307 = vmatprep.subr.mxu0 0.0
        %2308 = vmatpush1.msra.mxu0 0.0
        %2309 = vmatprep.subr.mxu0 0.0
        %2310 = vmatpush1.msra.mxu0 0.0
        %2311 = vmatprep.subr.mxu0 0.0
        %2312 = vmatpush1.msra.mxu0 0.0
        %2313 = vmatprep.subr.mxu0 0.0
        %2314 = vmatpush1.msra.mxu0 0.0
        %2315 = vmatprep.subr.mxu0 0.0
        %2316 = vmatpush1.msra.mxu0 0.0
        %2317 = vmatprep.subr.mxu0 0.0
        %2318 = vmatpush1.msra.mxu0 0.0
        %2319 = vmatprep.subr.mxu0 0.0
        %2320 = vmatpush1.msra.mxu0 0.0
        %2321 = vmatprep.subr.mxu0 0.0
        %2322 = vmatpush1.msra.mxu0 0.0
        %2323 = vmatprep.subr.mxu0 0.0
        %2324 = vmatpush1.msra.mxu0 0.0
        %2325 = vmatprep.subr.mxu0 0.0
        %2326 = vmatpush1.msra.mxu0 0.0
        %2327 = vmatprep.subr.mxu0 0.0
        %2328 = vmatpush1.msra.mxu0 0.0
        %2329 = vmatprep.subr.mxu0 0.0
        %2330 = vmatpush1.msra.mxu0 0.0
        %2331 = vmatprep.subr.mxu0 0.0
        %2332 = vmatpush1.msra.mxu0 0.0
        %2333 = vmatprep.subr.mxu0 0.0
        %2334 = vmatpush1.msra.mxu0 0.0
        %2335 = vmatprep.subr.mxu0 0.0
        %2336 = vmatpush1.msra.mxu0 0.0
        %2337 = vmatprep.subr.mxu0 0.0
        %2338 = vmatpush1.msra.mxu0 0.0
        %2339 = vmatprep.subr.mxu0 0.0
        %2340 = vmatpush1.msra.mxu0 0.0
        %2341 = vmatprep.mubr.f32.mxu0 0.0
        %2342 = vmatmul.mubr.f32.gmra.mrb[0].mxu0 %v2268
        %v2343 = vpop.f32.mrb[0].mxu0
        %v2344 = vadd.f32 0.0, %v2343
        %v2345 = vpop.f32.mrb[0].mxu0
        %v2346 = vadd.f32 0.0, %v2345
        %2347 = vdwg.mxu0
        %v2348 = vld [vmem:[%s7] sm:$0xff]
        %v2349 = vld [vmem:[%s7 + $0x8] sm:$0xff]
        %v2350 = vld [vmem:[%s7 + $0x10] sm:$0xff]
        %v2351 = vld [vmem:[%s7 + $0x18] sm:$0xff]
        %v2352 = vld [vmem:[%s7 + $0x20] sm:$0xff]
        %v2353 = vld [vmem:[%s7 + $0x28] sm:$0xff]
        %v2354 = vld [vmem:[%s7 + $0x30] sm:$0xff]
        %v2355 = vld [vmem:[%s7 + $0x38] sm:$0xff]
        %v2356 = vld [vmem:[%s7 + $0x40] sm:$0xff]
        %v2357 = vld [vmem:[%s7 + $0x48] sm:$0xff]
        %v2358 = vld [vmem:[%s7 + $0x50] sm:$0xff]
        %v2359 = vld [vmem:[%s7 + $0x58] sm:$0xff]
        %v2360 = vld [vmem:[%s7 + $0x60] sm:$0xff]
        %v2361 = vld [vmem:[%s7 + $0x68] sm:$0xff]
        %v2362 = vld [vmem:[%s7 + $0x70] sm:$0xff]
        %v2363 = vld [vmem:[%s7 + $0x78] sm:$0xff]
        %v2364 = vld [vmem:[%s7 + $0x80] sm:$0xff]
        %v2365 = vld [vmem:[%s7 + $0x88] sm:$0xff]
        %v2366 = vld [vmem:[%s7 + $0x90] sm:$0xff]
        %v2367 = vld [vmem:[%s7 + $0x98] sm:$0xff]
        %vm2368 = vcmask 261120
        %v2370 = vsel %vm2368, %v2346, 0
        %2372 = vmatprep.subr.mxu0 0.0
        %2373 = vmatpush1.msra.mxu0 %v2348
        %2374 = vmatprep.subr.mxu0 0.0
        %2375 = vmatpush1.msra.mxu0 %v2349
        %2376 = vmatprep.subr.mxu0 0.0
        %2377 = vmatpush1.msra.mxu0 %v2350
        %2378 = vmatprep.subr.mxu0 0.0
        %2379 = vmatpush1.msra.mxu0 %v2351
        %2380 = vmatprep.subr.mxu0 0.0
        %2381 = vmatpush1.msra.mxu0 %v2352
        %2382 = vmatprep.subr.mxu0 0.0
        %2383 = vmatpush1.msra.mxu0 %v2353
        %2384 = vmatprep.subr.mxu0 0.0
        %2385 = vmatpush1.msra.mxu0 %v2354
        %2386 = vmatprep.subr.mxu0 0.0
        %2387 = vmatpush1.msra.mxu0 %v2355
        %2388 = vmatprep.subr.mxu0 0.0
        %2389 = vmatpush1.msra.mxu0 %v2356
        %2390 = vmatprep.subr.mxu0 0.0
        %2391 = vmatpush1.msra.mxu0 %v2357
        %2392 = vmatprep.subr.mxu0 0.0
        %2393 = vmatpush1.msra.mxu0 %v2358
        %2394 = vmatprep.subr.mxu0 0.0
        %2395 = vmatpush1.msra.mxu0 %v2359
        %2396 = vmatprep.subr.mxu0 0.0
        %2397 = vmatpush1.msra.mxu0 %v2360
        %2398 = vmatprep.subr.mxu0 0.0
        %2399 = vmatpush1.msra.mxu0 %v2361
        %2400 = vmatprep.subr.mxu0 0.0
        %2401 = vmatpush1.msra.mxu0 %v2362
        %2402 = vmatprep.subr.mxu0 0.0
        %2403 = vmatpush1.msra.mxu0 %v2363
        %2404 = vmatprep.subr.mxu0 0.0
        %2405 = vmatpush1.msra.mxu0 %v2364
        %2406 = vmatprep.subr.mxu0 0.0
        %2407 = vmatpush1.msra.mxu0 %v2365
        %2408 = vmatprep.subr.mxu0 0.0
        %2409 = vmatpush1.msra.mxu0 %v2366
        %2410 = vmatprep.subr.mxu0 0.0
        %2411 = vmatpush1.msra.mxu0 %v2367
        %2412 = vmatprep.subr.mxu0 0.0
        %2413 = vmatpush1.msra.mxu0 0.0
        %2414 = vmatprep.subr.mxu0 0.0
        %2415 = vmatpush1.msra.mxu0 0.0
        %2416 = vmatprep.subr.mxu0 0.0
        %2417 = vmatpush1.msra.mxu0 0.0
        %2418 = vmatprep.subr.mxu0 0.0
        %2419 = vmatpush1.msra.mxu0 0.0
        %2420 = vmatprep.subr.mxu0 0.0
        %2421 = vmatpush1.msra.mxu0 0.0
        %2422 = vmatprep.subr.mxu0 0.0
        %2423 = vmatpush1.msra.mxu0 0.0
        %2424 = vmatprep.subr.mxu0 0.0
        %2425 = vmatpush1.msra.mxu0 0.0
        %2426 = vmatprep.subr.mxu0 0.0
        %2427 = vmatpush1.msra.mxu0 0.0
        %2428 = vmatprep.subr.mxu0 0.0
        %2429 = vmatpush1.msra.mxu0 0.0
        %2430 = vmatprep.subr.mxu0 0.0
        %2431 = vmatpush1.msra.mxu0 0.0
        %2432 = vmatprep.subr.mxu0 0.0
        %2433 = vmatpush1.msra.mxu0 0.0
        %2434 = vmatprep.subr.mxu0 0.0
        %2435 = vmatpush1.msra.mxu0 0.0
        %2436 = vmatprep.mubr.f32.mxu0 %v2370
        %2437 = vmatmul.mubr.f32.gmra.mrb[0].mxu0 %v2344
        %v2438 = vpop.f32.mrb[0].mxu0
        %v2439 = vadd.f32 0.0, %v2438
        %v2440 = vpop.f32.mrb[0].mxu0
        %2441 = vdwg.mxu0
        %v2442 = vld [vmem:[%s8] sm:$0xff]
        %v2443 = vld [vmem:[%s8 + $0x8] sm:$0xff]
        %v2444 = vld [vmem:[%s8 + $0x10] sm:$0xff]
        %v2445 = vld [vmem:[%s8 + $0x18] sm:$0xff]
        %v2446 = vld [vmem:[%s8 + $0x20] sm:$0xff]
        %v2447 = vld [vmem:[%s8 + $0x28] sm:$0xff]
        %v2448 = vld [vmem:[%s8 + $0x30] sm:$0xff]
        %v2449 = vld [vmem:[%s8 + $0x38] sm:$0xff]
        %v2450 = vld [vmem:[%s8 + $0x40] sm:$0xff]
        %v2451 = vld [vmem:[%s8 + $0x48] sm:$0xff]
        %s2452 = scalar_lea.vmem %s8, 80
        %v2453 = vld [vmem:[%s2452] sm:$0xff]
        %v2454 = vld [vmem:[%s2452 + $0x8] sm:$0xff]
        %v2455 = vld [vmem:[%s2452 + $0x10] sm:$0xff]
        %v2456 = vld [vmem:[%s2452 + $0x18] sm:$0xff]
        %v2457 = vld [vmem:[%s2452 + $0x20] sm:$0xff]
        %v2458 = vld [vmem:[%s2452 + $0x28] sm:$0xff]
        %v2459 = vld [vmem:[%s2452 + $0x30] sm:$0xff]
        %v2460 = vld [vmem:[%s2452 + $0x38] sm:$0xff]
        %v2461 = vld [vmem:[%s2452 + $0x40] sm:$0xff]
        %v2462 = vld [vmem:[%s2452 + $0x48] sm:$0xff]
        %v2464 = vrot.slane %v2439, 1
        %vm2465 = vcmask 654336
        %v2466 = vsel %vm2465, %v2464, 0
        %2468 = vmatprep.subr.mxu0 0.0
        %2469 = vmatpush1.msra.mxu0 %v2453
        %2470 = vmatprep.subr.mxu0 0.0
        %2471 = vmatpush1.msra.mxu0 %v2454
        %2472 = vmatprep.subr.mxu0 0.0
        %2473 = vmatpush1.msra.mxu0 %v2455
        %2474 = vmatprep.subr.mxu0 0.0
        %2475 = vmatpush1.msra.mxu0 %v2456
        %2476 = vmatprep.subr.mxu0 0.0
        %2477 = vmatpush1.msra.mxu0 %v2457
        %2478 = vmatprep.subr.mxu0 0.0
        %2479 = vmatpush1.msra.mxu0 %v2458
        %2480 = vmatprep.subr.mxu0 0.0
        %2481 = vmatpush1.msra.mxu0 %v2459
        %2482 = vmatprep.subr.mxu0 0.0
        %2483 = vmatpush1.msra.mxu0 %v2460
        %2484 = vmatprep.subr.mxu0 0.0
        %2485 = vmatpush1.msra.mxu0 %v2461
        %2486 = vmatprep.subr.mxu0 0.0
        %2487 = vmatpush1.msra.mxu0 %v2462
        %2488 = vmatprep.subr.mxu0 0.0
        %2489 = vmatpush1.msra.mxu0 0.0
        %2490 = vmatprep.subr.mxu0 0.0
        %2491 = vmatpush1.msra.mxu0 0.0
        %2492 = vmatprep.subr.mxu0 0.0
        %2493 = vmatpush1.msra.mxu0 0.0
        %2494 = vmatprep.subr.mxu0 0.0
        %2495 = vmatpush1.msra.mxu0 0.0
        %2496 = vmatprep.subr.mxu0 0.0
        %2497 = vmatpush1.msra.mxu0 0.0
        %2498 = vmatprep.subr.mxu0 0.0
        %2499 = vmatpush1.msra.mxu0 0.0
        %2500 = vmatprep.subr.mxu0 0.0
        %2501 = vmatpush1.msra.mxu0 0.0
        %2502 = vmatprep.subr.mxu0 0.0
        %2503 = vmatpush1.msra.mxu0 0.0
        %2504 = vmatprep.subr.mxu0 0.0
        %2505 = vmatpush1.msra.mxu0 0.0
        %2506 = vmatprep.subr.mxu0 0.0
        %2507 = vmatpush1.msra.mxu0 0.0
        %2508 = vmatprep.subr.mxu0 0.0
        %2509 = vmatpush1.msra.mxu0 0.0
        %2510 = vmatprep.subr.mxu0 0.0
        %2511 = vmatpush1.msra.mxu0 0.0
        %2512 = vmatprep.subr.mxu0 0.0
        %2513 = vmatpush1.msra.mxu0 0.0
        %2514 = vmatprep.subr.mxu0 0.0
        %2515 = vmatpush1.msra.mxu0 0.0
        %2516 = vmatprep.subr.mxu0 0.0
        %2517 = vmatpush1.msra.mxu0 0.0
        %2518 = vmatprep.subr.mxu0 0.0
        %2519 = vmatpush1.msra.mxu0 0.0
        %2520 = vmatprep.subr.mxu0 0.0
        %2521 = vmatpush1.msra.mxu0 0.0
        %2522 = vmatprep.subr.mxu0 0.0
        %2523 = vmatpush1.msra.mxu0 0.0
        %2524 = vmatprep.subr.mxu0 0.0
        %2525 = vmatpush1.msra.mxu0 0.0
        %2526 = vmatprep.subr.mxu0 0.0
        %2527 = vmatpush1.msra.mxu0 0.0
        %2528 = vmatprep.subr.mxu0 0.0
        %2529 = vmatpush1.msra.mxu0 0.0
        %2530 = vmatprep.subr.mxu0 0.0
        %2531 = vmatpush1.msra.mxu0 0.0
        %2532 = vmatprep.mubr.f32.mxu0 0.0
        %2533 = vmatmul.mubr.f32.gmra.mrb[0].mxu0 %v2466
        %v2534 = vpop.f32.mrb[0].mxu0
        %v2535 = vadd.f32 0.0, %v2534
        %v2536 = vpop.f32.mrb[0].mxu0
        %2537 = vdwg.mxu0
        %v2538 = vsel %vm2465, %v2439, 0
        %2540 = vmatprep.subr.mxu0 0.0
        %2541 = vmatpush1.msra.mxu0 %v2442
        %2542 = vmatprep.subr.mxu0 0.0
        %2543 = vmatpush1.msra.mxu0 %v2443
        %2544 = vmatprep.subr.mxu0 0.0
        %2545 = vmatpush1.msra.mxu0 %v2444
        %2546 = vmatprep.subr.mxu0 0.0
        %2547 = vmatpush1.msra.mxu0 %v2445
        %2548 = vmatprep.subr.mxu0 0.0
        %2549 = vmatpush1.msra.mxu0 %v2446
        %2550 = vmatprep.subr.mxu0 0.0
        %2551 = vmatpush1.msra.mxu0 %v2447
        %2552 = vmatprep.subr.mxu0 0.0
        %2553 = vmatpush1.msra.mxu0 %v2448
        %2554 = vmatprep.subr.mxu0 0.0
        %2555 = vmatpush1.msra.mxu0 %v2449
        %2556 = vmatprep.subr.mxu0 0.0
        %2557 = vmatpush1.msra.mxu0 %v2450
        %2558 = vmatprep.subr.mxu0 0.0
        %2559 = vmatpush1.msra.mxu0 %v2451
        %2560 = vmatprep.subr.mxu0 0.0
        %2561 = vmatpush1.msra.mxu0 0.0
        %2562 = vmatprep.subr.mxu0 0.0
        %2563 = vmatpush1.msra.mxu0 0.0
        %2564 = vmatprep.subr.mxu0 0.0
        %2565 = vmatpush1.msra.mxu0 0.0
        %2566 = vmatprep.subr.mxu0 0.0
        %2567 = vmatpush1.msra.mxu0 0.0
        %2568 = vmatprep.subr.mxu0 0.0
        %2569 = vmatpush1.msra.mxu0 0.0
        %2570 = vmatprep.subr.mxu0 0.0
        %2571 = vmatpush1.msra.mxu0 0.0
        %2572 = vmatprep.subr.mxu0 0.0
        %2573 = vmatpush1.msra.mxu0 0.0
        %2574 = vmatprep.subr.mxu0 0.0
        %2575 = vmatpush1.msra.mxu0 0.0
        %2576 = vmatprep.subr.mxu0 0.0
        %2577 = vmatpush1.msra.mxu0 0.0
        %2578 = vmatprep.subr.mxu0 0.0
        %2579 = vmatpush1.msra.mxu0 0.0
        %2580 = vmatprep.subr.mxu0 0.0
        %2581 = vmatpush1.msra.mxu0 0.0
        %2582 = vmatprep.subr.mxu0 0.0
        %2583 = vmatpush1.msra.mxu0 0.0
        %2584 = vmatprep.subr.mxu0 0.0
        %2585 = vmatpush1.msra.mxu0 0.0
        %2586 = vmatprep.subr.mxu0 0.0
        %2587 = vmatpush1.msra.mxu0 0.0
        %2588 = vmatprep.subr.mxu0 0.0
        %2589 = vmatpush1.msra.mxu0 0.0
        %2590 = vmatprep.subr.mxu0 0.0
        %2591 = vmatpush1.msra.mxu0 0.0
        %2592 = vmatprep.subr.mxu0 0.0
        %2593 = vmatpush1.msra.mxu0 0.0
        %2594 = vmatprep.subr.mxu0 0.0
        %2595 = vmatpush1.msra.mxu0 0.0
        %2596 = vmatprep.subr.mxu0 0.0
        %2597 = vmatpush1.msra.mxu0 0.0
        %2598 = vmatprep.subr.mxu0 0.0
        %2599 = vmatpush1.msra.mxu0 0.0
        %2600 = vmatprep.subr.mxu0 0.0
        %2601 = vmatpush1.msra.mxu0 0.0
        %2602 = vmatprep.subr.mxu0 0.0
        %2603 = vmatpush1.msra.mxu0 0.0
        %2604 = vmatprep.mubr.f32.mxu0 0.0
        %2605 = vmatmul.mubr.f32.gmra.mrb[0].mxu0 %v2538
        %v2606 = vpop.f32.mrb[0].mxu0
        %v2607 = vadd.f32 %v2535, %v2606
        %v2608 = vpop.f32.mrb[0].mxu0
        %2609 = vdwg.mxu0
        %s2610 = scalar_lea.vmem %s8, 160
        %v2611 = vld [vmem:[%s2610] sm:$0xff]
        %v2612 = vld [vmem:[%s2610 + $0x8] sm:$0xff]
        %v2613 = vld [vmem:[%s2610 + $0x10] sm:$0xff]
        %v2614 = vld [vmem:[%s2610 + $0x18] sm:$0xff]
        %v2615 = vld [vmem:[%s2610 + $0x20] sm:$0xff]
        %v2616 = vld [vmem:[%s2610 + $0x28] sm:$0xff]
        %v2617 = vld [vmem:[%s2610 + $0x30] sm:$0xff]
        %v2618 = vld [vmem:[%s2610 + $0x38] sm:$0xff]
        %v2619 = vld [vmem:[%s2610 + $0x40] sm:$0xff]
        %v2620 = vld [vmem:[%s2610 + $0x48] sm:$0xff]
        %v2621 = vrot.slane %v2439, 2
        %v2622 = vsel %vm2465, %v2621, 0
        %2624 = vmatprep.subr.mxu0 0.0
        %2625 = vmatpush1.msra.mxu0 %v2611
        %2626 = vmatprep.subr.mxu0 0.0
        %2627 = vmatpush1.msra.mxu0 %v2612
        %2628 = vmatprep.subr.mxu0 0.0
        %2629 = vmatpush1.msra.mxu0 %v2613
        %2630 = vmatprep.subr.mxu0 0.0
        %2631 = vmatpush1.msra.mxu0 %v2614
        %2632 = vmatprep.subr.mxu0 0.0
        %2633 = vmatpush1.msra.mxu0 %v2615
        %2634 = vmatprep.subr.mxu0 0.0
        %2635 = vmatpush1.msra.mxu0 %v2616
        %2636 = vmatprep.subr.mxu0 0.0
        %2637 = vmatpush1.msra.mxu0 %v2617
        %2638 = vmatprep.subr.mxu0 0.0
        %2639 = vmatpush1.msra.mxu0 %v2618
        %2640 = vmatprep.subr.mxu0 0.0
        %2641 = vmatpush1.msra.mxu0 %v2619
        %2642 = vmatprep.subr.mxu0 0.0
        %2643 = vmatpush1.msra.mxu0 %v2620
        %2644 = vmatprep.subr.mxu0 0.0
        %2645 = vmatpush1.msra.mxu0 0.0
        %2646 = vmatprep.subr.mxu0 0.0
        %2647 = vmatpush1.msra.mxu0 0.0
        %2648 = vmatprep.subr.mxu0 0.0
        %2649 = vmatpush1.msra.mxu0 0.0
        %2650 = vmatprep.subr.mxu0 0.0
        %2651 = vmatpush1.msra.mxu0 0.0
        %2652 = vmatprep.subr.mxu0 0.0
        %2653 = vmatpush1.msra.mxu0 0.0
        %2654 = vmatprep.subr.mxu0 0.0
        %2655 = vmatpush1.msra.mxu0 0.0
        %2656 = vmatprep.subr.mxu0 0.0
        %2657 = vmatpush1.msra.mxu0 0.0
        %2658 = vmatprep.subr.mxu0 0.0
        %2659 = vmatpush1.msra.mxu0 0.0
        %2660 = vmatprep.subr.mxu0 0.0
        %2661 = vmatpush1.msra.mxu0 0.0
        %2662 = vmatprep.subr.mxu0 0.0
        %2663 = vmatpush1.msra.mxu0 0.0
        %2664 = vmatprep.subr.mxu0 0.0
        %2665 = vmatpush1.msra.mxu0 0.0
        %2666 = vmatprep.subr.mxu0 0.0
        %2667 = vmatpush1.msra.mxu0 0.0
        %2668 = vmatprep.subr.mxu0 0.0
        %2669 = vmatpush1.msra.mxu0 0.0
        %2670 = vmatprep.subr.mxu0 0.0
        %2671 = vmatpush1.msra.mxu0 0.0
        %2672 = vmatprep.subr.mxu0 0.0
        %2673 = vmatpush1.msra.mxu0 0.0
        %2674 = vmatprep.subr.mxu0 0.0
        %2675 = vmatpush1.msra.mxu0 0.0
        %2676 = vmatprep.subr.mxu0 0.0
        %2677 = vmatpush1.msra.mxu0 0.0
        %2678 = vmatprep.subr.mxu0 0.0
        %2679 = vmatpush1.msra.mxu0 0.0
        %2680 = vmatprep.subr.mxu0 0.0
        %2681 = vmatpush1.msra.mxu0 0.0
        %2682 = vmatprep.subr.mxu0 0.0
        %2683 = vmatpush1.msra.mxu0 0.0
        %2684 = vmatprep.subr.mxu0 0.0
        %2685 = vmatpush1.msra.mxu0 0.0
        %2686 = vmatprep.subr.mxu0 0.0
        %2687 = vmatpush1.msra.mxu0 0.0
        %2688 = vmatprep.mubr.f32.mxu0 0.0
        %2689 = vmatmul.mubr.f32.gmra.mrb[0].mxu0 %v2622
        %v2690 = vpop.f32.mrb[0].mxu0
        %v2691 = vadd.f32 0.0, %v2690
        %v2692 = vpop.f32.mrb[0].mxu0
        %2693 = vdwg.mxu0
        %v2694 = vadd.f32 %v2607, %v2691
        %s2695 = scalar_lea.vmem %s8, 240
        %v2696 = vld [vmem:[%s2695] sm:$0xff]
        %v2697 = vld [vmem:[%s2695 + $0x8] sm:$0xff]
        %v2698 = vld [vmem:[%s2695 + $0x10] sm:$0xff]
        %v2699 = vld [vmem:[%s2695 + $0x18] sm:$0xff]
        %v2700 = vld [vmem:[%s2695 + $0x20] sm:$0xff]
        %v2701 = vld [vmem:[%s2695 + $0x28] sm:$0xff]
        %v2702 = vld [vmem:[%s2695 + $0x30] sm:$0xff]
        %v2703 = vld [vmem:[%s2695 + $0x38] sm:$0xff]
        %v2704 = vld [vmem:[%s2695 + $0x40] sm:$0xff]
        %v2705 = vld [vmem:[%s2695 + $0x48] sm:$0xff]
        %v2706 = vrot.slane %v2439, 3
        %v2707 = vsel %vm2465, %v2706, 0
        %2709 = vmatprep.subr.mxu0 0.0
        %2710 = vmatpush1.msra.mxu0 %v2696
        %2711 = vmatprep.subr.mxu0 0.0
        %2712 = vmatpush1.msra.mxu0 %v2697
        %2713 = vmatprep.subr.mxu0 0.0
        %2714 = vmatpush1.msra.mxu0 %v2698
        %2715 = vmatprep.subr.mxu0 0.0
        %2716 = vmatpush1.msra.mxu0 %v2699
        %2717 = vmatprep.subr.mxu0 0.0
        %2718 = vmatpush1.msra.mxu0 %v2700
        %2719 = vmatprep.subr.mxu0 0.0
        %2720 = vmatpush1.msra.mxu0 %v2701
        %2721 = vmatprep.subr.mxu0 0.0
        %2722 = vmatpush1.msra.mxu0 %v2702
        %2723 = vmatprep.subr.mxu0 0.0
        %2724 = vmatpush1.msra.mxu0 %v2703
        %2725 = vmatprep.subr.mxu0 0.0
        %2726 = vmatpush1.msra.mxu0 %v2704
        %2727 = vmatprep.subr.mxu0 0.0
        %2728 = vmatpush1.msra.mxu0 %v2705
        %2729 = vmatprep.subr.mxu0 0.0
        %2730 = vmatpush1.msra.mxu0 0.0
        %2731 = vmatprep.subr.mxu0 0.0
        %2732 = vmatpush1.msra.mxu0 0.0
        %2733 = vmatprep.subr.mxu0 0.0
        %2734 = vmatpush1.msra.mxu0 0.0
        %2735 = vmatprep.subr.mxu0 0.0
        %2736 = vmatpush1.msra.mxu0 0.0
        %2737 = vmatprep.subr.mxu0 0.0
        %2738 = vmatpush1.msra.mxu0 0.0
        %2739 = vmatprep.subr.mxu0 0.0
        %2740 = vmatpush1.msra.mxu0 0.0
        %2741 = vmatprep.subr.mxu0 0.0
        %2742 = vmatpush1.msra.mxu0 0.0
        %2743 = vmatprep.subr.mxu0 0.0
        %2744 = vmatpush1.msra.mxu0 0.0
        %2745 = vmatprep.subr.mxu0 0.0
        %2746 = vmatpush1.msra.mxu0 0.0
        %2747 = vmatprep.subr.mxu0 0.0
        %2748 = vmatpush1.msra.mxu0 0.0
        %2749 = vmatprep.subr.mxu0 0.0
        %2750 = vmatpush1.msra.mxu0 0.0
        %2751 = vmatprep.subr.mxu0 0.0
        %2752 = vmatpush1.msra.mxu0 0.0
        %2753 = vmatprep.subr.mxu0 0.0
        %2754 = vmatpush1.msra.mxu0 0.0
        %2755 = vmatprep.subr.mxu0 0.0
        %2756 = vmatpush1.msra.mxu0 0.0
        %2757 = vmatprep.subr.mxu0 0.0
        %2758 = vmatpush1.msra.mxu0 0.0
        %2759 = vmatprep.subr.mxu0 0.0
        %2760 = vmatpush1.msra.mxu0 0.0
        %2761 = vmatprep.subr.mxu0 0.0
        %2762 = vmatpush1.msra.mxu0 0.0
        %2763 = vmatprep.subr.mxu0 0.0
        %2764 = vmatpush1.msra.mxu0 0.0
        %2765 = vmatprep.subr.mxu0 0.0
        %2766 = vmatpush1.msra.mxu0 0.0
        %2767 = vmatprep.subr.mxu0 0.0
        %2768 = vmatpush1.msra.mxu0 0.0
        %2769 = vmatprep.subr.mxu0 0.0
        %2770 = vmatpush1.msra.mxu0 0.0
        %2771 = vmatprep.subr.mxu0 0.0
        %2772 = vmatpush1.msra.mxu0 0.0
        %2773 = vmatprep.mubr.f32.mxu0 0.0
        %2774 = vmatmul.mubr.f32.gmra.mrb[0].mxu0 %v2707
        %v2775 = vpop.f32.mrb[0].mxu0
        %v2776 = vadd.f32 0.0, %v2775
        %v2777 = vpop.f32.mrb[0].mxu0
        %2778 = vdwg.mxu0
        %v2779 = vadd.f32 %v2694, %v2776
        %s2780 = scalar_lea.vmem %s8, 320
        %v2781 = vld [vmem:[%s2780] sm:$0xff]
        %v2782 = vld [vmem:[%s2780 + $0x8] sm:$0xff]
        %v2783 = vld [vmem:[%s2780 + $0x10] sm:$0xff]
        %v2784 = vld [vmem:[%s2780 + $0x18] sm:$0xff]
        %v2785 = vld [vmem:[%s2780 + $0x20] sm:$0xff]
        %v2786 = vld [vmem:[%s2780 + $0x28] sm:$0xff]
        %v2787 = vld [vmem:[%s2780 + $0x30] sm:$0xff]
        %v2788 = vld [vmem:[%s2780 + $0x38] sm:$0xff]
        %v2789 = vld [vmem:[%s2780 + $0x40] sm:$0xff]
        %v2790 = vld [vmem:[%s2780 + $0x48] sm:$0xff]
        %v2791 = vrot.slane %v2439, 4
        %v2792 = vsel %vm2465, %v2791, 0
        %2794 = vmatprep.subr.mxu0 0.0
        %2795 = vmatpush1.msra.mxu0 %v2781
        %2796 = vmatprep.subr.mxu0 0.0
        %2797 = vmatpush1.msra.mxu0 %v2782
        %2798 = vmatprep.subr.mxu0 0.0
        %2799 = vmatpush1.msra.mxu0 %v2783
        %2800 = vmatprep.subr.mxu0 0.0
        %2801 = vmatpush1.msra.mxu0 %v2784
        %2802 = vmatprep.subr.mxu0 0.0
        %2803 = vmatpush1.msra.mxu0 %v2785
        %2804 = vmatprep.subr.mxu0 0.0
        %2805 = vmatpush1.msra.mxu0 %v2786
        %2806 = vmatprep.subr.mxu0 0.0
        %2807 = vmatpush1.msra.mxu0 %v2787
        %2808 = vmatprep.subr.mxu0 0.0
        %2809 = vmatpush1.msra.mxu0 %v2788
        %2810 = vmatprep.subr.mxu0 0.0
        %2811 = vmatpush1.msra.mxu0 %v2789
        %2812 = vmatprep.subr.mxu0 0.0
        %2813 = vmatpush1.msra.mxu0 %v2790
        %2814 = vmatprep.subr.mxu0 0.0
        %2815 = vmatpush1.msra.mxu0 0.0
        %2816 = vmatprep.subr.mxu0 0.0
        %2817 = vmatpush1.msra.mxu0 0.0
        %2818 = vmatprep.subr.mxu0 0.0
        %2819 = vmatpush1.msra.mxu0 0.0
        %2820 = vmatprep.subr.mxu0 0.0
        %2821 = vmatpush1.msra.mxu0 0.0
        %2822 = vmatprep.subr.mxu0 0.0
        %2823 = vmatpush1.msra.mxu0 0.0
        %2824 = vmatprep.subr.mxu0 0.0
        %2825 = vmatpush1.msra.mxu0 0.0
        %2826 = vmatprep.subr.mxu0 0.0
        %2827 = vmatpush1.msra.mxu0 0.0
        %2828 = vmatprep.subr.mxu0 0.0
        %2829 = vmatpush1.msra.mxu0 0.0
        %2830 = vmatprep.subr.mxu0 0.0
        %2831 = vmatpush1.msra.mxu0 0.0
        %2832 = vmatprep.subr.mxu0 0.0
        %2833 = vmatpush1.msra.mxu0 0.0
        %2834 = vmatprep.subr.mxu0 0.0
        %2835 = vmatpush1.msra.mxu0 0.0
        %2836 = vmatprep.subr.mxu0 0.0
        %2837 = vmatpush1.msra.mxu0 0.0
        %2838 = vmatprep.subr.mxu0 0.0
        %2839 = vmatpush1.msra.mxu0 0.0
        %2840 = vmatprep.subr.mxu0 0.0
        %2841 = vmatpush1.msra.mxu0 0.0
        %2842 = vmatprep.subr.mxu0 0.0
        %2843 = vmatpush1.msra.mxu0 0.0
        %2844 = vmatprep.subr.mxu0 0.0
        %2845 = vmatpush1.msra.mxu0 0.0
        %2846 = vmatprep.subr.mxu0 0.0
        %2847 = vmatpush1.msra.mxu0 0.0
        %2848 = vmatprep.subr.mxu0 0.0
        %2849 = vmatpush1.msra.mxu0 0.0
        %2850 = vmatprep.subr.mxu0 0.0
        %2851 = vmatpush1.msra.mxu0 0.0
        %2852 = vmatprep.subr.mxu0 0.0
        %2853 = vmatpush1.msra.mxu0 0.0
        %2854 = vmatprep.subr.mxu0 0.0
        %2855 = vmatpush1.msra.mxu0 0.0
        %2856 = vmatprep.subr.mxu0 0.0
        %2857 = vmatpush1.msra.mxu0 0.0
        %2858 = vmatprep.mubr.f32.mxu0 0.0
        %2859 = vmatmul.mubr.f32.gmra.mrb[0].mxu0 %v2792
        %v2860 = vpop.f32.mrb[0].mxu0
        %v2861 = vadd.f32 0.0, %v2860
        %v2862 = vpop.f32.mrb[0].mxu0
        %2863 = vdwg.mxu0
        %v2864 = vadd.f32 %v2779, %v2861
        %v2865 = vld [vmem:[%s9] sm:$0x1]
        %v2866 = vadd.f32 %v2864, %v2865
        %v2867 = vmax.f32 %v2866, 0.0
        %v2868 = vld [vmem:[%s10] sm:$0xff]
        %v2869 = vld [vmem:[%s10 + $0x8] sm:$0xff]
        %v2870 = vld [vmem:[%s10 + $0x10] sm:$0xff]
        %v2871 = vld [vmem:[%s10 + $0x18] sm:$0xff]
        %v2872 = vld [vmem:[%s10 + $0x20] sm:$0xff]
        %v2873 = vld [vmem:[%s10 + $0x28] sm:$0xff]
        %v2874 = vld [vmem:[%s10 + $0x30] sm:$0xff]
        %v2875 = vld [vmem:[%s10 + $0x38] sm:$0xff]
        %v2876 = vld [vmem:[%s10 + $0x40] sm:$0xff]
        %v2877 = vld [vmem:[%s10 + $0x48] sm:$0xff]
        %v2878 = vld [vmem:[%s10 + $0x50] sm:$0xff]
        %v2879 = vld [vmem:[%s10 + $0x58] sm:$0xff]
        %v2880 = vld [vmem:[%s10 + $0x60] sm:$0xff]
        %v2881 = vld [vmem:[%s10 + $0x68] sm:$0xff]
        %v2882 = vld [vmem:[%s10 + $0x70] sm:$0xff]
        %v2883 = vld [vmem:[%s11] sm:$0x1]
        %vm2884 = vcmask 982016
        %v2886 = vsel %vm2884, %v2867, 0
        %2888 = vmatprep.subr.mxu0 0.0
        %2889 = vmatpush1.msra.mxu0 %v2868
        %2890 = vmatprep.subr.mxu0 0.0
        %2891 = vmatpush1.msra.mxu0 %v2869
        %2892 = vmatprep.subr.mxu0 0.0
        %2893 = vmatpush1.msra.mxu0 %v2870
        %2894 = vmatprep.subr.mxu0 0.0
        %2895 = vmatpush1.msra.mxu0 %v2871
        %2896 = vmatprep.subr.mxu0 0.0
        %2897 = vmatpush1.msra.mxu0 %v2872
        %2898 = vmatprep.subr.mxu0 0.0
        %2899 = vmatpush1.msra.mxu0 %v2873
        %2900 = vmatprep.subr.mxu0 0.0
        %2901 = vmatpush1.msra.mxu0 %v2874
        %2902 = vmatprep.subr.mxu0 0.0
        %2903 = vmatpush1.msra.mxu0 %v2875
        %2904 = vmatprep.subr.mxu0 0.0
        %2905 = vmatpush1.msra.mxu0 %v2876
        %2906 = vmatprep.subr.mxu0 0.0
        %2907 = vmatpush1.msra.mxu0 %v2877
        %2908 = vmatprep.subr.mxu0 0.0
        %2909 = vmatpush1.msra.mxu0 %v2878
        %2910 = vmatprep.subr.mxu0 0.0
        %2911 = vmatpush1.msra.mxu0 %v2879
        %2912 = vmatprep.subr.mxu0 0.0
        %2913 = vmatpush1.msra.mxu0 %v2880
        %2914 = vmatprep.subr.mxu0 0.0
        %2915 = vmatpush1.msra.mxu0 %v2881
        %2916 = vmatprep.subr.mxu0 0.0
        %2917 = vmatpush1.msra.mxu0 %v2882
        %2918 = vmatprep.subr.mxu0 0.0
        %2919 = vmatpush1.msra.mxu0 0.0
        %2920 = vmatprep.subr.mxu0 0.0
        %2921 = vmatpush1.msra.mxu0 0.0
        %2922 = vmatprep.subr.mxu0 0.0
        %2923 = vmatpush1.msra.mxu0 0.0
        %2924 = vmatprep.subr.mxu0 0.0
        %2925 = vmatpush1.msra.mxu0 0.0
        %2926 = vmatprep.subr.mxu0 0.0
        %2927 = vmatpush1.msra.mxu0 0.0
        %2928 = vmatprep.subr.mxu0 0.0
        %2929 = vmatpush1.msra.mxu0 0.0
        %2930 = vmatprep.subr.mxu0 0.0
        %2931 = vmatpush1.msra.mxu0 0.0
        %2932 = vmatprep.subr.mxu0 0.0
        %2933 = vmatpush1.msra.mxu0 0.0
        %2934 = vmatprep.subr.mxu0 0.0
        %2935 = vmatpush1.msra.mxu0 0.0
        %2936 = vmatprep.subr.mxu0 0.0
        %2937 = vmatpush1.msra.mxu0 0.0
        %2938 = vmatprep.subr.mxu0 0.0
        %2939 = vmatpush1.msra.mxu0 0.0
        %2940 = vmatprep.subr.mxu0 0.0
        %2941 = vmatpush1.msra.mxu0 0.0
        %2942 = vmatprep.subr.mxu0 0.0
        %2943 = vmatpush1.msra.mxu0 0.0
        %2944 = vmatprep.subr.mxu0 0.0
        %2945 = vmatpush1.msra.mxu0 0.0
        %2946 = vmatprep.subr.mxu0 0.0
        %2947 = vmatpush1.msra.mxu0 0.0
        %2948 = vmatprep.subr.mxu0 0.0
        %2949 = vmatpush1.msra.mxu0 0.0
        %2950 = vmatprep.subr.mxu0 0.0
        %2951 = vmatpush1.msra.mxu0 0.0
        %2952 = vmatprep.mubr.f32.mxu0 0.0
        %2953 = vmatmul.mubr.f32.gmra.mrb[0].mxu0 %v2886
        %v2954 = vpop.f32.mrb[0].mxu0
        %v2955 = vadd.f32 %v2883, %v2954
        %v2956 = vpop.f32.mrb[0].mxu0
        %2957 = vdwg.mxu0
        %v2958 = vmax.f32 %v2955, 0.0
        %v2959 = vld [vmem:[%s12] sm:$0xff]
        %v2960 = vld [vmem:[%s12 + $0x8] sm:$0xff]
        %v2961 = vld [vmem:[%s12 + $0x10] sm:$0xff]
        %v2962 = vld [vmem:[%s12 + $0x18] sm:$0xff]
        %v2963 = vld [vmem:[%s12 + $0x20] sm:$0xff]
        %v2964 = vld [vmem:[%s12 + $0x28] sm:$0xff]
        %v2965 = vld [vmem:[%s12 + $0x30] sm:$0xff]
        %v2966 = vld [vmem:[%s12 + $0x38] sm:$0xff]
        %v2967 = vld [vmem:[%s12 + $0x40] sm:$0xff]
        %v2968 = vld [vmem:[%s12 + $0x48] sm:$0xff]
        %v2969 = vld [vmem:[%s12 + $0x50] sm:$0xf]
        %v2970 = vld [vmem:[%s13] sm:$0x1]
        %vm2971 = vcmask 687104
        %v2973 = vsel %vm2971, %v2958, 0
        %v2976 = vsel %vm1026, %v2969, 0
        %2978 = vmatprep.subr.mxu0 0.0
        %2979 = vmatpush1.msra.mxu0 %v2959
        %2980 = vmatprep.subr.mxu0 0.0
        %2981 = vmatpush1.msra.mxu0 %v2960
        %2982 = vmatprep.subr.mxu0 0.0
        %2983 = vmatpush1.msra.mxu0 %v2961
        %2984 = vmatprep.subr.mxu0 0.0
        %2985 = vmatpush1.msra.mxu0 %v2962
        %2986 = vmatprep.subr.mxu0 0.0
        %2987 = vmatpush1.msra.mxu0 %v2963
        %2988 = vmatprep.subr.mxu0 0.0
        %2989 = vmatpush1.msra.mxu0 %v2964
        %2990 = vmatprep.subr.mxu0 0.0
        %2991 = vmatpush1.msra.mxu0 %v2965
        %2992 = vmatprep.subr.mxu0 0.0
        %2993 = vmatpush1.msra.mxu0 %v2966
        %2994 = vmatprep.subr.mxu0 0.0
        %2995 = vmatpush1.msra.mxu0 %v2967
        %2996 = vmatprep.subr.mxu0 0.0
        %2997 = vmatpush1.msra.mxu0 %v2968
        %2998 = vmatprep.subr.mxu0 0.0
        %2999 = vmatpush1.msra.mxu0 %v2976
        %3000 = vmatprep.subr.mxu0 0.0
        %3001 = vmatpush1.msra.mxu0 0.0
        %3002 = vmatprep.subr.mxu0 0.0
        %3003 = vmatpush1.msra.mxu0 0.0
        %3004 = vmatprep.subr.mxu0 0.0
        %3005 = vmatpush1.msra.mxu0 0.0
        %3006 = vmatprep.subr.mxu0 0.0
        %3007 = vmatpush1.msra.mxu0 0.0
        %3008 = vmatprep.subr.mxu0 0.0
        %3009 = vmatpush1.msra.mxu0 0.0
        %3010 = vmatprep.subr.mxu0 0.0
        %3011 = vmatpush1.msra.mxu0 0.0
        %3012 = vmatprep.subr.mxu0 0.0
        %3013 = vmatpush1.msra.mxu0 0.0
        %3014 = vmatprep.subr.mxu0 0.0
        %3015 = vmatpush1.msra.mxu0 0.0
        %3016 = vmatprep.subr.mxu0 0.0
        %3017 = vmatpush1.msra.mxu0 0.0
        %3018 = vmatprep.subr.mxu0 0.0
        %3019 = vmatpush1.msra.mxu0 0.0
        %3020 = vmatprep.subr.mxu0 0.0
        %3021 = vmatpush1.msra.mxu0 0.0
        %3022 = vmatprep.subr.mxu0 0.0
        %3023 = vmatpush1.msra.mxu0 0.0
        %3024 = vmatprep.subr.mxu0 0.0
        %3025 = vmatpush1.msra.mxu0 0.0
        %3026 = vmatprep.subr.mxu0 0.0
        %3027 = vmatpush1.msra.mxu0 0.0
        %3028 = vmatprep.subr.mxu0 0.0
        %3029 = vmatpush1.msra.mxu0 0.0
        %3030 = vmatprep.subr.mxu0 0.0
        %3031 = vmatpush1.msra.mxu0 0.0
        %3032 = vmatprep.subr.mxu0 0.0
        %3033 = vmatpush1.msra.mxu0 0.0
        %3034 = vmatprep.subr.mxu0 0.0
        %3035 = vmatpush1.msra.mxu0 0.0
        %3036 = vmatprep.subr.mxu0 0.0
        %3037 = vmatpush1.msra.mxu0 0.0
        %3038 = vmatprep.subr.mxu0 0.0
        %3039 = vmatpush1.msra.mxu0 0.0
        %3040 = vmatprep.subr.mxu0 0.0
        %3041 = vmatpush1.msra.mxu0 0.0
        %3042 = vmatprep.mubr.f32.mxu0 0.0
        %3043 = vmatmul.mubr.f32.gmra.mrb[0].mxu0 %v2973
        %v3044 = vpop.f32.mrb[0].mxu0
        %v3045 = vadd.f32 %v2970, %v3044
        %v3046 = vpop.f32.mrb[0].mxu0
        %3047 = vdwg.mxu0
        %vm3048 = vcmask 73728
        %v3049 = vsel %vm3048, %v3045, -inf
        %3050 = vmax.xlane.f32.xlu0 %v3049
        %v3051 = vpop.xlane.xlu0 %3050
        %v3052 = vsub.f32 %v3045, %v3051
        %v3053 = vmul.f32 %v3052, 1.442695
        %v3054 = vpow.pop %v3053
        %v3055 = vsel %vm3048, %v3054, 0.0
        %3056 = vadd.xlane.f32.xlu0 %v3055
        %v3057 = vpop.xlane.xlu0 %3056
        %v3058 = vrcp.pop %v3057
        %v3059 = vmul.f32 %v3054, %v3058
        %3060 = vst.msk [vmem:[%s459] sm:$0x1] %vm3048, %v3059
        %s3061 = sand.u32 %s335, 1
        %s3062 = scalar_lea.sflag [#allocation3], %s3061
        %s3063 = sand.u32 %s335, 1
        %s3064 = scalar_lea.vmem [#allocation2], %s3063
        // Predicated region
        $region77: #{lenet_cifar_forward.1} parent=75 // pred_check
          %p3065 = pneg %p345
        $region78: #{lenet_cifar_forward.1} parent=75 // pred_check_branch
          %3067 = sbr.rel (%p3065) target = $region80
        $region79: #{lenet_cifar_forward.1} parent=75 // pred_region
          %s3069 = ssub.s32 16, 16
          %3070 = vsyncadd %s3062, %s3069
          %s3071 = smul.addr %s28, 16
          %s3072 = scalar_lea.hbm %s14, %s3071
          %s3074 = sshll.u32 %s3064, 4
          %s3075 = int_to_ptr.vmem [resolvable:$true] %s3074
          %3077 = dma.vmem_to_hbm [thread:$0]  %s3075, 16, %s3072, %s3062
        $region80: #{lenet_cifar_forward.1} parent=75 // pred_fallthru
          _
      $region76: #{lenet_cifar_forward.1} parent=5 // pred_fallthru
        _
      %p3078 = scmp.le.s32.totalorder 2, %s23
      // Predicated region
      $region81: #{lenet_cifar_forward.1} parent=5 // pred_check
        %p3079 = pneg %p3078
      $region82: #{lenet_cifar_forward.1} parent=5 // pred_check_branch
        %3081 = sbr.rel (%p3079) target = $region84
      $region83: #{lenet_cifar_forward.1} parent=5 // pred_region
        %s3082 = ssub.s32 %s23, 2
        // Predicated region
        $region85: #{lenet_cifar_forward.1} parent=83 // pred_check
          %p3083 = pneg %p351
        $region86: #{lenet_cifar_forward.1} parent=83 // pred_check_branch
          %3085 = sbr.rel (%p3083) target = $region88
        $region87: #{lenet_cifar_forward.1} parent=83 // pred_region
          %s3086 = sand.u32 %s336, 1
          %s3087 = scalar_lea.sflag [#allocation3], %s3086
          %s3088 = sand.u32 %s336, 1
          %s3089 = scalar_lea.vmem [#allocation2], %s3088
          %3090 = dma.done %s3087, 16
        $region88: #{lenet_cifar_forward.1} parent=83 // pred_fallthru
          _
      $region84: #{lenet_cifar_forward.1} parent=5 // pred_fallthru
        _
    $region6: #{lenet_cifar_forward.1} parent=1 // loop_footer
      %s27 = sadd.s32 1, %s23
    $region7: #{lenet_cifar_forward.1} parent=1 // loop_footer_branch
      %22 = sbr.rel target = $region3
    $region8: #{lenet_cifar_forward.1} parent=1 // loop_exit
      _
    %3091 = vsyncpa [#allocation3], 1
    %s3092 = scalar_lea.sflag [#allocation3], 1
    %3093 = vsyncpa %s3092, 1

</llo_original>
